<compile_context>
chip_gen: v5e
topology: v5e:2x2
jax: 0.10.0
libtpu: 0.0.40
codegen_flags: <defaults>
</compile_context>

<pallas_src>
import numpy as np

import jax
import jax.numpy as jnp
from jax.experimental import pallas as pl
from jax.experimental.pallas import tpu as pltpu


# ----------------------------- fused Pallas kernel -----------------------------

def _mnistnet_kernel(x_ref, band1_ref, bias1_ref, band2_ref, bias2_ref,
                     w1_ref, b1_ref, w2_ref, b2_ref, w3_ref, b3_ref, out_ref):
    bt = x_ref.shape[0]
    f32 = jnp.float32
    bf16 = jnp.bfloat16

    x = x_ref[...]            # (bt, 28, 28) bf16; row 7*m + t holds original image row 4*t + m

    # ---- conv1 (5x5, 1->10): ONE MXU matmul ------------------------------------------
    # T1[(b,s), c*28 + wi] = image[b, 4*s + c, wi]   for c = 0..7, s = 0..5
    pieces = []
    for c in range(8):
        r0 = 7 * (c % 4) + c // 4
        pieces.append(x[:, r0:r0 + 6, :])
    t1 = jnp.concatenate(pieces, axis=-1).reshape(bt * 6, 224)               # (bt*6, 224) bf16
    # band1: (224, 1024) = 4 conv-row phases x [even-ow(128) | odd-ow(128)]
    c1 = jnp.dot(t1, band1_ref[...], preferred_element_type=f32)             # (bt*6, 1024) f32

    # fused 2x2 maxpool + bias + ReLU  (all slices 128/256-aligned)
    bias1 = bias1_ref[...]                                                   # (1, 128) f32
    p1 = []                     # p1[P][b, s, w2*10+co] = pooled1 at row 2*s + P (pads = 0)
    for par in range(2):
        lo = 2 * par * 256
        rmax = jnp.maximum(c1[:, lo:lo + 256], c1[:, lo + 256:lo + 512])     # pool rows
        cmax = jnp.maximum(rmax[:, :128], rmax[:, 128:])                     # pool cols
        p1.append(jnp.maximum(cmax + bias1, 0.0).astype(bf16).reshape(bt, 6, 128))

    # ---- conv2 (5x5, 10->20): ONE MXU matmul -----------------------------------------
    # T2[(b,m2), d*128 + f] = pooled1 row (2*m2 + d), feature f   for d = 0..5, m2 = 0..3
    t2 = jnp.concatenate([p1[d % 2][:, d // 2:d // 2 + 4, :] for d in range(6)],
                         axis=-1).reshape(bt * 4, 768)                       # (bt*4, 768) bf16
    # band2: (768, 512) = 2 conv-row phases x [even-ow(128) | odd-ow(128)]
    c2 = jnp.dot(t2, band2_ref[...], preferred_element_type=f32)             # (bt*4, 512) f32

    rmax = jnp.maximum(c2[:, :256], c2[:, 256:])                             # pool rows
    cmax = jnp.maximum(rmax[:, :128], rmax[:, 128:])                         # pool cols
    p2 = jnp.maximum(cmax + bias2_ref[...], 0.0).astype(bf16)                # (bt*4, 128), pads 0

    # ---- classifier: Linear(320,49)+ReLU -> fc15+BN(folded)+ReLU -> Linear(49,10) -----
    # NCHW flatten folded into w1's row permutation; hidden widths padded 49 -> 128.
    p2r = p2.reshape(bt, 4, 128)
    feat = jnp.concatenate([p2r[:, m2, :] for m2 in range(4)], axis=-1)      # (bt, 512) bf16
    h = jnp.maximum(jnp.dot(feat, w1_ref[...], preferred_element_type=f32)
                    + b1_ref[...], 0.0).astype(bf16)                         # (bt, 128)
    h = jnp.maximum(jnp.dot(h, w2_ref[...], preferred_element_type=f32)
                    + b2_ref[...], 0.0).astype(bf16)                         # (bt, 128)
    logits = jnp.dot(h, w3_ref[...], preferred_element_type=f32) + b3_ref[...]  # (bt, 128)

    # log_softmax over the 10 real classes (pad logits are biased to -1e30 -> exp == 0)
    z = logits - jnp.max(logits, axis=-1, keepdims=True)
    out_ref[...] = z - jnp.log(jnp.sum(jnp.exp(z), axis=-1, keepdims=True))


# ----------------------------- host-side weight packing -----------------------------

def _pack_band1(w_conv):
    """conv1 banded weights: (224, 1024).

    Row index = c*28 + wi (c = input-row offset 0..7 within the 8-row window, wi = input col);
    column block for conv-row phase `base` (oh = 4*s + base) is [base*256, (base+1)*256),
    split into [even-ow | odd-ow] halves of 128 ((ow//2)*10 + co, padded 120->128).
    """
    w = np.asarray(w_conv, np.float32)                 # (10, 1, 5, 5)
    cout = w.shape[0]
    band = np.zeros((8 * 28, 4 * 256), np.float32)
    for base in range(4):
        for ow in range(24):
            n0 = base * 256 + (ow % 2) * 128 + (ow // 2) * cout
            for i in range(5):
                c = base + i
                for j in range(5):
                    band[c * 28 + ow + j, n0:n0 + cout] = w[:, 0, i, j]
    return band


def _pack_band2(w_conv):
    """conv2 banded weights: (768, 512).

    Row index = d*128 + wi*10 + ci (d = pooled1-row offset 0..5, wi = pooled1 col, ci = in-ch;
    rows d*128+120..127 are the pooled1 pad features and stay zero). Column block for conv-row
    phase q (oh2 = 2*m2 + q) is [q*256, (q+1)*256), split into [even-ow | odd-ow] 128-halves
    ((ow//2)*20 + co, padded 80->128).
    """
    w = np.asarray(w_conv, np.float32)                 # (20, 10, 5, 5)
    cout, cin = w.shape[0], w.shape[1]
    band = np.zeros((6 * 128, 2 * 256), np.float32)
    for q in range(2):
        for ow in range(8):
            n0 = q * 256 + (ow % 2) * 128 + (ow // 2) * cout
            for i in range(5):
                d = q + i
                for j in range(5):
                    r0 = d * 128 + (ow + j) * cin
                    band[r0:r0 + cin, n0:n0 + cout] = w[:, :, i, j].T
    return band


def prepare_kernel_params(params, eps=1e-5):
    """Pack PyTorch-layout parameters into kernel-ready (bf16 weights / f32 biases) matrices."""
    band1 = _pack_band1(params['conv1_w'])             # (224, 1024)
    band2 = _pack_band2(params['conv2_w'])             # (768, 512)

    bias1 = np.zeros((1, 128), np.float32)
    bias1[0, :120] = np.tile(np.asarray(params['conv1_b'], np.float32), 12)
    bias2 = np.zeros((1, 128), np.float32)
    bias2[0, :80] = np.tile(np.asarray(params['conv2_b'], np.float32), 4)

    l1_w = np.asarray(params['l1_w'], np.float32)       # (49, 320)
    l1_b = np.asarray(params['l1_b'], np.float32)
    fc15_w = np.asarray(params['fc15_w'], np.float32)   # (49, 49)
    fc15_b = np.asarray(params['fc15_b'], np.float32)
    act_w = np.asarray(params['active_w'], np.float32)  # (10, 49)
    act_b = np.asarray(params['active_b'], np.float32)
    gamma = np.asarray(params['bn_gamma'], np.float32)
    beta = np.asarray(params['bn_beta'], np.float32)
    mean = np.asarray(params['bn_mean'], np.float32)
    var = np.asarray(params['bn_var'], np.float32)

    # Linear(320,49): kernel flat order fk = m2*128 + w4*20 + co ; torch NCHW ft = co*16 + m2*4 + w4
    w1p = np.zeros((512, 128), np.float32)
    b1p = np.zeros((1, 128), np.float32)
    m2, w4, co = np.meshgrid(np.arange(4), np.arange(4), np.arange(20), indexing='ij')
    fk = (m2 * 128 + w4 * 20 + co).ravel()
    ft = (co * 16 + m2 * 4 + w4).ravel()
    w1p[fk, :49] = l1_w[:, ft].T
    b1p[0, :49] = l1_b

    # fold eval-mode BatchNorm1d into fc15
    scale = gamma / np.sqrt(var + eps)
    w2p = np.zeros((128, 128), np.float32)
    w2p[:49, :49] = fc15_w.T * scale[None, :]
    b2p = np.zeros((1, 128), np.float32)
    b2p[0, :49] = (fc15_b - mean) * scale + beta

    w3p = np.zeros((128, 128), np.float32)
    w3p[:49, :10] = act_w.T
    b3p = np.full((1, 128), -1e30, np.float32)           # pad logits -> -1e30 (ignored by softmax)
    b3p[0, :10] = act_b

    bf16 = jnp.bfloat16
    return dict(
        band1=jnp.asarray(band1, bf16), bias1=jnp.asarray(bias1),
        band2=jnp.asarray(band2, bf16), bias2=jnp.asarray(bias2),
        w1p=jnp.asarray(w1p, bf16), b1p=jnp.asarray(b1p),
        w2p=jnp.asarray(w2p, bf16), b2p=jnp.asarray(b2p),
        w3p=jnp.asarray(w3p, bf16), b3p=jnp.asarray(b3p),
    )


# ----------------------------- forward wrapper -----------------------------

def _round_up(n, m):
    return ((n + m - 1) // m) * m


@jax.jit
def mnistnet_forward(x_nchw, kp):
    x = x_nchw[:, 0, :, :].astype(jnp.float32)           # (B, 28, 28), Cin = 1
    B = x.shape[0]
    # Row-mod-4 regroup (kernel row 7*m + t = image row 4*t + m) fused with the bf16 cast in
    # one XLA pass, so every pool-phase tap in the kernel is a contiguous static slice.
    xg = jnp.concatenate([x[:, m::4, :] for m in range(4)], axis=1).astype(jnp.bfloat16)

    # Batch tile: up to 256 images/step, always a multiple of 8, and >= 2 grid steps when the
    # batch allows it (so dimension_semantics=("parallel",) can feed both v7x TensorCores).
    bt = max(8, min(256, _round_up(B, 16) // 2))
    padded = _round_up(B, bt)
    if padded != B:
        xg = jnp.pad(xg, ((0, padded - B), (0, 0), (0, 0)))

    weights = (kp['band1'], kp['bias1'], kp['band2'], kp['bias2'],
               kp['w1p'], kp['b1p'], kp['w2p'], kp['b2p'], kp['w3p'], kp['b3p'])

    def _resident(a):  # full-array block, constant block index -> fetched once, stays in VMEM
        return pl.BlockSpec(a.shape, lambda i, _n=a.ndim: (0,) * _n)

    out = pl.pallas_call(
        _mnistnet_kernel,
        out_shape=jax.ShapeDtypeStruct((padded, 128), jnp.float32),   # lane-dense output block
        grid_spec=pltpu.PrefetchScalarGridSpec(
            num_scalar_prefetch=0,
            grid=(padded // bt,),
            in_specs=[pl.BlockSpec((bt, 28, 28), lambda i: (i, 0, 0))]
                     + [_resident(a) for a in weights],
            out_specs=pl.BlockSpec((bt, 128), lambda i: (i, 0)),
        ),
        compiler_params=pltpu.CompilerParams(
            dimension_semantics=("parallel",),            # batch tiles -> both TCs on v7x
            vmem_limit_bytes=48 * 1024 * 1024,
        ),
    )(xg, *weights)
    return out[:B, :10]


# ----------------------------- plain-JAX reference (for checking) -----------------------------

def mnistnet_reference(x_nchw, params):
    x = x_nchw.astype(jnp.float32)

    def conv(x, w, b):
        y = jax.lax.conv_general_dilated(x, w.astype(jnp.float32), (1, 1), 'VALID',
                                         dimension_numbers=('NCHW', 'OIHW', 'NCHW'))
        return y + b.reshape(1, -1, 1, 1)

    def pool2(x):
        B, C, H, W = x.shape
        return jnp.max(x.reshape(B, C, H // 2, 2, W // 2, 2), axis=(3, 5))

    x = jnp.maximum(pool2(conv(x, params['conv1_w'], params['conv1_b'])), 0.0)
    x = jnp.maximum(pool2(conv(x, params['conv2_w'], params['conv2_b'])), 0.0)
    x = x.reshape(x.shape[0], 320)
    h = jnp.maximum(x @ params['l1_w'].T + params['l1_b'], 0.0)
    f = h @ params['fc15_w'].T + params['fc15_b']
    scale = params['bn_gamma'] / jnp.sqrt(params['bn_var'] + 1e-5)
    f = jnp.maximum((f - params['bn_mean']) * scale + params['bn_beta'], 0.0)
    logits = f @ params['active_w'].T + params['active_b']
    return jax.nn.log_softmax(logits, axis=-1)


# ----------------------------- parameter init -----------------------------

def init_params(key):
    def uniform(k, shape, fan_in):
        bound = 1.0 / (fan_in ** 0.5)
        return jax.random.uniform(k, shape, jnp.float32, -bound, bound)

    ks = jax.random.split(key, 10)
    return {
        'conv1_w': uniform(ks[0], (10, 1, 5, 5), 1 * 5 * 5),
        'conv1_b': uniform(ks[1], (10,), 1 * 5 * 5),
        'conv2_w': uniform(ks[2], (20, 10, 5, 5), 10 * 5 * 5),
        'conv2_b': uniform(ks[3], (20,), 10 * 5 * 5),
        'l1_w': uniform(ks[4], (49, 320), 320),
        'l1_b': uniform(ks[5], (49,), 320),
        'fc15_w': uniform(ks[6], (49, 49), 49),
        'fc15_b': uniform(ks[7], (49,), 49),
        'active_w': uniform(ks[8], (10, 49), 49),
        'active_b': uniform(ks[9], (10,), 49),
        # BatchNorm1d(49) defaults (eval running stats)
        'bn_gamma': jnp.ones((49,), jnp.float32),
        'bn_beta': jnp.zeros((49,), jnp.float32),
        'bn_mean': jnp.zeros((49,), jnp.float32),
        'bn_var': jnp.ones((49,), jnp.float32),
    }


if __name__ == "__main__":
    key = jax.random.PRNGKey(0)
    k_params, k_x = jax.random.split(key)
    params = init_params(k_params)
    kparams = prepare_kernel_params(params)

    # MNIST-shaped input forced by view(-1, 320): (B, 1, 28, 28); small batch.
    x = jax.random.normal(k_x, (2, 1, 28, 28), dtype=jnp.float32)

    out = jax.block_until_ready(mnistnet_forward(x, kparams))
    assert out.shape == (2, 10)

    # sanity: valid log-probabilities
    row_sums = jnp.exp(out).sum(axis=-1)
    assert bool(jnp.all(jnp.isfinite(out)))
    assert bool(jnp.all(jnp.abs(row_sums - 1.0) < 1e-3))

    # numerical check against a plain-JAX f32 reference of the PyTorch module (eval mode);
    # kernel uses bf16 operands with f32 accumulation -> expect ~1e-2 max error.
    ref = mnistnet_reference(x, params)
    max_err = float(jnp.max(jnp.abs(out - ref)))
    assert max_err < 5e-2, f"kernel/reference mismatch: max abs err = {max_err}"

    print("KERNEL_OK")
</pallas_src>

<mosaic_0001>
module attributes {stable_mosaic.version = 11 : i64} {
  func.func @_mnistnet_kernel(%arg0: i32, %arg1: memref<8x28x28xbf16, #tpu.memory_space<vmem>>, %arg2: memref<224x1024xbf16, #tpu.memory_space<vmem>>, %arg3: memref<1x128xf32, #tpu.memory_space<vmem>>, %arg4: memref<768x512xbf16, #tpu.memory_space<vmem>>, %arg5: memref<1x128xf32, #tpu.memory_space<vmem>>, %arg6: memref<512x128xbf16, #tpu.memory_space<vmem>>, %arg7: memref<1x128xf32, #tpu.memory_space<vmem>>, %arg8: memref<128x128xbf16, #tpu.memory_space<vmem>>, %arg9: memref<1x128xf32, #tpu.memory_space<vmem>>, %arg10: memref<128x128xbf16, #tpu.memory_space<vmem>>, %arg11: memref<1x128xf32, #tpu.memory_space<vmem>>, %arg12: memref<8x128xf32, #tpu.memory_space<vmem>>) attributes {dimension_semantics = [#tpu.dimension_semantics<parallel>], iteration_bounds = array<i64: 1>, scalar_prefetch = 0 : i64, scratch_operands = 0 : i64, tpu.core_type = #tpu.core_type<tc>, window_params = [{transform_indices = @transform_0, window_bounds = array<i64: 8, 28, 28>}, {pipeline_mode = #tpu.pipeline_mode<synchronous>, transform_indices = @transform_1, window_bounds = array<i64: 224, 1024>}, {pipeline_mode = #tpu.pipeline_mode<synchronous>, transform_indices = @transform_2, window_bounds = array<i64: 1, 128>}, {pipeline_mode = #tpu.pipeline_mode<synchronous>, transform_indices = @transform_3, window_bounds = array<i64: 768, 512>}, {pipeline_mode = #tpu.pipeline_mode<synchronous>, transform_indices = @transform_4, window_bounds = array<i64: 1, 128>}, {pipeline_mode = #tpu.pipeline_mode<synchronous>, transform_indices = @transform_5, window_bounds = array<i64: 512, 128>}, {pipeline_mode = #tpu.pipeline_mode<synchronous>, transform_indices = @transform_6, window_bounds = array<i64: 1, 128>}, {pipeline_mode = #tpu.pipeline_mode<synchronous>, transform_indices = @transform_7, window_bounds = array<i64: 128, 128>}, {pipeline_mode = #tpu.pipeline_mode<synchronous>, transform_indices = @transform_8, window_bounds = array<i64: 1, 128>}, {pipeline_mode = #tpu.pipeline_mode<synchronous>, transform_indices = @transform_9, window_bounds = array<i64: 128, 128>}, {pipeline_mode = #tpu.pipeline_mode<synchronous>, transform_indices = @transform_10, window_bounds = array<i64: 1, 128>}, {transform_indices = @transform_11, window_bounds = array<i64: 8, 128>}]} {
    %c0 = arith.constant 0 : index
    %c0_0 = arith.constant 0 : index
    %c0_1 = arith.constant 0 : index
    %0 = vector.load %arg1[%c0, %c0_0, %c0_1] : memref<8x28x28xbf16, #tpu.memory_space<vmem>>, vector<8x28x28xbf16>
    %1 = vector.extract_strided_slice %0 {offsets = [0, 0, 0], sizes = [8, 6, 28], strides = [1, 1, 1]} : vector<8x28x28xbf16> to vector<8x6x28xbf16>
    %2 = vector.extract_strided_slice %0 {offsets = [0, 7, 0], sizes = [8, 6, 28], strides = [1, 1, 1]} : vector<8x28x28xbf16> to vector<8x6x28xbf16>
    %3 = vector.extract_strided_slice %0 {offsets = [0, 14, 0], sizes = [8, 6, 28], strides = [1, 1, 1]} : vector<8x28x28xbf16> to vector<8x6x28xbf16>
    %4 = vector.extract_strided_slice %0 {offsets = [0, 21, 0], sizes = [8, 6, 28], strides = [1, 1, 1]} : vector<8x28x28xbf16> to vector<8x6x28xbf16>
    %5 = vector.extract_strided_slice %0 {offsets = [0, 1, 0], sizes = [8, 6, 28], strides = [1, 1, 1]} : vector<8x28x28xbf16> to vector<8x6x28xbf16>
    %6 = vector.extract_strided_slice %0 {offsets = [0, 8, 0], sizes = [8, 6, 28], strides = [1, 1, 1]} : vector<8x28x28xbf16> to vector<8x6x28xbf16>
    %7 = vector.extract_strided_slice %0 {offsets = [0, 15, 0], sizes = [8, 6, 28], strides = [1, 1, 1]} : vector<8x28x28xbf16> to vector<8x6x28xbf16>
    %8 = vector.extract_strided_slice %0 {offsets = [0, 22, 0], sizes = [8, 6, 28], strides = [1, 1, 1]} : vector<8x28x28xbf16> to vector<8x6x28xbf16>
    %9 = tpu.concatenate %1, %2, %3, %4, %5, %6, %7, %8 in 2 : vector<8x6x28xbf16>, vector<8x6x28xbf16>, vector<8x6x28xbf16>, vector<8x6x28xbf16>, vector<8x6x28xbf16>, vector<8x6x28xbf16>, vector<8x6x28xbf16>, vector<8x6x28xbf16> -> vector<8x6x224xbf16>
    %10 = vector.shape_cast %9 : vector<8x6x224xbf16> to vector<48x224xbf16>
    %c0_2 = arith.constant 0 : index
    %c0_3 = arith.constant 0 : index
    %11 = vector.load %arg2[%c0_2, %c0_3] : memref<224x1024xbf16, #tpu.memory_space<vmem>>, vector<224x1024xbf16>
    %cst = arith.constant dense<0.000000e+00> : vector<48x1024xf32>
    %12 = tpu.matmul %10, %11, %cst {dimension_numbers = #tpu.dot_dimension_numbers<[1], [0], [0], [1], [0, 0, 1, 1], [], []>} : vector<48x224xbf16>, vector<224x1024xbf16>, vector<48x1024xf32> -> vector<48x1024xf32>
    %c0_4 = arith.constant 0 : index
    %c0_5 = arith.constant 0 : index
    %13 = vector.load %arg3[%c0_4, %c0_5] : memref<1x128xf32, #tpu.memory_space<vmem>>, vector<1x128xf32>
    %14 = vector.extract_strided_slice %12 {offsets = [0, 0], sizes = [48, 256], strides = [1, 1]} : vector<48x1024xf32> to vector<48x256xf32>
    %15 = vector.extract_strided_slice %12 {offsets = [0, 256], sizes = [48, 256], strides = [1, 1]} : vector<48x1024xf32> to vector<48x256xf32>
    %16 = arith.maximumf %14, %15 : vector<48x256xf32>
    %17 = vector.extract_strided_slice %16 {offsets = [0, 0], sizes = [48, 128], strides = [1, 1]} : vector<48x256xf32> to vector<48x128xf32>
    %18 = vector.extract_strided_slice %16 {offsets = [0, 128], sizes = [48, 128], strides = [1, 1]} : vector<48x256xf32> to vector<48x128xf32>
    %19 = arith.maximumf %17, %18 : vector<48x128xf32>
    %20 = vector.broadcast %13 : vector<1x128xf32> to vector<48x128xf32>
    %21 = arith.addf %19, %20 : vector<48x128xf32>
    %cst_6 = arith.constant 0.000000e+00 : f32
    %22 = vector.broadcast %cst_6 : f32 to vector<48x128xf32>
    %23 = arith.maximumf %21, %22 : vector<48x128xf32>
    %24 = arith.truncf %23 : vector<48x128xf32> to vector<48x128xbf16>
    %25 = vector.shape_cast %24 : vector<48x128xbf16> to vector<8x6x128xbf16>
    %26 = vector.extract_strided_slice %12 {offsets = [0, 512], sizes = [48, 256], strides = [1, 1]} : vector<48x1024xf32> to vector<48x256xf32>
    %27 = vector.extract_strided_slice %12 {offsets = [0, 768], sizes = [48, 256], strides = [1, 1]} : vector<48x1024xf32> to vector<48x256xf32>
    %28 = arith.maximumf %26, %27 : vector<48x256xf32>
    %29 = vector.extract_strided_slice %28 {offsets = [0, 0], sizes = [48, 128], strides = [1, 1]} : vector<48x256xf32> to vector<48x128xf32>
    %30 = vector.extract_strided_slice %28 {offsets = [0, 128], sizes = [48, 128], strides = [1, 1]} : vector<48x256xf32> to vector<48x128xf32>
    %31 = arith.maximumf %29, %30 : vector<48x128xf32>
    %32 = vector.broadcast %13 : vector<1x128xf32> to vector<48x128xf32>
    %33 = arith.addf %31, %32 : vector<48x128xf32>
    %cst_7 = arith.constant 0.000000e+00 : f32
    %34 = vector.broadcast %cst_7 : f32 to vector<48x128xf32>
    %35 = arith.maximumf %33, %34 : vector<48x128xf32>
    %36 = arith.truncf %35 : vector<48x128xf32> to vector<48x128xbf16>
    %37 = vector.shape_cast %36 : vector<48x128xbf16> to vector<8x6x128xbf16>
    %38 = vector.extract_strided_slice %25 {offsets = [0, 0, 0], sizes = [8, 4, 128], strides = [1, 1, 1]} : vector<8x6x128xbf16> to vector<8x4x128xbf16>
    %39 = vector.extract_strided_slice %37 {offsets = [0, 0, 0], sizes = [8, 4, 128], strides = [1, 1, 1]} : vector<8x6x128xbf16> to vector<8x4x128xbf16>
    %40 = vector.extract_strided_slice %25 {offsets = [0, 1, 0], sizes = [8, 4, 128], strides = [1, 1, 1]} : vector<8x6x128xbf16> to vector<8x4x128xbf16>
    %41 = vector.extract_strided_slice %37 {offsets = [0, 1, 0], sizes = [8, 4, 128], strides = [1, 1, 1]} : vector<8x6x128xbf16> to vector<8x4x128xbf16>
    %42 = vector.extract_strided_slice %25 {offsets = [0, 2, 0], sizes = [8, 4, 128], strides = [1, 1, 1]} : vector<8x6x128xbf16> to vector<8x4x128xbf16>
    %43 = vector.extract_strided_slice %37 {offsets = [0, 2, 0], sizes = [8, 4, 128], strides = [1, 1, 1]} : vector<8x6x128xbf16> to vector<8x4x128xbf16>
    %44 = tpu.concatenate %38, %39, %40, %41, %42, %43 in 2 : vector<8x4x128xbf16>, vector<8x4x128xbf16>, vector<8x4x128xbf16>, vector<8x4x128xbf16>, vector<8x4x128xbf16>, vector<8x4x128xbf16> -> vector<8x4x768xbf16>
    %45 = vector.shape_cast %44 : vector<8x4x768xbf16> to vector<32x768xbf16>
    %c0_8 = arith.constant 0 : index
    %c0_9 = arith.constant 0 : index
    %46 = vector.load %arg4[%c0_8, %c0_9] : memref<768x512xbf16, #tpu.memory_space<vmem>>, vector<768x512xbf16>
    %cst_10 = arith.constant dense<0.000000e+00> : vector<32x512xf32>
    %47 = tpu.matmul %45, %46, %cst_10 {dimension_numbers = #tpu.dot_dimension_numbers<[1], [0], [0], [1], [0, 0, 1, 1], [], []>} : vector<32x768xbf16>, vector<768x512xbf16>, vector<32x512xf32> -> vector<32x512xf32>
    %48 = vector.extract_strided_slice %47 {offsets = [0, 0], sizes = [32, 256], strides = [1, 1]} : vector<32x512xf32> to vector<32x256xf32>
    %49 = vector.extract_strided_slice %47 {offsets = [0, 256], sizes = [32, 256], strides = [1, 1]} : vector<32x512xf32> to vector<32x256xf32>
    %50 = arith.maximumf %48, %49 : vector<32x256xf32>
    %51 = vector.extract_strided_slice %50 {offsets = [0, 0], sizes = [32, 128], strides = [1, 1]} : vector<32x256xf32> to vector<32x128xf32>
    %52 = vector.extract_strided_slice %50 {offsets = [0, 128], sizes = [32, 128], strides = [1, 1]} : vector<32x256xf32> to vector<32x128xf32>
    %53 = arith.maximumf %51, %52 : vector<32x128xf32>
    %c0_11 = arith.constant 0 : index
    %c0_12 = arith.constant 0 : index
    %54 = vector.load %arg5[%c0_11, %c0_12] : memref<1x128xf32, #tpu.memory_space<vmem>>, vector<1x128xf32>
    %55 = vector.broadcast %54 : vector<1x128xf32> to vector<32x128xf32>
    %56 = arith.addf %53, %55 : vector<32x128xf32>
    %cst_13 = arith.constant 0.000000e+00 : f32
    %57 = vector.broadcast %cst_13 : f32 to vector<32x128xf32>
    %58 = arith.maximumf %56, %57 : vector<32x128xf32>
    %59 = arith.truncf %58 : vector<32x128xf32> to vector<32x128xbf16>
    %60 = vector.shape_cast %59 : vector<32x128xbf16> to vector<8x4x128xbf16>
    %61 = vector.extract_strided_slice %60 {offsets = [0, 0, 0], sizes = [8, 1, 128], strides = [1, 1, 1]} : vector<8x4x128xbf16> to vector<8x1x128xbf16>
    %62 = vector.shape_cast %61 : vector<8x1x128xbf16> to vector<8x128xbf16>
    %63 = vector.extract_strided_slice %60 {offsets = [0, 1, 0], sizes = [8, 1, 128], strides = [1, 1, 1]} : vector<8x4x128xbf16> to vector<8x1x128xbf16>
    %64 = vector.shape_cast %63 : vector<8x1x128xbf16> to vector<8x128xbf16>
    %65 = vector.extract_strided_slice %60 {offsets = [0, 2, 0], sizes = [8, 1, 128], strides = [1, 1, 1]} : vector<8x4x128xbf16> to vector<8x1x128xbf16>
    %66 = vector.shape_cast %65 : vector<8x1x128xbf16> to vector<8x128xbf16>
    %67 = vector.extract_strided_slice %60 {offsets = [0, 3, 0], sizes = [8, 1, 128], strides = [1, 1, 1]} : vector<8x4x128xbf16> to vector<8x1x128xbf16>
    %68 = vector.shape_cast %67 : vector<8x1x128xbf16> to vector<8x128xbf16>
    %69 = tpu.concatenate %62, %64, %66, %68 in 1 : vector<8x128xbf16>, vector<8x128xbf16>, vector<8x128xbf16>, vector<8x128xbf16> -> vector<8x512xbf16>
    %c0_14 = arith.constant 0 : index
    %c0_15 = arith.constant 0 : index
    %70 = vector.load %arg6[%c0_14, %c0_15] : memref<512x128xbf16, #tpu.memory_space<vmem>>, vector<512x128xbf16>
    %cst_16 = arith.constant dense<0.000000e+00> : vector<8x128xf32>
    %71 = tpu.matmul %69, %70, %cst_16 {dimension_numbers = #tpu.dot_dimension_numbers<[1], [0], [0], [1], [0, 0, 1, 1], [], []>} : vector<8x512xbf16>, vector<512x128xbf16>, vector<8x128xf32> -> vector<8x128xf32>
    %c0_17 = arith.constant 0 : index
    %c0_18 = arith.constant 0 : index
    %72 = vector.load %arg7[%c0_17, %c0_18] : memref<1x128xf32, #tpu.memory_space<vmem>>, vector<1x128xf32>
    %73 = vector.broadcast %72 : vector<1x128xf32> to vector<8x128xf32>
    %74 = arith.addf %71, %73 : vector<8x128xf32>
    %cst_19 = arith.constant 0.000000e+00 : f32
    %75 = vector.broadcast %cst_19 : f32 to vector<8x128xf32>
    %76 = arith.maximumf %74, %75 : vector<8x128xf32>
    %77 = arith.truncf %76 : vector<8x128xf32> to vector<8x128xbf16>
    %c0_20 = arith.constant 0 : index
    %c0_21 = arith.constant 0 : index
    %78 = vector.load %arg8[%c0_20, %c0_21] : memref<128x128xbf16, #tpu.memory_space<vmem>>, vector<128x128xbf16>
    %cst_22 = arith.constant dense<0.000000e+00> : vector<8x128xf32>
    %79 = tpu.matmul %77, %78, %cst_22 {dimension_numbers = #tpu.dot_dimension_numbers<[1], [0], [0], [1], [0, 0, 1, 1], [], []>} : vector<8x128xbf16>, vector<128x128xbf16>, vector<8x128xf32> -> vector<8x128xf32>
    %c0_23 = arith.constant 0 : index
    %c0_24 = arith.constant 0 : index
    %80 = vector.load %arg9[%c0_23, %c0_24] : memref<1x128xf32, #tpu.memory_space<vmem>>, vector<1x128xf32>
    %81 = vector.broadcast %80 : vector<1x128xf32> to vector<8x128xf32>
    %82 = arith.addf %79, %81 : vector<8x128xf32>
    %cst_25 = arith.constant 0.000000e+00 : f32
    %83 = vector.broadcast %cst_25 : f32 to vector<8x128xf32>
    %84 = arith.maximumf %82, %83 : vector<8x128xf32>
    %85 = arith.truncf %84 : vector<8x128xf32> to vector<8x128xbf16>
    %c0_26 = arith.constant 0 : index
    %c0_27 = arith.constant 0 : index
    %86 = vector.load %arg10[%c0_26, %c0_27] : memref<128x128xbf16, #tpu.memory_space<vmem>>, vector<128x128xbf16>
    %cst_28 = arith.constant dense<0.000000e+00> : vector<8x128xf32>
    %87 = tpu.matmul %85, %86, %cst_28 {dimension_numbers = #tpu.dot_dimension_numbers<[1], [0], [0], [1], [0, 0, 1, 1], [], []>} : vector<8x128xbf16>, vector<128x128xbf16>, vector<8x128xf32> -> vector<8x128xf32>
    %c0_29 = arith.constant 0 : index
    %c0_30 = arith.constant 0 : index
    %88 = vector.load %arg11[%c0_29, %c0_30] : memref<1x128xf32, #tpu.memory_space<vmem>>, vector<1x128xf32>
    %89 = vector.broadcast %88 : vector<1x128xf32> to vector<8x128xf32>
    %90 = arith.addf %87, %89 : vector<8x128xf32>
    %cst_31 = arith.constant dense<0xFF800000> : vector<8xf32>
    %91 = vector.multi_reduction <maximumf>, %90, %cst_31 [1] : vector<8x128xf32> to vector<8xf32>
    %92 = vector.shape_cast %91 : vector<8xf32> to vector<8x1xf32>
    %93 = vector.broadcast %92 : vector<8x1xf32> to vector<8x128xf32>
    %94 = arith.subf %90, %93 : vector<8x128xf32>
    %95 = math.exp %94 : vector<8x128xf32>
    %cst_32 = arith.constant dense<0.000000e+00> : vector<8xf32>
    %96 = vector.multi_reduction <add>, %95, %cst_32 [1] : vector<8x128xf32> to vector<8xf32>
    %97 = vector.shape_cast %96 : vector<8xf32> to vector<8x1xf32>
    %98 = math.log %97 : vector<8x1xf32>
    %99 = vector.broadcast %98 : vector<8x1xf32> to vector<8x128xf32>
    %100 = arith.subf %94, %99 : vector<8x128xf32>
    %c0_33 = arith.constant 0 : index
    %c0_34 = arith.constant 0 : index
    %101 = vector.load %arg12[%c0_33, %c0_34] : memref<8x128xf32, #tpu.memory_space<vmem>>, vector<8x128xf32>
    tpu.vector_store %arg12[%c0_33, %c0_34], %100 {strides = array<i32>} : memref<8x128xf32, #tpu.memory_space<vmem>>, vector<8x128xf32>,
    return
  }
  func.func @transform_0(%arg0: i32) -> (i32, i32, i32) {
    %c0_i32 = arith.constant 0 : i32
    %c0_i32_0 = arith.constant 0 : i32
    %c0_i32_1 = arith.constant 0 : i32
    return %arg0, %c0_i32, %c0_i32_0 : i32, i32, i32
  }
  func.func @transform_1(%arg0: i32) -> (i32, i32) {
    %c0_i32 = arith.constant 0 : i32
    %c0_i32_0 = arith.constant 0 : i32
    %c0_i32_1 = arith.constant 0 : i32
    return %c0_i32, %c0_i32_0 : i32, i32
  }
  func.func @transform_2(%arg0: i32) -> (i32, i32) {
    %c0_i32 = arith.constant 0 : i32
    %c0_i32_0 = arith.constant 0 : i32
    %c0_i32_1 = arith.constant 0 : i32
    return %c0_i32, %c0_i32_0 : i32, i32
  }
  func.func @transform_3(%arg0: i32) -> (i32, i32) {
    %c0_i32 = arith.constant 0 : i32
    %c0_i32_0 = arith.constant 0 : i32
    %c0_i32_1 = arith.constant 0 : i32
    return %c0_i32, %c0_i32_0 : i32, i32
  }
  func.func @transform_4(%arg0: i32) -> (i32, i32) {
    %c0_i32 = arith.constant 0 : i32
    %c0_i32_0 = arith.constant 0 : i32
    %c0_i32_1 = arith.constant 0 : i32
    return %c0_i32, %c0_i32_0 : i32, i32
  }
  func.func @transform_5(%arg0: i32) -> (i32, i32) {
    %c0_i32 = arith.constant 0 : i32
    %c0_i32_0 = arith.constant 0 : i32
    %c0_i32_1 = arith.constant 0 : i32
    return %c0_i32, %c0_i32_0 : i32, i32
  }
  func.func @transform_6(%arg0: i32) -> (i32, i32) {
    %c0_i32 = arith.constant 0 : i32
    %c0_i32_0 = arith.constant 0 : i32
    %c0_i32_1 = arith.constant 0 : i32
    return %c0_i32, %c0_i32_0 : i32, i32
  }
  func.func @transform_7(%arg0: i32) -> (i32, i32) {
    %c0_i32 = arith.constant 0 : i32
    %c0_i32_0 = arith.constant 0 : i32
    %c0_i32_1 = arith.constant 0 : i32
    return %c0_i32, %c0_i32_0 : i32, i32
  }
  func.func @transform_8(%arg0: i32) -> (i32, i32) {
    %c0_i32 = arith.constant 0 : i32
    %c0_i32_0 = arith.constant 0 : i32
    %c0_i32_1 = arith.constant 0 : i32
    return %c0_i32, %c0_i32_0 : i32, i32
  }
  func.func @transform_9(%arg0: i32) -> (i32, i32) {
    %c0_i32 = arith.constant 0 : i32
    %c0_i32_0 = arith.constant 0 : i32
    %c0_i32_1 = arith.constant 0 : i32
    return %c0_i32, %c0_i32_0 : i32, i32
  }
  func.func @transform_10(%arg0: i32) -> (i32, i32) {
    %c0_i32 = arith.constant 0 : i32
    %c0_i32_0 = arith.constant 0 : i32
    %c0_i32_1 = arith.constant 0 : i32
    return %c0_i32, %c0_i32_0 : i32, i32
  }
  func.func @transform_11(%arg0: i32) -> (i32, i32) {
    %c0_i32 = arith.constant 0 : i32
    %c0_i32_0 = arith.constant 0 : i32
    return %arg0, %c0_i32 : i32, i32
  }
}

</mosaic_0001>

<llo_original>
// kernel: mnistnet_forward.1
$region0: #{mnistnet_forward.1}
  #allocation0 [shape = 'u32[]', space=smem, size = 0x4, offset = 0x4, fixed_abs, tag = 'smem constant byte address 0x4 - core index']
  #allocation1 [shape = 'u32[72,128]{1,0:T(1,128)}', space=vmem, size = 0x9000, scoped, tag = 'internal scratch']
  %s0 = inlined_call_operand.vmem [shape: bf16[8,28,28], index: 0, kind: input, shape index: {}]
  %s1 = inlined_call_operand.hbm [shape: bf16[224,1024], index: 1, kind: input, shape index: {}]
  %s2 = inlined_call_operand.vmem [shape: f32[1,128], index: 2, kind: input, shape index: {}]
  %s3 = inlined_call_operand.hbm [shape: bf16[768,512], index: 3, kind: input, shape index: {}]
  %s4 = inlined_call_operand.vmem [shape: f32[1,128], index: 4, kind: input, shape index: {}]
  %s5 = inlined_call_operand.vmem [shape: bf16[512,128], index: 5, kind: input, shape index: {}]
  %s6 = inlined_call_operand.vmem [shape: f32[1,128], index: 6, kind: input, shape index: {}]
  %s7 = inlined_call_operand.hbm [shape: bf16[128,128], index: 7, kind: input, shape index: {}]
  %s8 = inlined_call_operand.vmem [shape: f32[1,128], index: 8, kind: input, shape index: {}]
  %s9 = inlined_call_operand.hbm [shape: bf16[128,128], index: 9, kind: input, shape index: {}]
  %s10 = inlined_call_operand.vmem [shape: f32[1,128], index: 10, kind: input, shape index: {}]
  %s11 = inlined_call_operand.vmem [shape: f32[8,128], index: 11, kind: output, shape index: {}]
  %s12 = sld [smem:[#allocation0]]
  $region70: #{mnistnet_forward.1} parent=0
    _
  %s14 = ssub.s32 1, %s12
  %s15 = scalar_select 0, %s14, %s12
  $region1: #{mnistnet_forward.1} parent=0
    #allocation2 [shape = 'u8[458752]{0}', space=vmem, size = 0x70000, scoped, tag = 'input window, operand 1, single buffered']
    #allocation3 [shape = 's32[1]{0}', space=sflag, size = 0x4, scoped, tag = 'scoped memory for mnistnet_forward.1']
    #allocation4 [shape = 'u8[786432]{0}', space=vmem, size = 0xc0000, scoped, tag = 'input window, operand 3, single buffered']
    #allocation5 [shape = 's32[1]{0}', space=sflag, size = 0x4, scoped, tag = 'scoped memory for mnistnet_forward.1']
    #allocation6 [shape = 'u8[32768]{0}', space=vmem, size = 0x8000, scoped, tag = 'input window, operand 7, single buffered']
    #allocation7 [shape = 'u8[32768]{0}', space=vmem, size = 0x8000, scoped, tag = 'input window, operand 9, single buffered']
    #allocation8 [shape = 's32[1]{0}', space=sflag, size = 0x4, scoped, tag = 'scoped memory for mnistnet_forward.1']
    %16 = vsyncpa [#allocation3], 0
    %17 = vsyncpa [#allocation5], 0
    %18 = vsyncpa [#allocation8], 0
    // Predicated region
    $region2: #{mnistnet_forward.1} parent=1 // pred_check
      _
    $region3: #{mnistnet_forward.1} parent=1 // pred_check_branch
      %20 = sbr.rel (0) target = $region5
    $region4: #{mnistnet_forward.1} parent=1 // pred_region
      _
    $region5: #{mnistnet_forward.1} parent=1 // pred_fallthru
      _
    // Predicated region
    $region6: #{mnistnet_forward.1} parent=1 // pred_check
      _
    $region7: #{mnistnet_forward.1} parent=1 // pred_check_branch
      %22 = sbr.rel (0) target = $region9
    $region8: #{mnistnet_forward.1} parent=1 // pred_region
      %24 = vsyncadd [#allocation3], 0
      %s25 = sshll.u32 %s1, 4
      %s26 = int_to_ptr.hbm [resolvable:$true] %s25
      %s27 = sshll.u32 [#allocation2], 4
      %s28 = int_to_ptr.vmem [resolvable:$true] %s27
      %33 = dma.hbm_to_vmem [thread:$0]  %s26, 14336, %s28, [#allocation3], 512, 512, 32
    $region9: #{mnistnet_forward.1} parent=1 // pred_fallthru
      _
    // Predicated region
    $region10: #{mnistnet_forward.1} parent=1 // pred_check
      _
    $region11: #{mnistnet_forward.1} parent=1 // pred_check_branch
      %35 = sbr.rel (0) target = $region13
    $region12: #{mnistnet_forward.1} parent=1 // pred_region
      _
    $region13: #{mnistnet_forward.1} parent=1 // pred_fallthru
      _
    // Predicated region
    $region14: #{mnistnet_forward.1} parent=1 // pred_check
      _
    $region15: #{mnistnet_forward.1} parent=1 // pred_check_branch
      %37 = sbr.rel (0) target = $region17
    $region16: #{mnistnet_forward.1} parent=1 // pred_region
      %39 = vsyncadd [#allocation5], 0
      %s40 = sshll.u32 %s3, 4
      %s41 = int_to_ptr.hbm [resolvable:$true] %s40
      %s42 = sshll.u32 [#allocation4], 4
      %s43 = int_to_ptr.vmem [resolvable:$true] %s42
      %48 = dma.hbm_to_vmem [thread:$0]  %s41, 24576, %s43, [#allocation5], 256, 256, 16
    $region17: #{mnistnet_forward.1} parent=1 // pred_fallthru
      _
    // Predicated region
    $region18: #{mnistnet_forward.1} parent=1 // pred_check
      _
    $region19: #{mnistnet_forward.1} parent=1 // pred_check_branch
      %50 = sbr.rel (0) target = $region21
    $region20: #{mnistnet_forward.1} parent=1 // pred_region
      _
    $region21: #{mnistnet_forward.1} parent=1 // pred_fallthru
      _
    // Predicated region
    $region22: #{mnistnet_forward.1} parent=1 // pred_check
      _
    $region23: #{mnistnet_forward.1} parent=1 // pred_check_branch
      %52 = sbr.rel (0) target = $region25
    $region24: #{mnistnet_forward.1} parent=1 // pred_region
      _
    $region25: #{mnistnet_forward.1} parent=1 // pred_fallthru
      _
    // Predicated region
    $region26: #{mnistnet_forward.1} parent=1 // pred_check
      _
    $region27: #{mnistnet_forward.1} parent=1 // pred_check_branch
      %54 = sbr.rel (0) target = $region29
    $region28: #{mnistnet_forward.1} parent=1 // pred_region
      _
    $region29: #{mnistnet_forward.1} parent=1 // pred_fallthru
      _
    // Predicated region
    $region30: #{mnistnet_forward.1} parent=1 // pred_check
      _
    $region31: #{mnistnet_forward.1} parent=1 // pred_check_branch
      %56 = sbr.rel (0) target = $region33
    $region32: #{mnistnet_forward.1} parent=1 // pred_region
      %58 = vsyncadd [#allocation5], 0
      %s59 = sshll.u32 %s7, 4
      %s60 = int_to_ptr.hbm [resolvable:$true] %s59
      %s61 = sshll.u32 [#allocation6], 4
      %s62 = int_to_ptr.vmem [resolvable:$true] %s61
      %67 = dma.hbm_to_vmem [thread:$0]  %s60, 1024, %s62, [#allocation5], 64, 64, 4
    $region33: #{mnistnet_forward.1} parent=1 // pred_fallthru
      _
    // Predicated region
    $region34: #{mnistnet_forward.1} parent=1 // pred_check
      _
    $region35: #{mnistnet_forward.1} parent=1 // pred_check_branch
      %69 = sbr.rel (0) target = $region37
    $region36: #{mnistnet_forward.1} parent=1 // pred_region
      _
    $region37: #{mnistnet_forward.1} parent=1 // pred_fallthru
      _
    // Predicated region
    $region38: #{mnistnet_forward.1} parent=1 // pred_check
      _
    $region39: #{mnistnet_forward.1} parent=1 // pred_check_branch
      %71 = sbr.rel (0) target = $region41
    $region40: #{mnistnet_forward.1} parent=1 // pred_region
      %73 = vsyncadd [#allocation8], 0
      %s74 = sshll.u32 %s9, 4
      %s75 = int_to_ptr.hbm [resolvable:$true] %s74
      %s76 = sshll.u32 [#allocation7], 4
      %s77 = int_to_ptr.vmem [resolvable:$true] %s76
      %82 = dma.hbm_to_vmem [thread:$0]  %s75, 1024, %s77, [#allocation8], 64, 64, 4
    $region41: #{mnistnet_forward.1} parent=1 // pred_fallthru
      _
    // Predicated region
    $region42: #{mnistnet_forward.1} parent=1 // pred_check
      _
    $region43: #{mnistnet_forward.1} parent=1 // pred_check_branch
      %84 = sbr.rel (0) target = $region45
    $region44: #{mnistnet_forward.1} parent=1 // pred_region
      _
    $region45: #{mnistnet_forward.1} parent=1 // pred_fallthru
      _
    // Predicated region
    $region46: #{mnistnet_forward.1} parent=1 // pred_check
      _
    $region47: #{mnistnet_forward.1} parent=1 // pred_check_branch
      %86 = sbr.rel (0) target = $region49
    $region48: #{mnistnet_forward.1} parent=1 // pred_region
      %88 = dma.done [#allocation3], 14336
    $region49: #{mnistnet_forward.1} parent=1 // pred_fallthru
      _
    // Predicated region
    $region50: #{mnistnet_forward.1} parent=1 // pred_check
      _
    $region51: #{mnistnet_forward.1} parent=1 // pred_check_branch
      %90 = sbr.rel (0) target = $region53
    $region52: #{mnistnet_forward.1} parent=1 // pred_region
      %92 = dma.done [#allocation5], 24576
    $region53: #{mnistnet_forward.1} parent=1 // pred_fallthru
      _
    // Predicated region
    $region54: #{mnistnet_forward.1} parent=1 // pred_check
      _
    $region55: #{mnistnet_forward.1} parent=1 // pred_check_branch
      %94 = sbr.rel (0) target = $region57
    $region56: #{mnistnet_forward.1} parent=1 // pred_region
      %96 = dma.done [#allocation5], 1024
    $region57: #{mnistnet_forward.1} parent=1 // pred_fallthru
      _
    // Predicated region
    $region58: #{mnistnet_forward.1} parent=1 // pred_check
      _
    $region59: #{mnistnet_forward.1} parent=1 // pred_check_branch
      %98 = sbr.rel (0) target = $region61
    $region60: #{mnistnet_forward.1} parent=1 // pred_region
      %100 = dma.done [#allocation8], 1024
    $region61: #{mnistnet_forward.1} parent=1 // pred_fallthru
      _
    %v102 = vld [vmem:[%s0] sm:$0xf]
    %v103 = vld [vmem:[%s0 + $0x4] sm:$0xf]
    %v104 = vld [vmem:[%s0 + $0x8] sm:$0xf]
    %v105 = vld [vmem:[%s0 + $0xc] sm:$0x3]
    %v106 = vld [vmem:[%s0 + $0x10] sm:$0xf]
    %v107 = vld [vmem:[%s0 + $0x14] sm:$0xf]
    %v108 = vld [vmem:[%s0 + $0x18] sm:$0xf]
    %v109 = vld [vmem:[%s0 + $0x1c] sm:$0x3]
    %v110 = vld [vmem:[%s0 + $0x20] sm:$0xf]
    %v111 = vld [vmem:[%s0 + $0x24] sm:$0xf]
    %v112 = vld [vmem:[%s0 + $0x28] sm:$0xf]
    %v113 = vld [vmem:[%s0 + $0x2c] sm:$0x3]
    %v114 = vld [vmem:[%s0 + $0x30] sm:$0xf]
    %v115 = vld [vmem:[%s0 + $0x34] sm:$0xf]
    %v116 = vld [vmem:[%s0 + $0x38] sm:$0xf]
    %v117 = vld [vmem:[%s0 + $0x3c] sm:$0x3]
    %v118 = vld [vmem:[%s0 + $0x40] sm:$0xf]
    %v119 = vld [vmem:[%s0 + $0x44] sm:$0xf]
    %v120 = vld [vmem:[%s0 + $0x48] sm:$0xf]
    %v121 = vld [vmem:[%s0 + $0x4c] sm:$0x3]
    %v122 = vld [vmem:[%s0 + $0x50] sm:$0xf]
    %v123 = vld [vmem:[%s0 + $0x54] sm:$0xf]
    %v124 = vld [vmem:[%s0 + $0x58] sm:$0xf]
    %v125 = vld [vmem:[%s0 + $0x5c] sm:$0x3]
    %v126 = vld [vmem:[%s0 + $0x60] sm:$0xf]
    %v127 = vld [vmem:[%s0 + $0x64] sm:$0xf]
    %v128 = vld [vmem:[%s0 + $0x68] sm:$0xf]
    %v129 = vld [vmem:[%s0 + $0x6c] sm:$0x3]
    %v130 = vld [vmem:[%s0 + $0x70] sm:$0xf]
    %v131 = vld [vmem:[%s0 + $0x74] sm:$0xf]
    %v132 = vld [vmem:[%s0 + $0x78] sm:$0xf]
    %v133 = vld [vmem:[%s0 + $0x7c] sm:$0x3]
    %v150 = vunpack.c.l.b16 %v102
    %v151 = vunpack.c.l.b16 %v103
    %v152 = vunpack.c.l.b16 %v106
    %v153 = vunpack.c.l.b16 %v107
    %v154 = vunpack.c.l.b16 %v110
    %v155 = vunpack.c.l.b16 %v111
    %v156 = vunpack.c.l.b16 %v114
    %v157 = vunpack.c.l.b16 %v115
    %v158 = vunpack.c.l.b16 %v118
    %v159 = vunpack.c.l.b16 %v119
    %v160 = vunpack.c.l.b16 %v122
    %v161 = vunpack.c.l.b16 %v123
    %v162 = vunpack.c.l.b16 %v126
    %v163 = vunpack.c.l.b16 %v127
    %v164 = vunpack.c.l.b16 %v130
    %v165 = vunpack.c.l.b16 %v131
    %v166 = vpack.c.b16 %v151, %v150
    %v167 = vpack.c.b16 %v153, %v152
    %v168 = vpack.c.b16 %v155, %v154
    %v169 = vpack.c.b16 %v157, %v156
    %v170 = vpack.c.b16 %v159, %v158
    %v171 = vpack.c.b16 %v161, %v160
    %v172 = vpack.c.b16 %v163, %v162
    %v173 = vpack.c.b16 %v165, %v164
    %v175 = vshrl.u32 %v166, 16
    %v177 = vrot.slane %v175, 3
    %v178 = vshll.u32 %v166, 16
    %v180 = vrot.slane %v178, 4
    %v181 = vor.u32 %v177, %v180
    %v183 = vshrl.u32 %v167, 16
    %v185 = vrot.slane %v183, 3
    %v186 = vshll.u32 %v167, 16
    %v188 = vrot.slane %v186, 4
    %v189 = vor.u32 %v185, %v188
    %v191 = vshrl.u32 %v168, 16
    %v193 = vrot.slane %v191, 3
    %v194 = vshll.u32 %v168, 16
    %v196 = vrot.slane %v194, 4
    %v197 = vor.u32 %v193, %v196
    %v199 = vshrl.u32 %v169, 16
    %v201 = vrot.slane %v199, 3
    %v202 = vshll.u32 %v169, 16
    %v204 = vrot.slane %v202, 4
    %v205 = vor.u32 %v201, %v204
    %v207 = vshrl.u32 %v170, 16
    %v209 = vrot.slane %v207, 3
    %v210 = vshll.u32 %v170, 16
    %v212 = vrot.slane %v210, 4
    %v213 = vor.u32 %v209, %v212
    %v215 = vshrl.u32 %v171, 16
    %v217 = vrot.slane %v215, 3
    %v218 = vshll.u32 %v171, 16
    %v220 = vrot.slane %v218, 4
    %v221 = vor.u32 %v217, %v220
    %v223 = vshrl.u32 %v172, 16
    %v225 = vrot.slane %v223, 3
    %v226 = vshll.u32 %v172, 16
    %v228 = vrot.slane %v226, 4
    %v229 = vor.u32 %v225, %v228
    %v231 = vshrl.u32 %v173, 16
    %v233 = vrot.slane %v231, 3
    %v234 = vshll.u32 %v173, 16
    %v236 = vrot.slane %v234, 4
    %v237 = vor.u32 %v233, %v236
    %238 = vrot.lane.b32.xlu0 %v181, 28
    %v239 = vpop.permute.xlu0 %238
    %240 = vrot.lane.b32.xlu0 %v189, 28
    %v241 = vpop.permute.xlu0 %240
    %242 = vrot.lane.b32.xlu0 %v197, 28
    %v243 = vpop.permute.xlu0 %242
    %244 = vrot.lane.b32.xlu0 %v205, 28
    %v245 = vpop.permute.xlu0 %244
    %246 = vrot.lane.b32.xlu0 %v213, 28
    %v247 = vpop.permute.xlu0 %246
    %248 = vrot.lane.b32.xlu0 %v221, 28
    %v249 = vpop.permute.xlu0 %248
    %250 = vrot.lane.b32.xlu0 %v229, 28
    %v251 = vpop.permute.xlu0 %250
    %252 = vrot.lane.b32.xlu0 %v237, 28
    %v253 = vpop.permute.xlu0 %252
    %v262 = vunpack.c.l.b16 %v104
    %v263 = vunpack.c.l.b16 %v108
    %v264 = vunpack.c.l.b16 %v112
    %v265 = vunpack.c.l.b16 %v116
    %v266 = vunpack.c.l.b16 %v120
    %v267 = vunpack.c.l.b16 %v124
    %v268 = vunpack.c.l.b16 %v128
    %v269 = vunpack.c.l.b16 %v132
    %v270 = vpack.c.b16 %v262, %v151
    %v271 = vpack.c.b16 %v263, %v153
    %v272 = vpack.c.b16 %v264, %v155
    %v273 = vpack.c.b16 %v265, %v157
    %v274 = vpack.c.b16 %v266, %v159
    %v275 = vpack.c.b16 %v267, %v161
    %v276 = vpack.c.b16 %v268, %v163
    %v277 = vpack.c.b16 %v269, %v165
    %v278 = vrot.slane %v270, 3
    %v279 = vrot.slane %v271, 3
    %v280 = vrot.slane %v272, 3
    %v281 = vrot.slane %v273, 3
    %v282 = vrot.slane %v274, 3
    %v283 = vrot.slane %v275, 3
    %v284 = vrot.slane %v276, 3
    %v285 = vrot.slane %v277, 3
    %286 = vrot.lane.b32.xlu0 %v278, 56
    %v287 = vpop.permute.xlu0 %286
    %288 = vrot.lane.b32.xlu0 %v279, 56
    %v289 = vpop.permute.xlu0 %288
    %290 = vrot.lane.b32.xlu0 %v280, 56
    %v291 = vpop.permute.xlu0 %290
    %292 = vrot.lane.b32.xlu0 %v281, 56
    %v293 = vpop.permute.xlu0 %292
    %294 = vrot.lane.b32.xlu0 %v282, 56
    %v295 = vpop.permute.xlu0 %294
    %296 = vrot.lane.b32.xlu0 %v283, 56
    %v297 = vpop.permute.xlu0 %296
    %298 = vrot.lane.b32.xlu0 %v284, 56
    %v299 = vpop.permute.xlu0 %298
    %300 = vrot.lane.b32.xlu0 %v285, 56
    %v301 = vpop.permute.xlu0 %300
    %v310 = vunpack.c.l.b16 %v105
    %v311 = vunpack.c.l.b16 %v109
    %v312 = vunpack.c.l.b16 %v113
    %v313 = vunpack.c.l.b16 %v117
    %v314 = vunpack.c.l.b16 %v121
    %v315 = vunpack.c.l.b16 %v125
    %v316 = vunpack.c.l.b16 %v129
    %v317 = vunpack.c.l.b16 %v133
    %v318 = vpack.c.b16 %v310, %v262
    %v319 = vpack.c.b16 %v311, %v263
    %v320 = vpack.c.b16 %v312, %v264
    %v321 = vpack.c.b16 %v313, %v265
    %v322 = vpack.c.b16 %v314, %v266
    %v323 = vpack.c.b16 %v315, %v267
    %v324 = vpack.c.b16 %v316, %v268
    %v325 = vpack.c.b16 %v317, %v269
    %v327 = vshrl.u32 %v318, 16
    %v329 = vrot.slane %v327, 2
    %v330 = vshll.u32 %v318, 16
    %v332 = vrot.slane %v330, 3
    %v333 = vor.u32 %v329, %v332
    %v335 = vshrl.u32 %v319, 16
    %v337 = vrot.slane %v335, 2
    %v338 = vshll.u32 %v319, 16
    %v340 = vrot.slane %v338, 3
    %v341 = vor.u32 %v337, %v340
    %v343 = vshrl.u32 %v320, 16
    %v345 = vrot.slane %v343, 2
    %v346 = vshll.u32 %v320, 16
    %v348 = vrot.slane %v346, 3
    %v349 = vor.u32 %v345, %v348
    %v351 = vshrl.u32 %v321, 16
    %v353 = vrot.slane %v351, 2
    %v354 = vshll.u32 %v321, 16
    %v356 = vrot.slane %v354, 3
    %v357 = vor.u32 %v353, %v356
    %v359 = vshrl.u32 %v322, 16
    %v361 = vrot.slane %v359, 2
    %v362 = vshll.u32 %v322, 16
    %v364 = vrot.slane %v362, 3
    %v365 = vor.u32 %v361, %v364
    %v367 = vshrl.u32 %v323, 16
    %v369 = vrot.slane %v367, 2
    %v370 = vshll.u32 %v323, 16
    %v372 = vrot.slane %v370, 3
    %v373 = vor.u32 %v369, %v372
    %v375 = vshrl.u32 %v324, 16
    %v377 = vrot.slane %v375, 2
    %v378 = vshll.u32 %v324, 16
    %v380 = vrot.slane %v378, 3
    %v381 = vor.u32 %v377, %v380
    %v383 = vshrl.u32 %v325, 16
    %v385 = vrot.slane %v383, 2
    %v386 = vshll.u32 %v325, 16
    %v388 = vrot.slane %v386, 3
    %v389 = vor.u32 %v385, %v388
    %390 = vrot.lane.b32.xlu0 %v333, 84
    %v391 = vpop.permute.xlu0 %390
    %392 = vrot.lane.b32.xlu0 %v341, 84
    %v393 = vpop.permute.xlu0 %392
    %394 = vrot.lane.b32.xlu0 %v349, 84
    %v395 = vpop.permute.xlu0 %394
    %396 = vrot.lane.b32.xlu0 %v357, 84
    %v397 = vpop.permute.xlu0 %396
    %398 = vrot.lane.b32.xlu0 %v365, 84
    %v399 = vpop.permute.xlu0 %398
    %400 = vrot.lane.b32.xlu0 %v373, 84
    %v401 = vpop.permute.xlu0 %400
    %402 = vrot.lane.b32.xlu0 %v381, 84
    %v403 = vpop.permute.xlu0 %402
    %404 = vrot.lane.b32.xlu0 %v389, 84
    %v405 = vpop.permute.xlu0 %404
    %v406 = vpack.c.b16 %v150, %v150
    %v407 = vpack.c.b16 %v152, %v152
    %v408 = vpack.c.b16 %v154, %v154
    %v409 = vpack.c.b16 %v156, %v156
    %v410 = vpack.c.b16 %v158, %v158
    %v411 = vpack.c.b16 %v160, %v160
    %v412 = vpack.c.b16 %v162, %v162
    %v413 = vpack.c.b16 %v164, %v164
    %v415 = vshrl.u32 %v406, 16
    %v417 = vshll.u32 %v406, 16
    %v419 = vrot.slane %v417, 1
    %v420 = vor.u32 %v415, %v419
    %v422 = vshrl.u32 %v407, 16
    %v424 = vshll.u32 %v407, 16
    %v426 = vrot.slane %v424, 1
    %v427 = vor.u32 %v422, %v426
    %v429 = vshrl.u32 %v408, 16
    %v431 = vshll.u32 %v408, 16
    %v433 = vrot.slane %v431, 1
    %v434 = vor.u32 %v429, %v433
    %v436 = vshrl.u32 %v409, 16
    %v438 = vshll.u32 %v409, 16
    %v440 = vrot.slane %v438, 1
    %v441 = vor.u32 %v436, %v440
    %v443 = vshrl.u32 %v410, 16
    %v445 = vshll.u32 %v410, 16
    %v447 = vrot.slane %v445, 1
    %v448 = vor.u32 %v443, %v447
    %v450 = vshrl.u32 %v411, 16
    %v452 = vshll.u32 %v411, 16
    %v454 = vrot.slane %v452, 1
    %v455 = vor.u32 %v450, %v454
    %v457 = vshrl.u32 %v412, 16
    %v459 = vshll.u32 %v412, 16
    %v461 = vrot.slane %v459, 1
    %v462 = vor.u32 %v457, %v461
    %v464 = vshrl.u32 %v413, 16
    %v466 = vshll.u32 %v413, 16
    %v468 = vrot.slane %v466, 1
    %v469 = vor.u32 %v464, %v468
    %470 = vrot.lane.b32.xlu0 %v420, 112
    %v471 = vpop.permute.xlu0 %470
    %472 = vrot.lane.b32.xlu0 %v427, 112
    %v473 = vpop.permute.xlu0 %472
    %474 = vrot.lane.b32.xlu0 %v434, 112
    %v475 = vpop.permute.xlu0 %474
    %476 = vrot.lane.b32.xlu0 %v441, 112
    %v477 = vpop.permute.xlu0 %476
    %478 = vrot.lane.b32.xlu0 %v448, 112
    %v479 = vpop.permute.xlu0 %478
    %480 = vrot.lane.b32.xlu0 %v455, 112
    %v481 = vpop.permute.xlu0 %480
    %482 = vrot.lane.b32.xlu0 %v462, 112
    %v483 = vpop.permute.xlu0 %482
    %484 = vrot.lane.b32.xlu0 %v469, 112
    %v485 = vpop.permute.xlu0 %484
    %v486 = vpack.c.b16 %v151, %v151
    %v487 = vpack.c.b16 %v153, %v153
    %v488 = vpack.c.b16 %v155, %v155
    %v489 = vpack.c.b16 %v157, %v157
    %v490 = vpack.c.b16 %v159, %v159
    %v491 = vpack.c.b16 %v161, %v161
    %v492 = vpack.c.b16 %v163, %v163
    %v493 = vpack.c.b16 %v165, %v165
    %494 = vrot.lane.b32.xlu0 %v486, 12
    %v495 = vpop.permute.xlu0 %494
    %496 = vrot.lane.b32.xlu0 %v487, 12
    %v497 = vpop.permute.xlu0 %496
    %498 = vrot.lane.b32.xlu0 %v488, 12
    %v499 = vpop.permute.xlu0 %498
    %500 = vrot.lane.b32.xlu0 %v489, 12
    %v501 = vpop.permute.xlu0 %500
    %502 = vrot.lane.b32.xlu0 %v490, 12
    %v503 = vpop.permute.xlu0 %502
    %504 = vrot.lane.b32.xlu0 %v491, 12
    %v505 = vpop.permute.xlu0 %504
    %506 = vrot.lane.b32.xlu0 %v492, 12
    %v507 = vpop.permute.xlu0 %506
    %508 = vrot.lane.b32.xlu0 %v493, 12
    %v509 = vpop.permute.xlu0 %508
    %v511 = vshrl.u32 %v270, 16
    %v513 = vrot.slane %v511, 3
    %v514 = vshll.u32 %v270, 16
    %v516 = vrot.slane %v514, 4
    %v517 = vor.u32 %v513, %v516
    %v519 = vshrl.u32 %v271, 16
    %v521 = vrot.slane %v519, 3
    %v522 = vshll.u32 %v271, 16
    %v524 = vrot.slane %v522, 4
    %v525 = vor.u32 %v521, %v524
    %v527 = vshrl.u32 %v272, 16
    %v529 = vrot.slane %v527, 3
    %v530 = vshll.u32 %v272, 16
    %v532 = vrot.slane %v530, 4
    %v533 = vor.u32 %v529, %v532
    %v535 = vshrl.u32 %v273, 16
    %v537 = vrot.slane %v535, 3
    %v538 = vshll.u32 %v273, 16
    %v540 = vrot.slane %v538, 4
    %v541 = vor.u32 %v537, %v540
    %v543 = vshrl.u32 %v274, 16
    %v545 = vrot.slane %v543, 3
    %v546 = vshll.u32 %v274, 16
    %v548 = vrot.slane %v546, 4
    %v549 = vor.u32 %v545, %v548
    %v551 = vshrl.u32 %v275, 16
    %v553 = vrot.slane %v551, 3
    %v554 = vshll.u32 %v275, 16
    %v556 = vrot.slane %v554, 4
    %v557 = vor.u32 %v553, %v556
    %v559 = vshrl.u32 %v276, 16
    %v561 = vrot.slane %v559, 3
    %v562 = vshll.u32 %v276, 16
    %v564 = vrot.slane %v562, 4
    %v565 = vor.u32 %v561, %v564
    %v567 = vshrl.u32 %v277, 16
    %v569 = vrot.slane %v567, 3
    %v570 = vshll.u32 %v277, 16
    %v572 = vrot.slane %v570, 4
    %v573 = vor.u32 %v569, %v572
    %574 = vrot.lane.b32.xlu0 %v517, 40
    %v575 = vpop.permute.xlu0 %574
    %576 = vrot.lane.b32.xlu0 %v525, 40
    %v577 = vpop.permute.xlu0 %576
    %578 = vrot.lane.b32.xlu0 %v533, 40
    %v579 = vpop.permute.xlu0 %578
    %580 = vrot.lane.b32.xlu0 %v541, 40
    %v581 = vpop.permute.xlu0 %580
    %582 = vrot.lane.b32.xlu0 %v549, 40
    %v583 = vpop.permute.xlu0 %582
    %584 = vrot.lane.b32.xlu0 %v557, 40
    %v585 = vpop.permute.xlu0 %584
    %586 = vrot.lane.b32.xlu0 %v565, 40
    %v587 = vpop.permute.xlu0 %586
    %588 = vrot.lane.b32.xlu0 %v573, 40
    %v589 = vpop.permute.xlu0 %588
    %v590 = vrot.slane %v318, 3
    %v591 = vrot.slane %v319, 3
    %v592 = vrot.slane %v320, 3
    %v593 = vrot.slane %v321, 3
    %v594 = vrot.slane %v322, 3
    %v595 = vrot.slane %v323, 3
    %v596 = vrot.slane %v324, 3
    %v597 = vrot.slane %v325, 3
    %598 = vrot.lane.b32.xlu0 %v590, 68
    %v599 = vpop.permute.xlu0 %598
    %600 = vrot.lane.b32.xlu0 %v591, 68
    %v601 = vpop.permute.xlu0 %600
    %602 = vrot.lane.b32.xlu0 %v592, 68
    %v603 = vpop.permute.xlu0 %602
    %604 = vrot.lane.b32.xlu0 %v593, 68
    %v605 = vpop.permute.xlu0 %604
    %606 = vrot.lane.b32.xlu0 %v594, 68
    %v607 = vpop.permute.xlu0 %606
    %608 = vrot.lane.b32.xlu0 %v595, 68
    %v609 = vpop.permute.xlu0 %608
    %610 = vrot.lane.b32.xlu0 %v596, 68
    %v611 = vpop.permute.xlu0 %610
    %612 = vrot.lane.b32.xlu0 %v597, 68
    %v613 = vpop.permute.xlu0 %612
    %vm614 = vcmask 228352
    %v617 = vsel %vm614, %v102, %v239
    %v620 = vsel %vm614, %v106, %v241
    %v623 = vsel %vm614, %v110, %v243
    %v626 = vsel %vm614, %v114, %v245
    %v629 = vsel %vm614, %v118, %v247
    %v632 = vsel %vm614, %v122, %v249
    %v635 = vsel %vm614, %v126, %v251
    %v638 = vsel %vm614, %v130, %v253
    %vm639 = vcmask 457728
    %v641 = vsel %vm639, %v617, %v287
    %v643 = vsel %vm639, %v620, %v289
    %v645 = vsel %vm639, %v623, %v291
    %v647 = vsel %vm639, %v626, %v293
    %v649 = vsel %vm639, %v629, %v295
    %v651 = vsel %vm639, %v632, %v297
    %v653 = vsel %vm639, %v635, %v299
    %v655 = vsel %vm639, %v638, %v301
    %vm656 = vcmask 687104
    %v658 = vsel %vm656, %v641, %v391
    %v660 = vsel %vm656, %v643, %v393
    %v662 = vsel %vm656, %v645, %v395
    %v664 = vsel %vm656, %v647, %v397
    %v666 = vsel %vm656, %v649, %v399
    %v668 = vsel %vm656, %v651, %v401
    %v670 = vsel %vm656, %v653, %v403
    %v672 = vsel %vm656, %v655, %v405
    %vm673 = vcmask 916480
    %v675 = vsel %vm673, %v658, %v471
    %v677 = vsel %vm673, %v660, %v473
    %v679 = vsel %vm673, %v662, %v475
    %v681 = vsel %vm673, %v664, %v477
    %v683 = vsel %vm673, %v666, %v479
    %v685 = vsel %vm673, %v668, %v481
    %v687 = vsel %vm673, %v670, %v483
    %v689 = vsel %vm673, %v672, %v485
    %vm690 = vcmask 97280
    %v692 = vsel %vm690, %v471, %v495
    %v694 = vsel %vm690, %v473, %v497
    %v696 = vsel %vm690, %v475, %v499
    %v698 = vsel %vm690, %v477, %v501
    %v700 = vsel %vm690, %v479, %v503
    %v702 = vsel %vm690, %v481, %v505
    %v704 = vsel %vm690, %v483, %v507
    %v706 = vsel %vm690, %v485, %v509
    %vm707 = vcmask 326656
    %v709 = vsel %vm707, %v692, %v575
    %v711 = vsel %vm707, %v694, %v577
    %v713 = vsel %vm707, %v696, %v579
    %v715 = vsel %vm707, %v698, %v581
    %v717 = vsel %vm707, %v700, %v583
    %v719 = vsel %vm707, %v702, %v585
    %v721 = vsel %vm707, %v704, %v587
    %v723 = vsel %vm707, %v706, %v589
    %vm724 = vcmask 556032
    %v726 = vsel %vm724, %v709, %v599
    %v728 = vsel %vm724, %v711, %v601
    %v730 = vsel %vm724, %v713, %v603
    %v732 = vsel %vm724, %v715, %v605
    %v734 = vsel %vm724, %v717, %v607
    %v736 = vsel %vm724, %v719, %v609
    %v738 = vsel %vm724, %v721, %v611
    %v740 = vsel %vm724, %v723, %v613
    %v749 = vrot.slane %v726, 7
    %v750 = vrot.slane %v728, 7
    %v751 = vrot.slane %v730, 7
    %v752 = vrot.slane %v732, 7
    %v753 = vrot.slane %v734, 7
    %v754 = vrot.slane %v736, 7
    %v755 = vrot.slane %v738, 7
    %v756 = vrot.slane %v740, 7
    %vm757 = vcmask 1040384
    %v759 = vsel %vm757, %v675, %v749
    %vm760 = vcmask 1041409
    %v761 = vsel %vm760, %v675, %v749
    %v763 = vrot.slane %v761, 1
    %vm764 = vcmask 1042434
    %v765 = vsel %vm764, %v675, %v749
    %v767 = vrot.slane %v765, 2
    %v769 = vsel %vm757, %v677, %v750
    %v770 = vsel %vm760, %v677, %v750
    %v772 = vrot.slane %v770, 1
    %v773 = vsel %vm764, %v677, %v750
    %v775 = vrot.slane %v773, 2
    %v777 = vsel %vm757, %v679, %v751
    %v778 = vsel %vm760, %v679, %v751
    %v780 = vrot.slane %v778, 1
    %v781 = vsel %vm764, %v679, %v751
    %v783 = vrot.slane %v781, 2
    %v785 = vsel %vm757, %v681, %v752
    %v786 = vsel %vm760, %v681, %v752
    %v788 = vrot.slane %v786, 1
    %v789 = vsel %vm764, %v681, %v752
    %v791 = vrot.slane %v789, 2
    %v793 = vsel %vm757, %v683, %v753
    %v794 = vsel %vm760, %v683, %v753
    %v796 = vrot.slane %v794, 1
    %v797 = vsel %vm764, %v683, %v753
    %v799 = vrot.slane %v797, 2
    %v801 = vsel %vm757, %v685, %v754
    %v802 = vsel %vm760, %v685, %v754
    %v804 = vrot.slane %v802, 1
    %v805 = vsel %vm764, %v685, %v754
    %v807 = vrot.slane %v805, 2
    %v809 = vsel %vm757, %v687, %v755
    %v810 = vsel %vm760, %v687, %v755
    %v812 = vrot.slane %v810, 1
    %v813 = vsel %vm764, %v687, %v755
    %v815 = vrot.slane %v813, 2
    %v817 = vsel %vm757, %v689, %v756
    %v818 = vsel %vm760, %v689, %v756
    %v820 = vrot.slane %v818, 1
    %v821 = vsel %vm764, %v689, %v756
    %v823 = vrot.slane %v821, 2
    %v824 = vld [vmem:[#allocation2] sm:$0xff]
    %v825 = vld [vmem:[#allocation2 + $0x8] sm:$0xff]
    %v826 = vld [vmem:[#allocation2 + $0x10] sm:$0xff]
    %v827 = vld [vmem:[#allocation2 + $0x18] sm:$0xff]
    %v828 = vld [vmem:[#allocation2 + $0x20] sm:$0xff]
    %v829 = vld [vmem:[#allocation2 + $0x28] sm:$0xff]
    %v830 = vld [vmem:[#allocation2 + $0x30] sm:$0xff]
    %v831 = vld [vmem:[#allocation2 + $0x38] sm:$0xff]
    %v832 = vld [vmem:[#allocation2 + $0x40] sm:$0xff]
    %v833 = vld [vmem:[#allocation2 + $0x48] sm:$0xff]
    %v834 = vld [vmem:[#allocation2 + $0x50] sm:$0xff]
    %v835 = vld [vmem:[#allocation2 + $0x58] sm:$0xff]
    %v836 = vld [vmem:[#allocation2 + $0x60] sm:$0xff]
    %v837 = vld [vmem:[#allocation2 + $0x68] sm:$0xff]
    %v838 = vld [vmem:[#allocation2 + $0x70] sm:$0xff]
    %v839 = vld [vmem:[#allocation2 + $0x78] sm:$0xff]
    %v840 = vld [vmem:[#allocation2 + $0x80] sm:$0xff]
    %v841 = vld [vmem:[#allocation2 + $0x88] sm:$0xff]
    %v842 = vld [vmem:[#allocation2 + $0x90] sm:$0xff]
    %v843 = vld [vmem:[#allocation2 + $0x98] sm:$0xff]
    %v844 = vld [vmem:[#allocation2 + $0xa0] sm:$0xff]
    %v845 = vld [vmem:[#allocation2 + $0xa8] sm:$0xff]
    %v846 = vld [vmem:[#allocation2 + $0xb0] sm:$0xff]
    %v847 = vld [vmem:[#allocation2 + $0xb8] sm:$0xff]
    %v848 = vld [vmem:[#allocation2 + $0xc0] sm:$0xff]
    %v849 = vld [vmem:[#allocation2 + $0xc8] sm:$0xff]
    %v850 = vld [vmem:[#allocation2 + $0xd0] sm:$0xff]
    %v851 = vld [vmem:[#allocation2 + $0xd8] sm:$0xff]
    %v852 = vld [vmem:[#allocation2 + $0xe0] sm:$0xff]
    %v853 = vld [vmem:[#allocation2 + $0xe8] sm:$0xff]
    %v854 = vld [vmem:[#allocation2 + $0xf0] sm:$0xff]
    %v855 = vld [vmem:[#allocation2 + $0xf8] sm:$0xff]
    %v856 = vld [vmem:[#allocation2 + $0x100] sm:$0xff]
    %v857 = vld [vmem:[#allocation2 + $0x108] sm:$0xff]
    %v858 = vld [vmem:[#allocation2 + $0x110] sm:$0xff]
    %v859 = vld [vmem:[#allocation2 + $0x118] sm:$0xff]
    %v860 = vld [vmem:[#allocation2 + $0x120] sm:$0xff]
    %v861 = vld [vmem:[#allocation2 + $0x128] sm:$0xff]
    %v862 = vld [vmem:[#allocation2 + $0x130] sm:$0xff]
    %v863 = vld [vmem:[#allocation2 + $0x138] sm:$0xff]
    %v864 = vld [vmem:[#allocation2 + $0x140] sm:$0xff]
    %v865 = vld [vmem:[#allocation2 + $0x148] sm:$0xff]
    %v866 = vld [vmem:[#allocation2 + $0x150] sm:$0xff]
    %v867 = vld [vmem:[#allocation2 + $0x158] sm:$0xff]
    %v868 = vld [vmem:[#allocation2 + $0x160] sm:$0xff]
    %v869 = vld [vmem:[#allocation2 + $0x168] sm:$0xff]
    %v870 = vld [vmem:[#allocation2 + $0x170] sm:$0xff]
    %v871 = vld [vmem:[#allocation2 + $0x178] sm:$0xff]
    %v872 = vld [vmem:[#allocation2 + $0x180] sm:$0xff]
    %v873 = vld [vmem:[#allocation2 + $0x188] sm:$0xff]
    %v874 = vld [vmem:[#allocation2 + $0x190] sm:$0xff]
    %v875 = vld [vmem:[#allocation2 + $0x198] sm:$0xff]
    %v876 = vld [vmem:[#allocation2 + $0x1a0] sm:$0xff]
    %v877 = vld [vmem:[#allocation2 + $0x1a8] sm:$0xff]
    %v878 = vld [vmem:[#allocation2 + $0x1b0] sm:$0xff]
    %v879 = vld [vmem:[#allocation2 + $0x1b8] sm:$0xff]
    %v880 = vld [vmem:[#allocation2 + $0x1c0] sm:$0xff]
    %v881 = vld [vmem:[#allocation2 + $0x1c8] sm:$0xff]
    %v882 = vld [vmem:[#allocation2 + $0x1d0] sm:$0xff]
    %v883 = vld [vmem:[#allocation2 + $0x1d8] sm:$0xff]
    %v884 = vld [vmem:[#allocation2 + $0x1e0] sm:$0xff]
    %v885 = vld [vmem:[#allocation2 + $0x1e8] sm:$0xff]
    %v886 = vld [vmem:[#allocation2 + $0x1f0] sm:$0xff]
    %v887 = vld [vmem:[#allocation2 + $0x1f8] sm:$0xff]
    %v888 = vld [vmem:[#allocation2 + $0x200] sm:$0xff]
    %v889 = vld [vmem:[#allocation2 + $0x208] sm:$0xff]
    %v890 = vld [vmem:[#allocation2 + $0x210] sm:$0xff]
    %v891 = vld [vmem:[#allocation2 + $0x218] sm:$0xff]
    %v892 = vld [vmem:[#allocation2 + $0x220] sm:$0xff]
    %v893 = vld [vmem:[#allocation2 + $0x228] sm:$0xff]
    %v894 = vld [vmem:[#allocation2 + $0x230] sm:$0xff]
    %v895 = vld [vmem:[#allocation2 + $0x238] sm:$0xff]
    %v896 = vld [vmem:[#allocation2 + $0x240] sm:$0xff]
    %v897 = vld [vmem:[#allocation2 + $0x248] sm:$0xff]
    %v898 = vld [vmem:[#allocation2 + $0x250] sm:$0xff]
    %v899 = vld [vmem:[#allocation2 + $0x258] sm:$0xff]
    %v900 = vld [vmem:[#allocation2 + $0x260] sm:$0xff]
    %v901 = vld [vmem:[#allocation2 + $0x268] sm:$0xff]
    %v902 = vld [vmem:[#allocation2 + $0x270] sm:$0xff]
    %v903 = vld [vmem:[#allocation2 + $0x278] sm:$0xff]
    %v904 = vld [vmem:[#allocation2 + $0x280] sm:$0xff]
    %v905 = vld [vmem:[#allocation2 + $0x288] sm:$0xff]
    %v906 = vld [vmem:[#allocation2 + $0x290] sm:$0xff]
    %v907 = vld [vmem:[#allocation2 + $0x298] sm:$0xff]
    %v908 = vld [vmem:[#allocation2 + $0x2a0] sm:$0xff]
    %v909 = vld [vmem:[#allocation2 + $0x2a8] sm:$0xff]
    %v910 = vld [vmem:[#allocation2 + $0x2b0] sm:$0xff]
    %v911 = vld [vmem:[#allocation2 + $0x2b8] sm:$0xff]
    %v912 = vld [vmem:[#allocation2 + $0x2c0] sm:$0xff]
    %v913 = vld [vmem:[#allocation2 + $0x2c8] sm:$0xff]
    %v914 = vld [vmem:[#allocation2 + $0x2d0] sm:$0xff]
    %v915 = vld [vmem:[#allocation2 + $0x2d8] sm:$0xff]
    %v916 = vld [vmem:[#allocation2 + $0x2e0] sm:$0xff]
    %v917 = vld [vmem:[#allocation2 + $0x2e8] sm:$0xff]
    %v918 = vld [vmem:[#allocation2 + $0x2f0] sm:$0xff]
    %v919 = vld [vmem:[#allocation2 + $0x2f8] sm:$0xff]
    %v920 = vld [vmem:[#allocation2 + $0x300] sm:$0xff]
    %v921 = vld [vmem:[#allocation2 + $0x308] sm:$0xff]
    %v922 = vld [vmem:[#allocation2 + $0x310] sm:$0xff]
    %v923 = vld [vmem:[#allocation2 + $0x318] sm:$0xff]
    %v924 = vld [vmem:[#allocation2 + $0x320] sm:$0xff]
    %v925 = vld [vmem:[#allocation2 + $0x328] sm:$0xff]
    %v926 = vld [vmem:[#allocation2 + $0x330] sm:$0xff]
    %v927 = vld [vmem:[#allocation2 + $0x338] sm:$0xff]
    %v928 = vld [vmem:[#allocation2 + $0x340] sm:$0xff]
    %v929 = vld [vmem:[#allocation2 + $0x348] sm:$0xff]
    %v930 = vld [vmem:[#allocation2 + $0x350] sm:$0xff]
    %v931 = vld [vmem:[#allocation2 + $0x358] sm:$0xff]
    %v932 = vld [vmem:[#allocation2 + $0x360] sm:$0xff]
    %v933 = vld [vmem:[#allocation2 + $0x368] sm:$0xff]
    %v934 = vld [vmem:[#allocation2 + $0x370] sm:$0xff]
    %v935 = vld [vmem:[#allocation2 + $0x378] sm:$0xff]
    %936 = vst [vmem:[#allocation1] ss:$9 sm:$0xff] %v759
    %s938 = scalar_lea.vmem [#allocation1], 1
    %939 = vst [vmem:[%s938] ss:$9 sm:$0xff] %v763
    %s941 = scalar_lea.vmem [#allocation1], 2
    %942 = vst [vmem:[%s941] ss:$9 sm:$0xff] %v767
    %s943 = scalar_lea.vmem [#allocation1], 3
    %944 = vst [vmem:[%s943] ss:$9 sm:$0xff] %v769
    %s946 = scalar_lea.vmem [#allocation1], 4
    %947 = vst [vmem:[%s946] ss:$9 sm:$0xff] %v772
    %s949 = scalar_lea.vmem [#allocation1], 5
    %950 = vst [vmem:[%s949] ss:$9 sm:$0xff] %v775
    %s951 = scalar_lea.vmem [#allocation1], 6
    %952 = vst [vmem:[%s951] ss:$9 sm:$0xff] %v777
    %s954 = scalar_lea.vmem [#allocation1], 7
    %955 = vst [vmem:[%s954] ss:$9 sm:$0xff] %v780
    %v956 = vld [vmem:[#allocation1] sm:$0xff]
    %v957 = vld [vmem:[#allocation1 + $0x9] sm:$0xff]
    %959 = vst [vmem:[#allocation1] ss:$9 sm:$0xff] %v783
    %960 = vst [vmem:[%s938] ss:$9 sm:$0xff] %v785
    %962 = vst [vmem:[%s941] ss:$9 sm:$0xff] %v788
    %964 = vst [vmem:[%s943] ss:$9 sm:$0xff] %v791
    %965 = vst [vmem:[%s946] ss:$9 sm:$0xff] %v793
    %967 = vst [vmem:[%s949] ss:$9 sm:$0xff] %v796
    %969 = vst [vmem:[%s951] ss:$9 sm:$0xff] %v799
    %970 = vst [vmem:[%s954] ss:$9 sm:$0xff] %v801
    %v971 = vld [vmem:[#allocation1] sm:$0xff]
    %v972 = vld [vmem:[#allocation1 + $0x9] sm:$0xff]
    %974 = vst [vmem:[#allocation1] ss:$9 sm:$0xff] %v804
    %976 = vst [vmem:[%s938] ss:$9 sm:$0xff] %v807
    %977 = vst [vmem:[%s941] ss:$9 sm:$0xff] %v809
    %979 = vst [vmem:[%s943] ss:$9 sm:$0xff] %v812
    %981 = vst [vmem:[%s946] ss:$9 sm:$0xff] %v815
    %982 = vst [vmem:[%s949] ss:$9 sm:$0xff] %v817
    %984 = vst [vmem:[%s951] ss:$9 sm:$0xff] %v820
    %986 = vst [vmem:[%s954] ss:$9 sm:$0xff] %v823
    %v987 = vld [vmem:[#allocation1] sm:$0xff]
    %v988 = vld [vmem:[#allocation1 + $0x9] sm:$0xff]
    %v1104 = vunpack.c.l.b16 %v824
    %v1105 = vunpack.c.h.b16 %v824
    %v1106 = vunpack.c.l.b16 %v825
    %v1107 = vunpack.c.h.b16 %v825
    %v1108 = vunpack.c.l.b16 %v826
    %v1109 = vunpack.c.h.b16 %v826
    %v1110 = vunpack.c.l.b16 %v827
    %v1111 = vunpack.c.h.b16 %v827
    %v1112 = vunpack.c.l.b16 %v828
    %v1113 = vunpack.c.h.b16 %v828
    %v1114 = vunpack.c.l.b16 %v829
    %v1115 = vunpack.c.h.b16 %v829
    %v1116 = vunpack.c.l.b16 %v830
    %v1117 = vunpack.c.h.b16 %v830
    %v1118 = vunpack.c.l.b16 %v831
    %v1119 = vunpack.c.h.b16 %v831
    %v1120 = vunpack.c.l.b16 %v832
    %v1121 = vunpack.c.h.b16 %v832
    %v1122 = vunpack.c.l.b16 %v833
    %v1123 = vunpack.c.h.b16 %v833
    %v1124 = vunpack.c.l.b16 %v834
    %v1125 = vunpack.c.h.b16 %v834
    %v1126 = vunpack.c.l.b16 %v835
    %v1127 = vunpack.c.h.b16 %v835
    %v1128 = vunpack.c.l.b16 %v836
    %v1129 = vunpack.c.h.b16 %v836
    %v1130 = vunpack.c.l.b16 %v837
    %v1131 = vunpack.c.h.b16 %v837
    %v1132 = vunpack.c.l.b16 %v838
    %v1133 = vunpack.c.h.b16 %v838
    %v1134 = vunpack.c.l.b16 %v839
    %v1135 = vunpack.c.h.b16 %v839
    %v1136 = vunpack.c.l.b16 %v840
    %v1137 = vunpack.c.h.b16 %v840
    %v1138 = vunpack.c.l.b16 %v841
    %v1139 = vunpack.c.h.b16 %v841
    %v1140 = vunpack.c.l.b16 %v842
    %v1141 = vunpack.c.h.b16 %v842
    %v1142 = vunpack.c.l.b16 %v843
    %v1143 = vunpack.c.h.b16 %v843
    %v1144 = vunpack.c.l.b16 %v844
    %v1145 = vunpack.c.h.b16 %v844
    %v1146 = vunpack.c.l.b16 %v845
    %v1147 = vunpack.c.h.b16 %v845
    %v1148 = vunpack.c.l.b16 %v846
    %v1149 = vunpack.c.h.b16 %v846
    %v1150 = vunpack.c.l.b16 %v847
    %v1151 = vunpack.c.h.b16 %v847
    %v1152 = vunpack.c.l.b16 %v848
    %v1153 = vunpack.c.h.b16 %v848
    %v1154 = vunpack.c.l.b16 %v849
    %v1155 = vunpack.c.h.b16 %v849
    %v1156 = vunpack.c.l.b16 %v850
    %v1157 = vunpack.c.h.b16 %v850
    %v1158 = vunpack.c.l.b16 %v851
    %v1159 = vunpack.c.h.b16 %v851
    %v1160 = vunpack.c.l.b16 %v852
    %v1161 = vunpack.c.h.b16 %v852
    %v1162 = vunpack.c.l.b16 %v853
    %v1163 = vunpack.c.h.b16 %v853
    %v1164 = vunpack.c.l.b16 %v854
    %v1165 = vunpack.c.h.b16 %v854
    %v1166 = vunpack.c.l.b16 %v855
    %v1167 = vunpack.c.h.b16 %v855
    %v1168 = vunpack.c.l.b16 %v856
    %v1169 = vunpack.c.h.b16 %v856
    %v1170 = vunpack.c.l.b16 %v857
    %v1171 = vunpack.c.h.b16 %v857
    %v1172 = vunpack.c.l.b16 %v858
    %v1173 = vunpack.c.h.b16 %v858
    %v1174 = vunpack.c.l.b16 %v859
    %v1175 = vunpack.c.h.b16 %v859
    %v1176 = vunpack.c.l.b16 %v860
    %v1177 = vunpack.c.h.b16 %v860
    %v1178 = vunpack.c.l.b16 %v861
    %v1179 = vunpack.c.h.b16 %v861
    %v1180 = vunpack.c.l.b16 %v862
    %v1181 = vunpack.c.h.b16 %v862
    %v1182 = vunpack.c.l.b16 %v863
    %v1183 = vunpack.c.h.b16 %v863
    %v1184 = vunpack.c.l.b16 %v864
    %v1185 = vunpack.c.h.b16 %v864
    %v1186 = vunpack.c.l.b16 %v865
    %v1187 = vunpack.c.h.b16 %v865
    %v1188 = vunpack.c.l.b16 %v866
    %v1189 = vunpack.c.h.b16 %v866
    %v1190 = vunpack.c.l.b16 %v867
    %v1191 = vunpack.c.h.b16 %v867
    %v1192 = vunpack.c.l.b16 %v868
    %v1193 = vunpack.c.h.b16 %v868
    %v1194 = vunpack.c.l.b16 %v869
    %v1195 = vunpack.c.h.b16 %v869
    %v1196 = vunpack.c.l.b16 %v870
    %v1197 = vunpack.c.h.b16 %v870
    %v1198 = vunpack.c.l.b16 %v871
    %v1199 = vunpack.c.h.b16 %v871
    %v1200 = vunpack.c.l.b16 %v872
    %v1201 = vunpack.c.h.b16 %v872
    %v1202 = vunpack.c.l.b16 %v873
    %v1203 = vunpack.c.h.b16 %v873
    %v1204 = vunpack.c.l.b16 %v874
    %v1205 = vunpack.c.h.b16 %v874
    %v1206 = vunpack.c.l.b16 %v875
    %v1207 = vunpack.c.h.b16 %v875
    %v1208 = vunpack.c.l.b16 %v876
    %v1209 = vunpack.c.h.b16 %v876
    %v1210 = vunpack.c.l.b16 %v877
    %v1211 = vunpack.c.h.b16 %v877
    %v1212 = vunpack.c.l.b16 %v878
    %v1213 = vunpack.c.h.b16 %v878
    %v1214 = vunpack.c.l.b16 %v879
    %v1215 = vunpack.c.h.b16 %v879
    %v1216 = vunpack.c.l.b16 %v880
    %v1217 = vunpack.c.h.b16 %v880
    %v1218 = vunpack.c.l.b16 %v881
    %v1219 = vunpack.c.h.b16 %v881
    %v1220 = vunpack.c.l.b16 %v882
    %v1221 = vunpack.c.h.b16 %v882
    %v1222 = vunpack.c.l.b16 %v883
    %v1223 = vunpack.c.h.b16 %v883
    %v1224 = vunpack.c.l.b16 %v884
    %v1225 = vunpack.c.h.b16 %v884
    %v1226 = vunpack.c.l.b16 %v885
    %v1227 = vunpack.c.h.b16 %v885
    %v1228 = vunpack.c.l.b16 %v886
    %v1229 = vunpack.c.h.b16 %v886
    %v1230 = vunpack.c.l.b16 %v887
    %v1231 = vunpack.c.h.b16 %v887
    %v1232 = vunpack.c.l.b16 %v888
    %v1233 = vunpack.c.h.b16 %v888
    %v1234 = vunpack.c.l.b16 %v889
    %v1235 = vunpack.c.h.b16 %v889
    %v1236 = vunpack.c.l.b16 %v890
    %v1237 = vunpack.c.h.b16 %v890
    %v1238 = vunpack.c.l.b16 %v891
    %v1239 = vunpack.c.h.b16 %v891
    %v1240 = vunpack.c.l.b16 %v892
    %v1241 = vunpack.c.h.b16 %v892
    %v1242 = vunpack.c.l.b16 %v893
    %v1243 = vunpack.c.h.b16 %v893
    %v1244 = vunpack.c.l.b16 %v894
    %v1245 = vunpack.c.h.b16 %v894
    %v1246 = vunpack.c.l.b16 %v895
    %v1247 = vunpack.c.h.b16 %v895
    %v1248 = vunpack.c.l.b16 %v896
    %v1249 = vunpack.c.h.b16 %v896
    %v1250 = vunpack.c.l.b16 %v897
    %v1251 = vunpack.c.h.b16 %v897
    %v1252 = vunpack.c.l.b16 %v898
    %v1253 = vunpack.c.h.b16 %v898
    %v1254 = vunpack.c.l.b16 %v899
    %v1255 = vunpack.c.h.b16 %v899
    %v1256 = vunpack.c.l.b16 %v900
    %v1257 = vunpack.c.h.b16 %v900
    %v1258 = vunpack.c.l.b16 %v901
    %v1259 = vunpack.c.h.b16 %v901
    %v1260 = vunpack.c.l.b16 %v902
    %v1261 = vunpack.c.h.b16 %v902
    %v1262 = vunpack.c.l.b16 %v903
    %v1263 = vunpack.c.h.b16 %v903
    %v1264 = vunpack.c.l.b16 %v904
    %v1265 = vunpack.c.h.b16 %v904
    %v1266 = vunpack.c.l.b16 %v905
    %v1267 = vunpack.c.h.b16 %v905
    %v1268 = vunpack.c.l.b16 %v906
    %v1269 = vunpack.c.h.b16 %v906
    %v1270 = vunpack.c.l.b16 %v907
    %v1271 = vunpack.c.h.b16 %v907
    %v1272 = vunpack.c.l.b16 %v908
    %v1273 = vunpack.c.h.b16 %v908
    %v1274 = vunpack.c.l.b16 %v909
    %v1275 = vunpack.c.h.b16 %v909
    %v1276 = vunpack.c.l.b16 %v910
    %v1277 = vunpack.c.h.b16 %v910
    %v1278 = vunpack.c.l.b16 %v911
    %v1279 = vunpack.c.h.b16 %v911
    %v1280 = vunpack.c.l.b16 %v912
    %v1281 = vunpack.c.h.b16 %v912
    %v1282 = vunpack.c.l.b16 %v913
    %v1283 = vunpack.c.h.b16 %v913
    %v1284 = vunpack.c.l.b16 %v914
    %v1285 = vunpack.c.h.b16 %v914
    %v1286 = vunpack.c.l.b16 %v915
    %v1287 = vunpack.c.h.b16 %v915
    %v1288 = vunpack.c.l.b16 %v916
    %v1289 = vunpack.c.h.b16 %v916
    %v1290 = vunpack.c.l.b16 %v917
    %v1291 = vunpack.c.h.b16 %v917
    %v1292 = vunpack.c.l.b16 %v918
    %v1293 = vunpack.c.h.b16 %v918
    %v1294 = vunpack.c.l.b16 %v919
    %v1295 = vunpack.c.h.b16 %v919
    %v1296 = vunpack.c.l.b16 %v920
    %v1297 = vunpack.c.h.b16 %v920
    %v1298 = vunpack.c.l.b16 %v921
    %v1299 = vunpack.c.h.b16 %v921
    %v1300 = vunpack.c.l.b16 %v922
    %v1301 = vunpack.c.h.b16 %v922
    %v1302 = vunpack.c.l.b16 %v923
    %v1303 = vunpack.c.h.b16 %v923
    %v1304 = vunpack.c.l.b16 %v924
    %v1305 = vunpack.c.h.b16 %v924
    %v1306 = vunpack.c.l.b16 %v925
    %v1307 = vunpack.c.h.b16 %v925
    %v1308 = vunpack.c.l.b16 %v926
    %v1309 = vunpack.c.h.b16 %v926
    %v1310 = vunpack.c.l.b16 %v927
    %v1311 = vunpack.c.h.b16 %v927
    %v1312 = vunpack.c.l.b16 %v928
    %v1313 = vunpack.c.h.b16 %v928
    %v1314 = vunpack.c.l.b16 %v929
    %v1315 = vunpack.c.h.b16 %v929
    %v1316 = vunpack.c.l.b16 %v930
    %v1317 = vunpack.c.h.b16 %v930
    %v1318 = vunpack.c.l.b16 %v931
    %v1319 = vunpack.c.h.b16 %v931
    %v1320 = vunpack.c.l.b16 %v932
    %v1321 = vunpack.c.h.b16 %v932
    %v1322 = vunpack.c.l.b16 %v933
    %v1323 = vunpack.c.h.b16 %v933
    %v1324 = vunpack.c.l.b16 %v934
    %v1325 = vunpack.c.h.b16 %v934
    %v1326 = vunpack.c.l.b16 %v935
    %v1327 = vunpack.c.h.b16 %v935
    %v1328 = vpack.c.b16 %v1112, %v1104
    %v1329 = vpack.c.b16 %v1113, %v1105
    %v1330 = vpack.c.b16 %v1114, %v1106
    %v1331 = vpack.c.b16 %v1115, %v1107
    %v1332 = vpack.c.b16 %v1116, %v1108
    %v1333 = vpack.c.b16 %v1117, %v1109
    %v1334 = vpack.c.b16 %v1118, %v1110
    %v1335 = vpack.c.b16 %v1119, %v1111
    %v1336 = vpack.c.b16 %v1128, %v1120
    %v1337 = vpack.c.b16 %v1129, %v1121
    %v1338 = vpack.c.b16 %v1130, %v1122
    %v1339 = vpack.c.b16 %v1131, %v1123
    %v1340 = vpack.c.b16 %v1132, %v1124
    %v1341 = vpack.c.b16 %v1133, %v1125
    %v1342 = vpack.c.b16 %v1134, %v1126
    %v1343 = vpack.c.b16 %v1135, %v1127
    %v1344 = vpack.c.b16 %v1144, %v1136
    %v1345 = vpack.c.b16 %v1145, %v1137
    %v1346 = vpack.c.b16 %v1146, %v1138
    %v1347 = vpack.c.b16 %v1147, %v1139
    %v1348 = vpack.c.b16 %v1148, %v1140
    %v1349 = vpack.c.b16 %v1149, %v1141
    %v1350 = vpack.c.b16 %v1150, %v1142
    %v1351 = vpack.c.b16 %v1151, %v1143
    %v1352 = vpack.c.b16 %v1160, %v1152
    %v1353 = vpack.c.b16 %v1161, %v1153
    %v1354 = vpack.c.b16 %v1162, %v1154
    %v1355 = vpack.c.b16 %v1163, %v1155
    %v1356 = vpack.c.b16 %v1164, %v1156
    %v1357 = vpack.c.b16 %v1165, %v1157
    %v1358 = vpack.c.b16 %v1166, %v1158
    %v1359 = vpack.c.b16 %v1167, %v1159
    %v1360 = vpack.c.b16 %v1176, %v1168
    %v1361 = vpack.c.b16 %v1177, %v1169
    %v1362 = vpack.c.b16 %v1178, %v1170
    %v1363 = vpack.c.b16 %v1179, %v1171
    %v1364 = vpack.c.b16 %v1180, %v1172
    %v1365 = vpack.c.b16 %v1181, %v1173
    %v1366 = vpack.c.b16 %v1182, %v1174
    %v1367 = vpack.c.b16 %v1183, %v1175
    %v1368 = vpack.c.b16 %v1192, %v1184
    %v1369 = vpack.c.b16 %v1193, %v1185
    %v1370 = vpack.c.b16 %v1194, %v1186
    %v1371 = vpack.c.b16 %v1195, %v1187
    %v1372 = vpack.c.b16 %v1196, %v1188
    %v1373 = vpack.c.b16 %v1197, %v1189
    %v1374 = vpack.c.b16 %v1198, %v1190
    %v1375 = vpack.c.b16 %v1199, %v1191
    %v1376 = vpack.c.b16 %v1208, %v1200
    %v1377 = vpack.c.b16 %v1209, %v1201
    %v1378 = vpack.c.b16 %v1210, %v1202
    %v1379 = vpack.c.b16 %v1211, %v1203
    %v1380 = vpack.c.b16 %v1212, %v1204
    %v1381 = vpack.c.b16 %v1213, %v1205
    %v1382 = vpack.c.b16 %v1214, %v1206
    %v1383 = vpack.c.b16 %v1215, %v1207
    %v1384 = vpack.c.b16 %v1224, %v1216
    %v1385 = vpack.c.b16 %v1225, %v1217
    %v1386 = vpack.c.b16 %v1226, %v1218
    %v1387 = vpack.c.b16 %v1227, %v1219
    %v1388 = vpack.c.b16 %v1228, %v1220
    %v1389 = vpack.c.b16 %v1229, %v1221
    %v1390 = vpack.c.b16 %v1230, %v1222
    %v1391 = vpack.c.b16 %v1231, %v1223
    %v1392 = vpack.c.b16 %v1240, %v1232
    %v1393 = vpack.c.b16 %v1241, %v1233
    %v1394 = vpack.c.b16 %v1242, %v1234
    %v1395 = vpack.c.b16 %v1243, %v1235
    %v1396 = vpack.c.b16 %v1244, %v1236
    %v1397 = vpack.c.b16 %v1245, %v1237
    %v1398 = vpack.c.b16 %v1246, %v1238
    %v1399 = vpack.c.b16 %v1247, %v1239
    %v1400 = vpack.c.b16 %v1256, %v1248
    %v1401 = vpack.c.b16 %v1257, %v1249
    %v1402 = vpack.c.b16 %v1258, %v1250
    %v1403 = vpack.c.b16 %v1259, %v1251
    %v1404 = vpack.c.b16 %v1260, %v1252
    %v1405 = vpack.c.b16 %v1261, %v1253
    %v1406 = vpack.c.b16 %v1262, %v1254
    %v1407 = vpack.c.b16 %v1263, %v1255
    %v1408 = vpack.c.b16 %v1272, %v1264
    %v1409 = vpack.c.b16 %v1273, %v1265
    %v1410 = vpack.c.b16 %v1274, %v1266
    %v1411 = vpack.c.b16 %v1275, %v1267
    %v1412 = vpack.c.b16 %v1276, %v1268
    %v1413 = vpack.c.b16 %v1277, %v1269
    %v1414 = vpack.c.b16 %v1278, %v1270
    %v1415 = vpack.c.b16 %v1279, %v1271
    %v1416 = vpack.c.b16 %v1288, %v1280
    %v1417 = vpack.c.b16 %v1289, %v1281
    %v1418 = vpack.c.b16 %v1290, %v1282
    %v1419 = vpack.c.b16 %v1291, %v1283
    %v1420 = vpack.c.b16 %v1292, %v1284
    %v1421 = vpack.c.b16 %v1293, %v1285
    %v1422 = vpack.c.b16 %v1294, %v1286
    %v1423 = vpack.c.b16 %v1295, %v1287
    %v1424 = vpack.c.b16 %v1304, %v1296
    %v1425 = vpack.c.b16 %v1305, %v1297
    %v1426 = vpack.c.b16 %v1306, %v1298
    %v1427 = vpack.c.b16 %v1307, %v1299
    %v1428 = vpack.c.b16 %v1308, %v1300
    %v1429 = vpack.c.b16 %v1309, %v1301
    %v1430 = vpack.c.b16 %v1310, %v1302
    %v1431 = vpack.c.b16 %v1311, %v1303
    %v1432 = vpack.c.b16 %v1320, %v1312
    %v1433 = vpack.c.b16 %v1321, %v1313
    %v1434 = vpack.c.b16 %v1322, %v1314
    %v1435 = vpack.c.b16 %v1323, %v1315
    %v1436 = vpack.c.b16 %v1324, %v1316
    %v1437 = vpack.c.b16 %v1325, %v1317
    %v1438 = vpack.c.b16 %v1326, %v1318
    %v1439 = vpack.c.b16 %v1327, %v1319
    %vm1552 = vcmask 785408
    %v1553 = vsel %vm1552, %v957, 0
    %v1555 = vsel %vm1552, %v972, 0
    %v1557 = vsel %vm1552, %v988, 0
    %1559 = vmatpush.bf16.msra.mxu0 %v1384
    %1560 = vmatpush.bf16.msra.mxu0 %v1376
    %1561 = vmatpush.bf16.msra.mxu0 %v1368
    %1562 = vmatpush.bf16.msra.mxu0 %v1360
    %1563 = vmatpush.bf16.msra.mxu0 %v1352
    %1564 = vmatpush.bf16.msra.mxu0 %v1344
    %1565 = vmatpush.bf16.msra.mxu0 %v1336
    %1566 = vmatpush.bf16.msra.mxu0 %v1328
    %1567 = vmatmul.bf16.gmra.mxu0 %v956
    %v1568 = vpop.f32.mrf.mxu0
    %v1569 = vadd.f32 0.0, %v1568
    %v1570 = vpop.f32.mrf.mxu0
    %v1571 = vadd.f32 0.0, %v1570
    %1572 = vmatmul.bf16.gmra.mxu0 %v971
    %v1573 = vpop.f32.mrf.mxu0
    %v1574 = vadd.f32 0.0, %v1573
    %v1575 = vpop.f32.mrf.mxu0
    %v1576 = vadd.f32 0.0, %v1575
    %1577 = vmatmul.bf16.gmra.mxu0 %v987
    %v1578 = vpop.f32.mrf.mxu0
    %v1579 = vadd.f32 0.0, %v1578
    %v1580 = vpop.f32.mrf.mxu0
    %v1581 = vadd.f32 0.0, %v1580
    %1582 = vdwg.mxu0
    %1583 = vmatpush.bf16.msra.mxu0 0
    %1584 = vmatpush.bf16.msra.mxu0 0
    %1585 = vmatpush.bf16.msra.mxu0 %v1432
    %1586 = vmatpush.bf16.msra.mxu0 %v1424
    %1587 = vmatpush.bf16.msra.mxu0 %v1416
    %1588 = vmatpush.bf16.msra.mxu0 %v1408
    %1589 = vmatpush.bf16.msra.mxu0 %v1400
    %1590 = vmatpush.bf16.msra.mxu0 %v1392
    %1591 = vmatmul.bf16.gmra.mxu0 %v1553
    %v1592 = vpop.f32.mrf.mxu0
    %v1593 = vadd.f32 %v1569, %v1592
    %v1594 = vpop.f32.mrf.mxu0
    %v1595 = vadd.f32 %v1571, %v1594
    %1596 = vmatmul.bf16.gmra.mxu0 %v1555
    %v1597 = vpop.f32.mrf.mxu0
    %v1598 = vadd.f32 %v1574, %v1597
    %v1599 = vpop.f32.mrf.mxu0
    %v1600 = vadd.f32 %v1576, %v1599
    %1601 = vmatmul.bf16.gmra.mxu0 %v1557
    %v1602 = vpop.f32.mrf.mxu0
    %v1603 = vadd.f32 %v1579, %v1602
    %v1604 = vpop.f32.mrf.mxu0
    %v1605 = vadd.f32 %v1581, %v1604
    %1606 = vdwg.mxu0
    %1607 = vmatpush.bf16.msra.mxu0 %v1385
    %1608 = vmatpush.bf16.msra.mxu0 %v1377
    %1609 = vmatpush.bf16.msra.mxu0 %v1369
    %1610 = vmatpush.bf16.msra.mxu0 %v1361
    %1611 = vmatpush.bf16.msra.mxu0 %v1353
    %1612 = vmatpush.bf16.msra.mxu0 %v1345
    %1613 = vmatpush.bf16.msra.mxu0 %v1337
    %1614 = vmatpush.bf16.msra.mxu0 %v1329
    %1615 = vmatmul.bf16.gmra.mxu0 %v956
    %v1616 = vpop.f32.mrf.mxu0
    %v1617 = vadd.f32 0.0, %v1616
    %v1618 = vpop.f32.mrf.mxu0
    %v1619 = vadd.f32 0.0, %v1618
    %1620 = vmatmul.bf16.gmra.mxu0 %v971
    %v1621 = vpop.f32.mrf.mxu0
    %v1622 = vadd.f32 0.0, %v1621
    %v1623 = vpop.f32.mrf.mxu0
    %v1624 = vadd.f32 0.0, %v1623
    %1625 = vmatmul.bf16.gmra.mxu0 %v987
    %v1626 = vpop.f32.mrf.mxu0
    %v1627 = vadd.f32 0.0, %v1626
    %v1628 = vpop.f32.mrf.mxu0
    %v1629 = vadd.f32 0.0, %v1628
    %1630 = vdwg.mxu0
    %1631 = vmatpush.bf16.msra.mxu0 0
    %1632 = vmatpush.bf16.msra.mxu0 0
    %1633 = vmatpush.bf16.msra.mxu0 %v1433
    %1634 = vmatpush.bf16.msra.mxu0 %v1425
    %1635 = vmatpush.bf16.msra.mxu0 %v1417
    %1636 = vmatpush.bf16.msra.mxu0 %v1409
    %1637 = vmatpush.bf16.msra.mxu0 %v1401
    %1638 = vmatpush.bf16.msra.mxu0 %v1393
    %1639 = vmatmul.bf16.gmra.mxu0 %v1553
    %v1640 = vpop.f32.mrf.mxu0
    %v1641 = vadd.f32 %v1617, %v1640
    %v1642 = vpop.f32.mrf.mxu0
    %v1643 = vadd.f32 %v1619, %v1642
    %1644 = vmatmul.bf16.gmra.mxu0 %v1555
    %v1645 = vpop.f32.mrf.mxu0
    %v1646 = vadd.f32 %v1622, %v1645
    %v1647 = vpop.f32.mrf.mxu0
    %v1648 = vadd.f32 %v1624, %v1647
    %1649 = vmatmul.bf16.gmra.mxu0 %v1557
    %v1650 = vpop.f32.mrf.mxu0
    %v1651 = vadd.f32 %v1627, %v1650
    %v1652 = vpop.f32.mrf.mxu0
    %v1653 = vadd.f32 %v1629, %v1652
    %1654 = vdwg.mxu0
    %1655 = vmatpush.bf16.msra.mxu0 %v1386
    %1656 = vmatpush.bf16.msra.mxu0 %v1378
    %1657 = vmatpush.bf16.msra.mxu0 %v1370
    %1658 = vmatpush.bf16.msra.mxu0 %v1362
    %1659 = vmatpush.bf16.msra.mxu0 %v1354
    %1660 = vmatpush.bf16.msra.mxu0 %v1346
    %1661 = vmatpush.bf16.msra.mxu0 %v1338
    %1662 = vmatpush.bf16.msra.mxu0 %v1330
    %1663 = vmatmul.bf16.gmra.mxu0 %v956
    %v1664 = vpop.f32.mrf.mxu0
    %v1665 = vadd.f32 0.0, %v1664
    %v1666 = vpop.f32.mrf.mxu0
    %v1667 = vadd.f32 0.0, %v1666
    %1668 = vmatmul.bf16.gmra.mxu0 %v971
    %v1669 = vpop.f32.mrf.mxu0
    %v1670 = vadd.f32 0.0, %v1669
    %v1671 = vpop.f32.mrf.mxu0
    %v1672 = vadd.f32 0.0, %v1671
    %1673 = vmatmul.bf16.gmra.mxu0 %v987
    %v1674 = vpop.f32.mrf.mxu0
    %v1675 = vadd.f32 0.0, %v1674
    %v1676 = vpop.f32.mrf.mxu0
    %v1677 = vadd.f32 0.0, %v1676
    %1678 = vdwg.mxu0
    %1679 = vmatpush.bf16.msra.mxu0 0
    %1680 = vmatpush.bf16.msra.mxu0 0
    %1681 = vmatpush.bf16.msra.mxu0 %v1434
    %1682 = vmatpush.bf16.msra.mxu0 %v1426
    %1683 = vmatpush.bf16.msra.mxu0 %v1418
    %1684 = vmatpush.bf16.msra.mxu0 %v1410
    %1685 = vmatpush.bf16.msra.mxu0 %v1402
    %1686 = vmatpush.bf16.msra.mxu0 %v1394
    %1687 = vmatmul.bf16.gmra.mxu0 %v1553
    %v1688 = vpop.f32.mrf.mxu0
    %v1689 = vadd.f32 %v1665, %v1688
    %v1690 = vpop.f32.mrf.mxu0
    %v1691 = vadd.f32 %v1667, %v1690
    %1692 = vmatmul.bf16.gmra.mxu0 %v1555
    %v1693 = vpop.f32.mrf.mxu0
    %v1694 = vadd.f32 %v1670, %v1693
    %v1695 = vpop.f32.mrf.mxu0
    %v1696 = vadd.f32 %v1672, %v1695
    %1697 = vmatmul.bf16.gmra.mxu0 %v1557
    %v1698 = vpop.f32.mrf.mxu0
    %v1699 = vadd.f32 %v1675, %v1698
    %v1700 = vpop.f32.mrf.mxu0
    %v1701 = vadd.f32 %v1677, %v1700
    %1702 = vdwg.mxu0
    %1703 = vmatpush.bf16.msra.mxu0 %v1387
    %1704 = vmatpush.bf16.msra.mxu0 %v1379
    %1705 = vmatpush.bf16.msra.mxu0 %v1371
    %1706 = vmatpush.bf16.msra.mxu0 %v1363
    %1707 = vmatpush.bf16.msra.mxu0 %v1355
    %1708 = vmatpush.bf16.msra.mxu0 %v1347
    %1709 = vmatpush.bf16.msra.mxu0 %v1339
    %1710 = vmatpush.bf16.msra.mxu0 %v1331
    %1711 = vmatmul.bf16.gmra.mxu0 %v956
    %v1712 = vpop.f32.mrf.mxu0
    %v1713 = vadd.f32 0.0, %v1712
    %v1714 = vpop.f32.mrf.mxu0
    %v1715 = vadd.f32 0.0, %v1714
    %1716 = vmatmul.bf16.gmra.mxu0 %v971
    %v1717 = vpop.f32.mrf.mxu0
    %v1718 = vadd.f32 0.0, %v1717
    %v1719 = vpop.f32.mrf.mxu0
    %v1720 = vadd.f32 0.0, %v1719
    %1721 = vmatmul.bf16.gmra.mxu0 %v987
    %v1722 = vpop.f32.mrf.mxu0
    %v1723 = vadd.f32 0.0, %v1722
    %v1724 = vpop.f32.mrf.mxu0
    %v1725 = vadd.f32 0.0, %v1724
    %1726 = vdwg.mxu0
    %1727 = vmatpush.bf16.msra.mxu0 0
    %1728 = vmatpush.bf16.msra.mxu0 0
    %1729 = vmatpush.bf16.msra.mxu0 %v1435
    %1730 = vmatpush.bf16.msra.mxu0 %v1427
    %1731 = vmatpush.bf16.msra.mxu0 %v1419
    %1732 = vmatpush.bf16.msra.mxu0 %v1411
    %1733 = vmatpush.bf16.msra.mxu0 %v1403
    %1734 = vmatpush.bf16.msra.mxu0 %v1395
    %1735 = vmatmul.bf16.gmra.mxu0 %v1553
    %v1736 = vpop.f32.mrf.mxu0
    %v1737 = vadd.f32 %v1713, %v1736
    %v1738 = vpop.f32.mrf.mxu0
    %v1739 = vadd.f32 %v1715, %v1738
    %1740 = vmatmul.bf16.gmra.mxu0 %v1555
    %v1741 = vpop.f32.mrf.mxu0
    %v1742 = vadd.f32 %v1718, %v1741
    %v1743 = vpop.f32.mrf.mxu0
    %v1744 = vadd.f32 %v1720, %v1743
    %1745 = vmatmul.bf16.gmra.mxu0 %v1557
    %v1746 = vpop.f32.mrf.mxu0
    %v1747 = vadd.f32 %v1723, %v1746
    %v1748 = vpop.f32.mrf.mxu0
    %v1749 = vadd.f32 %v1725, %v1748
    %1750 = vdwg.mxu0
    %1751 = vmatpush.bf16.msra.mxu0 %v1388
    %1752 = vmatpush.bf16.msra.mxu0 %v1380
    %1753 = vmatpush.bf16.msra.mxu0 %v1372
    %1754 = vmatpush.bf16.msra.mxu0 %v1364
    %1755 = vmatpush.bf16.msra.mxu0 %v1356
    %1756 = vmatpush.bf16.msra.mxu0 %v1348
    %1757 = vmatpush.bf16.msra.mxu0 %v1340
    %1758 = vmatpush.bf16.msra.mxu0 %v1332
    %1759 = vmatmul.bf16.gmra.mxu0 %v956
    %v1760 = vpop.f32.mrf.mxu0
    %v1761 = vadd.f32 0.0, %v1760
    %v1762 = vpop.f32.mrf.mxu0
    %v1763 = vadd.f32 0.0, %v1762
    %1764 = vmatmul.bf16.gmra.mxu0 %v971
    %v1765 = vpop.f32.mrf.mxu0
    %v1766 = vadd.f32 0.0, %v1765
    %v1767 = vpop.f32.mrf.mxu0
    %v1768 = vadd.f32 0.0, %v1767
    %1769 = vmatmul.bf16.gmra.mxu0 %v987
    %v1770 = vpop.f32.mrf.mxu0
    %v1771 = vadd.f32 0.0, %v1770
    %v1772 = vpop.f32.mrf.mxu0
    %v1773 = vadd.f32 0.0, %v1772
    %1774 = vdwg.mxu0
    %1775 = vmatpush.bf16.msra.mxu0 0
    %1776 = vmatpush.bf16.msra.mxu0 0
    %1777 = vmatpush.bf16.msra.mxu0 %v1436
    %1778 = vmatpush.bf16.msra.mxu0 %v1428
    %1779 = vmatpush.bf16.msra.mxu0 %v1420
    %1780 = vmatpush.bf16.msra.mxu0 %v1412
    %1781 = vmatpush.bf16.msra.mxu0 %v1404
    %1782 = vmatpush.bf16.msra.mxu0 %v1396
    %1783 = vmatmul.bf16.gmra.mxu0 %v1553
    %v1784 = vpop.f32.mrf.mxu0
    %v1785 = vadd.f32 %v1761, %v1784
    %v1786 = vpop.f32.mrf.mxu0
    %v1787 = vadd.f32 %v1763, %v1786
    %1788 = vmatmul.bf16.gmra.mxu0 %v1555
    %v1789 = vpop.f32.mrf.mxu0
    %v1790 = vadd.f32 %v1766, %v1789
    %v1791 = vpop.f32.mrf.mxu0
    %v1792 = vadd.f32 %v1768, %v1791
    %1793 = vmatmul.bf16.gmra.mxu0 %v1557
    %v1794 = vpop.f32.mrf.mxu0
    %v1795 = vadd.f32 %v1771, %v1794
    %v1796 = vpop.f32.mrf.mxu0
    %v1797 = vadd.f32 %v1773, %v1796
    %1798 = vdwg.mxu0
    %1799 = vmatpush.bf16.msra.mxu0 %v1389
    %1800 = vmatpush.bf16.msra.mxu0 %v1381
    %1801 = vmatpush.bf16.msra.mxu0 %v1373
    %1802 = vmatpush.bf16.msra.mxu0 %v1365
    %1803 = vmatpush.bf16.msra.mxu0 %v1357
    %1804 = vmatpush.bf16.msra.mxu0 %v1349
    %1805 = vmatpush.bf16.msra.mxu0 %v1341
    %1806 = vmatpush.bf16.msra.mxu0 %v1333
    %1807 = vmatmul.bf16.gmra.mxu0 %v956
    %v1808 = vpop.f32.mrf.mxu0
    %v1809 = vadd.f32 0.0, %v1808
    %v1810 = vpop.f32.mrf.mxu0
    %v1811 = vadd.f32 0.0, %v1810
    %1812 = vmatmul.bf16.gmra.mxu0 %v971
    %v1813 = vpop.f32.mrf.mxu0
    %v1814 = vadd.f32 0.0, %v1813
    %v1815 = vpop.f32.mrf.mxu0
    %v1816 = vadd.f32 0.0, %v1815
    %1817 = vmatmul.bf16.gmra.mxu0 %v987
    %v1818 = vpop.f32.mrf.mxu0
    %v1819 = vadd.f32 0.0, %v1818
    %v1820 = vpop.f32.mrf.mxu0
    %v1821 = vadd.f32 0.0, %v1820
    %1822 = vdwg.mxu0
    %1823 = vmatpush.bf16.msra.mxu0 0
    %1824 = vmatpush.bf16.msra.mxu0 0
    %1825 = vmatpush.bf16.msra.mxu0 %v1437
    %1826 = vmatpush.bf16.msra.mxu0 %v1429
    %1827 = vmatpush.bf16.msra.mxu0 %v1421
    %1828 = vmatpush.bf16.msra.mxu0 %v1413
    %1829 = vmatpush.bf16.msra.mxu0 %v1405
    %1830 = vmatpush.bf16.msra.mxu0 %v1397
    %1831 = vmatmul.bf16.gmra.mxu0 %v1553
    %v1832 = vpop.f32.mrf.mxu0
    %v1833 = vadd.f32 %v1809, %v1832
    %v1834 = vpop.f32.mrf.mxu0
    %v1835 = vadd.f32 %v1811, %v1834
    %1836 = vmatmul.bf16.gmra.mxu0 %v1555
    %v1837 = vpop.f32.mrf.mxu0
    %v1838 = vadd.f32 %v1814, %v1837
    %v1839 = vpop.f32.mrf.mxu0
    %v1840 = vadd.f32 %v1816, %v1839
    %1841 = vmatmul.bf16.gmra.mxu0 %v1557
    %v1842 = vpop.f32.mrf.mxu0
    %v1843 = vadd.f32 %v1819, %v1842
    %v1844 = vpop.f32.mrf.mxu0
    %v1845 = vadd.f32 %v1821, %v1844
    %1846 = vdwg.mxu0
    %1847 = vmatpush.bf16.msra.mxu0 %v1390
    %1848 = vmatpush.bf16.msra.mxu0 %v1382
    %1849 = vmatpush.bf16.msra.mxu0 %v1374
    %1850 = vmatpush.bf16.msra.mxu0 %v1366
    %1851 = vmatpush.bf16.msra.mxu0 %v1358
    %1852 = vmatpush.bf16.msra.mxu0 %v1350
    %1853 = vmatpush.bf16.msra.mxu0 %v1342
    %1854 = vmatpush.bf16.msra.mxu0 %v1334
    %1855 = vmatmul.bf16.gmra.mxu0 %v956
    %v1856 = vpop.f32.mrf.mxu0
    %v1857 = vadd.f32 0.0, %v1856
    %v1858 = vpop.f32.mrf.mxu0
    %v1859 = vadd.f32 0.0, %v1858
    %1860 = vmatmul.bf16.gmra.mxu0 %v971
    %v1861 = vpop.f32.mrf.mxu0
    %v1862 = vadd.f32 0.0, %v1861
    %v1863 = vpop.f32.mrf.mxu0
    %v1864 = vadd.f32 0.0, %v1863
    %1865 = vmatmul.bf16.gmra.mxu0 %v987
    %v1866 = vpop.f32.mrf.mxu0
    %v1867 = vadd.f32 0.0, %v1866
    %v1868 = vpop.f32.mrf.mxu0
    %v1869 = vadd.f32 0.0, %v1868
    %1870 = vdwg.mxu0
    %1871 = vmatpush.bf16.msra.mxu0 0
    %1872 = vmatpush.bf16.msra.mxu0 0
    %1873 = vmatpush.bf16.msra.mxu0 %v1438
    %1874 = vmatpush.bf16.msra.mxu0 %v1430
    %1875 = vmatpush.bf16.msra.mxu0 %v1422
    %1876 = vmatpush.bf16.msra.mxu0 %v1414
    %1877 = vmatpush.bf16.msra.mxu0 %v1406
    %1878 = vmatpush.bf16.msra.mxu0 %v1398
    %1879 = vmatmul.bf16.gmra.mxu0 %v1553
    %v1880 = vpop.f32.mrf.mxu0
    %v1881 = vadd.f32 %v1857, %v1880
    %v1882 = vpop.f32.mrf.mxu0
    %v1883 = vadd.f32 %v1859, %v1882
    %1884 = vmatmul.bf16.gmra.mxu0 %v1555
    %v1885 = vpop.f32.mrf.mxu0
    %v1886 = vadd.f32 %v1862, %v1885
    %v1887 = vpop.f32.mrf.mxu0
    %v1888 = vadd.f32 %v1864, %v1887
    %1889 = vmatmul.bf16.gmra.mxu0 %v1557
    %v1890 = vpop.f32.mrf.mxu0
    %v1891 = vadd.f32 %v1867, %v1890
    %v1892 = vpop.f32.mrf.mxu0
    %v1893 = vadd.f32 %v1869, %v1892
    %1894 = vdwg.mxu0
    %1895 = vmatpush.bf16.msra.mxu0 %v1391
    %1896 = vmatpush.bf16.msra.mxu0 %v1383
    %1897 = vmatpush.bf16.msra.mxu0 %v1375
    %1898 = vmatpush.bf16.msra.mxu0 %v1367
    %1899 = vmatpush.bf16.msra.mxu0 %v1359
    %1900 = vmatpush.bf16.msra.mxu0 %v1351
    %1901 = vmatpush.bf16.msra.mxu0 %v1343
    %1902 = vmatpush.bf16.msra.mxu0 %v1335
    %1903 = vmatmul.bf16.gmra.mxu0 %v956
    %v1904 = vpop.f32.mrf.mxu0
    %v1905 = vadd.f32 0.0, %v1904
    %v1906 = vpop.f32.mrf.mxu0
    %v1907 = vadd.f32 0.0, %v1906
    %1908 = vmatmul.bf16.gmra.mxu0 %v971
    %v1909 = vpop.f32.mrf.mxu0
    %v1910 = vadd.f32 0.0, %v1909
    %v1911 = vpop.f32.mrf.mxu0
    %v1912 = vadd.f32 0.0, %v1911
    %1913 = vmatmul.bf16.gmra.mxu0 %v987
    %v1914 = vpop.f32.mrf.mxu0
    %v1915 = vadd.f32 0.0, %v1914
    %v1916 = vpop.f32.mrf.mxu0
    %v1917 = vadd.f32 0.0, %v1916
    %1918 = vdwg.mxu0
    %1919 = vmatpush.bf16.msra.mxu0 0
    %1920 = vmatpush.bf16.msra.mxu0 0
    %1921 = vmatpush.bf16.msra.mxu0 %v1439
    %1922 = vmatpush.bf16.msra.mxu0 %v1431
    %1923 = vmatpush.bf16.msra.mxu0 %v1423
    %1924 = vmatpush.bf16.msra.mxu0 %v1415
    %1925 = vmatpush.bf16.msra.mxu0 %v1407
    %1926 = vmatpush.bf16.msra.mxu0 %v1399
    %1927 = vmatmul.bf16.gmra.mxu0 %v1553
    %v1928 = vpop.f32.mrf.mxu0
    %v1929 = vadd.f32 %v1905, %v1928
    %v1930 = vpop.f32.mrf.mxu0
    %v1931 = vadd.f32 %v1907, %v1930
    %1932 = vmatmul.bf16.gmra.mxu0 %v1555
    %v1933 = vpop.f32.mrf.mxu0
    %v1934 = vadd.f32 %v1910, %v1933
    %v1935 = vpop.f32.mrf.mxu0
    %v1936 = vadd.f32 %v1912, %v1935
    %1937 = vmatmul.bf16.gmra.mxu0 %v1557
    %v1938 = vpop.f32.mrf.mxu0
    %v1939 = vadd.f32 %v1915, %v1938
    %v1940 = vpop.f32.mrf.mxu0
    %v1941 = vadd.f32 %v1917, %v1940
    %1942 = vdwg.mxu0
    %v1943 = vld [vmem:[%s2] sm:$0x1]
    %v1944 = vmax.f32 %v1593, %v1689
    %v1945 = vmax.f32 %v1641, %v1737
    %v1946 = vmax.f32 %v1595, %v1691
    %v1947 = vmax.f32 %v1643, %v1739
    %v1948 = vmax.f32 %v1598, %v1694
    %v1949 = vmax.f32 %v1646, %v1742
    %v1950 = vmax.f32 %v1600, %v1696
    %v1951 = vmax.f32 %v1648, %v1744
    %v1952 = vmax.f32 %v1603, %v1699
    %v1953 = vmax.f32 %v1651, %v1747
    %v1954 = vmax.f32 %v1605, %v1701
    %v1955 = vmax.f32 %v1653, %v1749
    %v1956 = vmax.f32 %v1944, %v1945
    %v1957 = vmax.f32 %v1946, %v1947
    %v1958 = vmax.f32 %v1948, %v1949
    %v1959 = vmax.f32 %v1950, %v1951
    %v1960 = vmax.f32 %v1952, %v1953
    %v1961 = vmax.f32 %v1954, %v1955
    %v1963 = vperm.slane %v1943, 0
    %v1965 = vadd.f32 %v1956, %v1963
    %v1966 = vadd.f32 %v1957, %v1963
    %v1967 = vadd.f32 %v1958, %v1963
    %v1968 = vadd.f32 %v1959, %v1963
    %v1969 = vadd.f32 %v1960, %v1963
    %v1970 = vadd.f32 %v1961, %v1963
    %v1971 = vmax.f32 %v1965, 0.0
    %v1972 = vmax.f32 %v1966, 0.0
    %v1973 = vmax.f32 %v1967, 0.0
    %v1974 = vmax.f32 %v1968, 0.0
    %v1975 = vmax.f32 %v1969, 0.0
    %v1976 = vmax.f32 %v1970, 0.0
    %v1977 = vpack.c.bf16 %v1971, %v1971
    %v1978 = vpack.c.bf16 %v1972, %v1972
    %v1979 = vpack.c.bf16 %v1973, %v1973
    %v1980 = vpack.c.bf16 %v1974, %v1974
    %v1981 = vpack.c.bf16 %v1975, %v1975
    %v1982 = vpack.c.bf16 %v1976, %v1976
    %v1989 = vrot.slane %v1977, 3
    %v1990 = vrot.slane %v1978, 3
    %v1991 = vrot.slane %v1979, 3
    %v1992 = vrot.slane %v1980, 3
    %v1993 = vrot.slane %v1981, 3
    %v1994 = vrot.slane %v1982, 3
    %v1997 = vsel %vm757, %v1977, %v1989
    %v1998 = vsel %vm760, %v1977, %v1989
    %v2000 = vrot.slane %v1998, 1
    %v2001 = vsel %vm764, %v1977, %v1989
    %v2003 = vrot.slane %v2001, 2
    %vm2004 = vcmask 1043459
    %v2005 = vsel %vm2004, %v1977, %v1989
    %v2007 = vrot.slane %v2005, 3
    %v2010 = vsel %vm757, %v1978, %v1990
    %v2011 = vsel %vm760, %v1978, %v1990
    %v2013 = vrot.slane %v2011, 1
    %v2014 = vsel %vm764, %v1978, %v1990
    %v2016 = vrot.slane %v2014, 2
    %v2017 = vsel %vm2004, %v1978, %v1990
    %v2019 = vrot.slane %v2017, 3
    %v2022 = vsel %vm757, %v1979, %v1991
    %v2023 = vsel %vm760, %v1979, %v1991
    %v2025 = vrot.slane %v2023, 1
    %v2026 = vsel %vm764, %v1979, %v1991
    %v2028 = vrot.slane %v2026, 2
    %v2029 = vsel %vm2004, %v1979, %v1991
    %v2031 = vrot.slane %v2029, 3
    %v2034 = vsel %vm757, %v1980, %v1992
    %v2035 = vsel %vm760, %v1980, %v1992
    %v2037 = vrot.slane %v2035, 1
    %v2038 = vsel %vm764, %v1980, %v1992
    %v2040 = vrot.slane %v2038, 2
    %v2041 = vsel %vm2004, %v1980, %v1992
    %v2043 = vrot.slane %v2041, 3
    %v2046 = vsel %vm757, %v1981, %v1993
    %v2047 = vsel %vm760, %v1981, %v1993
    %v2049 = vrot.slane %v2047, 1
    %v2050 = vsel %vm764, %v1981, %v1993
    %v2052 = vrot.slane %v2050, 2
    %v2053 = vsel %vm2004, %v1981, %v1993
    %v2055 = vrot.slane %v2053, 3
    %v2058 = vsel %vm757, %v1982, %v1994
    %v2059 = vsel %vm760, %v1982, %v1994
    %v2061 = vrot.slane %v2059, 1
    %v2062 = vsel %vm764, %v1982, %v1994
    %v2064 = vrot.slane %v2062, 2
    %v2065 = vsel %vm2004, %v1982, %v1994
    %v2067 = vrot.slane %v2065, 3
    %v2068 = vmax.f32 %v1785, %v1881
    %v2069 = vmax.f32 %v1833, %v1929
    %v2070 = vmax.f32 %v1787, %v1883
    %v2071 = vmax.f32 %v1835, %v1931
    %v2072 = vmax.f32 %v1790, %v1886
    %v2073 = vmax.f32 %v1838, %v1934
    %v2074 = vmax.f32 %v1792, %v1888
    %v2075 = vmax.f32 %v1840, %v1936
    %v2076 = vmax.f32 %v1795, %v1891
    %v2077 = vmax.f32 %v1843, %v1939
    %v2078 = vmax.f32 %v1797, %v1893
    %v2079 = vmax.f32 %v1845, %v1941
    %v2080 = vmax.f32 %v2068, %v2069
    %v2081 = vmax.f32 %v2070, %v2071
    %v2082 = vmax.f32 %v2072, %v2073
    %v2083 = vmax.f32 %v2074, %v2075
    %v2084 = vmax.f32 %v2076, %v2077
    %v2085 = vmax.f32 %v2078, %v2079
    %v2086 = vadd.f32 %v2080, %v1963
    %v2087 = vadd.f32 %v2081, %v1963
    %v2088 = vadd.f32 %v2082, %v1963
    %v2089 = vadd.f32 %v2083, %v1963
    %v2090 = vadd.f32 %v2084, %v1963
    %v2091 = vadd.f32 %v2085, %v1963
    %v2092 = vmax.f32 %v2086, 0.0
    %v2093 = vmax.f32 %v2087, 0.0
    %v2094 = vmax.f32 %v2088, 0.0
    %v2095 = vmax.f32 %v2089, 0.0
    %v2096 = vmax.f32 %v2090, 0.0
    %v2097 = vmax.f32 %v2091, 0.0
    %v2098 = vpack.c.bf16 %v2092, %v2092
    %v2099 = vpack.c.bf16 %v2093, %v2093
    %v2100 = vpack.c.bf16 %v2094, %v2094
    %v2101 = vpack.c.bf16 %v2095, %v2095
    %v2102 = vpack.c.bf16 %v2096, %v2096
    %v2103 = vpack.c.bf16 %v2097, %v2097
    %v2110 = vrot.slane %v2098, 3
    %v2111 = vrot.slane %v2099, 3
    %v2112 = vrot.slane %v2100, 3
    %v2113 = vrot.slane %v2101, 3
    %v2114 = vrot.slane %v2102, 3
    %v2115 = vrot.slane %v2103, 3
    %v2118 = vsel %vm757, %v2098, %v2110
    %v2119 = vsel %vm760, %v2098, %v2110
    %v2121 = vrot.slane %v2119, 1
    %v2122 = vsel %vm764, %v2098, %v2110
    %v2124 = vrot.slane %v2122, 2
    %v2125 = vsel %vm2004, %v2098, %v2110
    %v2127 = vrot.slane %v2125, 3
    %v2130 = vsel %vm757, %v2099, %v2111
    %v2131 = vsel %vm760, %v2099, %v2111
    %v2133 = vrot.slane %v2131, 1
    %v2134 = vsel %vm764, %v2099, %v2111
    %v2136 = vrot.slane %v2134, 2
    %v2137 = vsel %vm2004, %v2099, %v2111
    %v2139 = vrot.slane %v2137, 3
    %v2142 = vsel %vm757, %v2100, %v2112
    %v2143 = vsel %vm760, %v2100, %v2112
    %v2145 = vrot.slane %v2143, 1
    %v2146 = vsel %vm764, %v2100, %v2112
    %v2148 = vrot.slane %v2146, 2
    %v2149 = vsel %vm2004, %v2100, %v2112
    %v2151 = vrot.slane %v2149, 3
    %v2154 = vsel %vm757, %v2101, %v2113
    %v2155 = vsel %vm760, %v2101, %v2113
    %v2157 = vrot.slane %v2155, 1
    %v2158 = vsel %vm764, %v2101, %v2113
    %v2160 = vrot.slane %v2158, 2
    %v2161 = vsel %vm2004, %v2101, %v2113
    %v2163 = vrot.slane %v2161, 3
    %v2166 = vsel %vm757, %v2102, %v2114
    %v2167 = vsel %vm760, %v2102, %v2114
    %v2169 = vrot.slane %v2167, 1
    %v2170 = vsel %vm764, %v2102, %v2114
    %v2172 = vrot.slane %v2170, 2
    %v2173 = vsel %vm2004, %v2102, %v2114
    %v2175 = vrot.slane %v2173, 3
    %v2178 = vsel %vm757, %v2103, %v2115
    %v2179 = vsel %vm760, %v2103, %v2115
    %v2181 = vrot.slane %v2179, 1
    %v2182 = vsel %vm764, %v2103, %v2115
    %v2184 = vrot.slane %v2182, 2
    %v2185 = vsel %vm2004, %v2103, %v2115
    %v2187 = vrot.slane %v2185, 3
    %2188 = vst [vmem:[#allocation1] ss:$9 sm:$0xff] %v1997
    %s2190 = scalar_lea.vmem [#allocation1], 1
    %2191 = vst [vmem:[%s2190] ss:$9 sm:$0xff] %v2000
    %v2192 = vld [vmem:[#allocation1] sm:$0xff]
    %2194 = vst [vmem:[#allocation1] ss:$9 sm:$0xff] %v2007
    %2195 = vst [vmem:[%s2190] ss:$9 sm:$0xff] %v2010
    %v2196 = vld [vmem:[#allocation1] sm:$0xff]
    %2198 = vst [vmem:[#allocation1] ss:$9 sm:$0xff] %v2016
    %2200 = vst [vmem:[%s2190] ss:$9 sm:$0xff] %v2019
    %v2201 = vld [vmem:[#allocation1] sm:$0xff]
    %2203 = vst [vmem:[#allocation1] ss:$9 sm:$0xff] %v2025
    %2205 = vst [vmem:[%s2190] ss:$9 sm:$0xff] %v2028
    %v2206 = vld [vmem:[#allocation1] sm:$0xff]
    %2207 = vst [vmem:[#allocation1] ss:$9 sm:$0xff] %v2034
    %2209 = vst [vmem:[%s2190] ss:$9 sm:$0xff] %v2037
    %v2210 = vld [vmem:[#allocation1] sm:$0xff]
    %2212 = vst [vmem:[#allocation1] ss:$9 sm:$0xff] %v2043
    %2213 = vst [vmem:[%s2190] ss:$9 sm:$0xff] %v2046
    %v2214 = vld [vmem:[#allocation1] sm:$0xff]
    %2216 = vst [vmem:[#allocation1] ss:$9 sm:$0xff] %v2052
    %2218 = vst [vmem:[%s2190] ss:$9 sm:$0xff] %v2055
    %v2219 = vld [vmem:[#allocation1] sm:$0xff]
    %2221 = vst [vmem:[#allocation1] ss:$9 sm:$0xff] %v2061
    %2223 = vst [vmem:[%s2190] ss:$9 sm:$0xff] %v2064
    %v2224 = vld [vmem:[#allocation1] sm:$0xff]
    %2225 = vst [vmem:[#allocation1] ss:$9 sm:$0xff] %v2118
    %s2227 = scalar_lea.vmem [#allocation1], 1
    %2228 = vst [vmem:[%s2227] ss:$9 sm:$0xff] %v2121
    %v2229 = vld [vmem:[#allocation1] sm:$0xff]
    %2232 = vst [vmem:[#allocation1] ss:$9 sm:$0xff] %v2127
    %2233 = vst [vmem:[%s2227] ss:$9 sm:$0xff] %v2130
    %v2234 = vld [vmem:[#allocation1] sm:$0xff]
    %2237 = vst [vmem:[#allocation1] ss:$9 sm:$0xff] %v2136
    %2239 = vst [vmem:[%s2227] ss:$9 sm:$0xff] %v2139
    %v2240 = vld [vmem:[#allocation1] sm:$0xff]
    %2243 = vst [vmem:[#allocation1] ss:$9 sm:$0xff] %v2145
    %2245 = vst [vmem:[%s2227] ss:$9 sm:$0xff] %v2148
    %v2246 = vld [vmem:[#allocation1] sm:$0xff]
    %2248 = vst [vmem:[#allocation1] ss:$9 sm:$0xff] %v2154
    %2250 = vst [vmem:[%s2227] ss:$9 sm:$0xff] %v2157
    %v2251 = vld [vmem:[#allocation1] sm:$0xff]
    %2254 = vst [vmem:[#allocation1] ss:$9 sm:$0xff] %v2163
    %2255 = vst [vmem:[%s2227] ss:$9 sm:$0xff] %v2166
    %v2256 = vld [vmem:[#allocation1] sm:$0xff]
    %2259 = vst [vmem:[#allocation1] ss:$9 sm:$0xff] %v2172
    %2261 = vst [vmem:[%s2227] ss:$9 sm:$0xff] %v2175
    %v2262 = vld [vmem:[#allocation1] sm:$0xff]
    %2265 = vst [vmem:[#allocation1] ss:$9 sm:$0xff] %v2181
    %2267 = vst [vmem:[%s2227] ss:$9 sm:$0xff] %v2184
    %v2268 = vld [vmem:[#allocation1] sm:$0xff]
    %2270 = vst [vmem:[#allocation1] ss:$9 sm:$0xff] %v1997
    %s2271 = scalar_lea.vmem [#allocation1], 1
    %2272 = vst [vmem:[%s2271] ss:$9 sm:$0xff] %v2000
    %s2274 = scalar_lea.vmem [#allocation1], 2
    %2275 = vst [vmem:[%s2274] ss:$9 sm:$0xff] %v2003
    %v2276 = vld [vmem:[#allocation1] sm:$0xff]
    %2277 = vst [vmem:[#allocation1] ss:$9 sm:$0xff] %v2007
    %2278 = vst [vmem:[%s2271] ss:$9 sm:$0xff] %v2010
    %2280 = vst [vmem:[%s2274] ss:$9 sm:$0xff] %v2013
    %v2281 = vld [vmem:[#allocation1] sm:$0xff]
    %2282 = vst [vmem:[#allocation1] ss:$9 sm:$0xff] %v2016
    %2283 = vst [vmem:[%s2271] ss:$9 sm:$0xff] %v2019
    %2284 = vst [vmem:[%s2274] ss:$9 sm:$0xff] %v2022
    %v2285 = vld [vmem:[#allocation1] sm:$0xff]
    %2286 = vst [vmem:[#allocation1] ss:$9 sm:$0xff] %v2025
    %2287 = vst [vmem:[%s2271] ss:$9 sm:$0xff] %v2028
    %2289 = vst [vmem:[%s2274] ss:$9 sm:$0xff] %v2031
    %v2290 = vld [vmem:[#allocation1] sm:$0xff]
    %2291 = vst [vmem:[#allocation1] ss:$9 sm:$0xff] %v2034
    %2292 = vst [vmem:[%s2271] ss:$9 sm:$0xff] %v2037
    %2294 = vst [vmem:[%s2274] ss:$9 sm:$0xff] %v2040
    %v2295 = vld [vmem:[#allocation1] sm:$0xff]
    %2296 = vst [vmem:[#allocation1] ss:$9 sm:$0xff] %v2043
    %2297 = vst [vmem:[%s2271] ss:$9 sm:$0xff] %v2046
    %2299 = vst [vmem:[%s2274] ss:$9 sm:$0xff] %v2049
    %v2300 = vld [vmem:[#allocation1] sm:$0xff]
    %2301 = vst [vmem:[#allocation1] ss:$9 sm:$0xff] %v2052
    %2302 = vst [vmem:[%s2271] ss:$9 sm:$0xff] %v2055
    %2303 = vst [vmem:[%s2274] ss:$9 sm:$0xff] %v2058
    %v2304 = vld [vmem:[#allocation1] sm:$0xff]
    %2305 = vst [vmem:[#allocation1] ss:$9 sm:$0xff] %v2061
    %2306 = vst [vmem:[%s2271] ss:$9 sm:$0xff] %v2064
    %2308 = vst [vmem:[%s2274] ss:$9 sm:$0xff] %v2067
    %v2309 = vld [vmem:[#allocation1] sm:$0xff]
    %v2310 = vshrl.u32 %v2276, 16
    %v2312 = vshll.u32 %v2276, 16
    %v2314 = vrot.slane %v2312, 1
    %v2315 = vor.u32 %v2310, %v2314
    %v2316 = vshrl.u32 %v2281, 16
    %v2318 = vshll.u32 %v2281, 16
    %v2320 = vrot.slane %v2318, 1
    %v2321 = vor.u32 %v2316, %v2320
    %v2322 = vshrl.u32 %v2285, 16
    %v2324 = vshll.u32 %v2285, 16
    %v2326 = vrot.slane %v2324, 1
    %v2327 = vor.u32 %v2322, %v2326
    %v2328 = vshrl.u32 %v2290, 16
    %v2330 = vshll.u32 %v2290, 16
    %v2332 = vrot.slane %v2330, 1
    %v2333 = vor.u32 %v2328, %v2332
    %v2334 = vshrl.u32 %v2295, 16
    %v2336 = vshll.u32 %v2295, 16
    %v2338 = vrot.slane %v2336, 1
    %v2339 = vor.u32 %v2334, %v2338
    %v2340 = vshrl.u32 %v2300, 16
    %v2342 = vshll.u32 %v2300, 16
    %v2344 = vrot.slane %v2342, 1
    %v2345 = vor.u32 %v2340, %v2344
    %v2346 = vshrl.u32 %v2304, 16
    %v2348 = vshll.u32 %v2304, 16
    %v2350 = vrot.slane %v2348, 1
    %v2351 = vor.u32 %v2346, %v2350
    %v2352 = vshrl.u32 %v2309, 16
    %v2354 = vshll.u32 %v2309, 16
    %v2356 = vrot.slane %v2354, 1
    %v2357 = vor.u32 %v2352, %v2356
    %2358 = vst [vmem:[#allocation1] ss:$9 sm:$0xff] %v2118
    %s2359 = scalar_lea.vmem [#allocation1], 1
    %2360 = vst [vmem:[%s2359] ss:$9 sm:$0xff] %v2121
    %s2362 = scalar_lea.vmem [#allocation1], 2
    %2363 = vst [vmem:[%s2362] ss:$9 sm:$0xff] %v2124
    %v2364 = vld [vmem:[#allocation1] sm:$0xff]
    %2365 = vst [vmem:[#allocation1] ss:$9 sm:$0xff] %v2127
    %2366 = vst [vmem:[%s2359] ss:$9 sm:$0xff] %v2130
    %2368 = vst [vmem:[%s2362] ss:$9 sm:$0xff] %v2133
    %v2369 = vld [vmem:[#allocation1] sm:$0xff]
    %2370 = vst [vmem:[#allocation1] ss:$9 sm:$0xff] %v2136
    %2371 = vst [vmem:[%s2359] ss:$9 sm:$0xff] %v2139
    %2372 = vst [vmem:[%s2362] ss:$9 sm:$0xff] %v2142
    %v2373 = vld [vmem:[#allocation1] sm:$0xff]
    %2374 = vst [vmem:[#allocation1] ss:$9 sm:$0xff] %v2145
    %2375 = vst [vmem:[%s2359] ss:$9 sm:$0xff] %v2148
    %2377 = vst [vmem:[%s2362] ss:$9 sm:$0xff] %v2151
    %v2378 = vld [vmem:[#allocation1] sm:$0xff]
    %2379 = vst [vmem:[#allocation1] ss:$9 sm:$0xff] %v2154
    %2380 = vst [vmem:[%s2359] ss:$9 sm:$0xff] %v2157
    %2382 = vst [vmem:[%s2362] ss:$9 sm:$0xff] %v2160
    %v2383 = vld [vmem:[#allocation1] sm:$0xff]
    %2384 = vst [vmem:[#allocation1] ss:$9 sm:$0xff] %v2163
    %2385 = vst [vmem:[%s2359] ss:$9 sm:$0xff] %v2166
    %2387 = vst [vmem:[%s2362] ss:$9 sm:$0xff] %v2169
    %v2388 = vld [vmem:[#allocation1] sm:$0xff]
    %2389 = vst [vmem:[#allocation1] ss:$9 sm:$0xff] %v2172
    %2390 = vst [vmem:[%s2359] ss:$9 sm:$0xff] %v2175
    %2391 = vst [vmem:[%s2362] ss:$9 sm:$0xff] %v2178
    %v2392 = vld [vmem:[#allocation1] sm:$0xff]
    %2393 = vst [vmem:[#allocation1] ss:$9 sm:$0xff] %v2181
    %2394 = vst [vmem:[%s2359] ss:$9 sm:$0xff] %v2184
    %2396 = vst [vmem:[%s2362] ss:$9 sm:$0xff] %v2187
    %v2397 = vld [vmem:[#allocation1] sm:$0xff]
    %v2398 = vshrl.u32 %v2364, 16
    %v2400 = vshll.u32 %v2364, 16
    %v2402 = vrot.slane %v2400, 1
    %v2403 = vor.u32 %v2398, %v2402
    %v2404 = vshrl.u32 %v2369, 16
    %v2406 = vshll.u32 %v2369, 16
    %v2408 = vrot.slane %v2406, 1
    %v2409 = vor.u32 %v2404, %v2408
    %v2410 = vshrl.u32 %v2373, 16
    %v2412 = vshll.u32 %v2373, 16
    %v2414 = vrot.slane %v2412, 1
    %v2415 = vor.u32 %v2410, %v2414
    %v2416 = vshrl.u32 %v2378, 16
    %v2418 = vshll.u32 %v2378, 16
    %v2420 = vrot.slane %v2418, 1
    %v2421 = vor.u32 %v2416, %v2420
    %v2422 = vshrl.u32 %v2383, 16
    %v2424 = vshll.u32 %v2383, 16
    %v2426 = vrot.slane %v2424, 1
    %v2427 = vor.u32 %v2422, %v2426
    %v2428 = vshrl.u32 %v2388, 16
    %v2430 = vshll.u32 %v2388, 16
    %v2432 = vrot.slane %v2430, 1
    %v2433 = vor.u32 %v2428, %v2432
    %v2434 = vshrl.u32 %v2392, 16
    %v2436 = vshll.u32 %v2392, 16
    %v2438 = vrot.slane %v2436, 1
    %v2439 = vor.u32 %v2434, %v2438
    %v2440 = vshrl.u32 %v2397, 16
    %v2442 = vshll.u32 %v2397, 16
    %v2444 = vrot.slane %v2442, 1
    %v2445 = vor.u32 %v2440, %v2444
    %2446 = vst [vmem:[#allocation1] ss:$9 sm:$0xff] %v2000
    %s2447 = scalar_lea.vmem [#allocation1], 1
    %2448 = vst [vmem:[%s2447] ss:$9 sm:$0xff] %v2003
    %v2449 = vld [vmem:[#allocation1] sm:$0xff]
    %2450 = vst [vmem:[#allocation1] ss:$9 sm:$0xff] %v2010
    %2451 = vst [vmem:[%s2447] ss:$9 sm:$0xff] %v2013
    %v2452 = vld [vmem:[#allocation1] sm:$0xff]
    %2453 = vst [vmem:[#allocation1] ss:$9 sm:$0xff] %v2019
    %2454 = vst [vmem:[%s2447] ss:$9 sm:$0xff] %v2022
    %v2455 = vld [vmem:[#allocation1] sm:$0xff]
    %2456 = vst [vmem:[#allocation1] ss:$9 sm:$0xff] %v2028
    %2457 = vst [vmem:[%s2447] ss:$9 sm:$0xff] %v2031
    %v2458 = vld [vmem:[#allocation1] sm:$0xff]
    %2459 = vst [vmem:[#allocation1] ss:$9 sm:$0xff] %v2037
    %2460 = vst [vmem:[%s2447] ss:$9 sm:$0xff] %v2040
    %v2461 = vld [vmem:[#allocation1] sm:$0xff]
    %2462 = vst [vmem:[#allocation1] ss:$9 sm:$0xff] %v2046
    %2463 = vst [vmem:[%s2447] ss:$9 sm:$0xff] %v2049
    %v2464 = vld [vmem:[#allocation1] sm:$0xff]
    %2465 = vst [vmem:[#allocation1] ss:$9 sm:$0xff] %v2055
    %2466 = vst [vmem:[%s2447] ss:$9 sm:$0xff] %v2058
    %v2467 = vld [vmem:[#allocation1] sm:$0xff]
    %2468 = vst [vmem:[#allocation1] ss:$9 sm:$0xff] %v2064
    %2469 = vst [vmem:[%s2447] ss:$9 sm:$0xff] %v2067
    %v2470 = vld [vmem:[#allocation1] sm:$0xff]
    %2471 = vst [vmem:[#allocation1] ss:$9 sm:$0xff] %v2121
    %s2472 = scalar_lea.vmem [#allocation1], 1
    %2473 = vst [vmem:[%s2472] ss:$9 sm:$0xff] %v2124
    %v2474 = vld [vmem:[#allocation1] sm:$0xff]
    %2476 = vst [vmem:[#allocation1] ss:$9 sm:$0xff] %v2130
    %2477 = vst [vmem:[%s2472] ss:$9 sm:$0xff] %v2133
    %v2478 = vld [vmem:[#allocation1] sm:$0xff]
    %2480 = vst [vmem:[#allocation1] ss:$9 sm:$0xff] %v2139
    %2481 = vst [vmem:[%s2472] ss:$9 sm:$0xff] %v2142
    %v2482 = vld [vmem:[#allocation1] sm:$0xff]
    %2484 = vst [vmem:[#allocation1] ss:$9 sm:$0xff] %v2148
    %2485 = vst [vmem:[%s2472] ss:$9 sm:$0xff] %v2151
    %v2486 = vld [vmem:[#allocation1] sm:$0xff]
    %2488 = vst [vmem:[#allocation1] ss:$9 sm:$0xff] %v2157
    %2489 = vst [vmem:[%s2472] ss:$9 sm:$0xff] %v2160
    %v2490 = vld [vmem:[#allocation1] sm:$0xff]
    %2492 = vst [vmem:[#allocation1] ss:$9 sm:$0xff] %v2166
    %2493 = vst [vmem:[%s2472] ss:$9 sm:$0xff] %v2169
    %v2494 = vld [vmem:[#allocation1] sm:$0xff]
    %2496 = vst [vmem:[#allocation1] ss:$9 sm:$0xff] %v2175
    %2497 = vst [vmem:[%s2472] ss:$9 sm:$0xff] %v2178
    %v2498 = vld [vmem:[#allocation1] sm:$0xff]
    %2500 = vst [vmem:[#allocation1] ss:$9 sm:$0xff] %v2184
    %2501 = vst [vmem:[%s2472] ss:$9 sm:$0xff] %v2187
    %v2502 = vld [vmem:[#allocation1] sm:$0xff]
    %v2504 = vrot.slane %v2229, 6
    %v2505 = vrot.slane %v2315, 4
    %v2506 = vrot.slane %v2403, 2
    %v2507 = vrot.slane %v2474, 6
    %v2508 = vrot.slane %v2234, 6
    %v2509 = vrot.slane %v2321, 4
    %v2510 = vrot.slane %v2409, 2
    %v2511 = vrot.slane %v2478, 6
    %v2512 = vrot.slane %v2240, 6
    %v2513 = vrot.slane %v2327, 4
    %v2514 = vrot.slane %v2415, 2
    %v2515 = vrot.slane %v2482, 6
    %v2516 = vrot.slane %v2246, 6
    %v2517 = vrot.slane %v2333, 4
    %v2518 = vrot.slane %v2421, 2
    %v2519 = vrot.slane %v2486, 6
    %v2520 = vrot.slane %v2251, 6
    %v2521 = vrot.slane %v2339, 4
    %v2522 = vrot.slane %v2427, 2
    %v2523 = vrot.slane %v2490, 6
    %v2524 = vrot.slane %v2256, 6
    %v2525 = vrot.slane %v2345, 4
    %v2526 = vrot.slane %v2433, 2
    %v2527 = vrot.slane %v2494, 6
    %v2528 = vrot.slane %v2262, 6
    %v2529 = vrot.slane %v2351, 4
    %v2530 = vrot.slane %v2439, 2
    %v2531 = vrot.slane %v2498, 6
    %v2532 = vrot.slane %v2268, 6
    %v2533 = vrot.slane %v2357, 4
    %v2534 = vrot.slane %v2445, 2
    %v2535 = vrot.slane %v2502, 6
    %vm2536 = vcmask 1041408
    %v2538 = vsel %vm2536, %v2192, %v2504
    %vm2539 = vcmask 1045508
    %v2542 = vsel %vm2539, %v2505, %v2506
    %vm2543 = vcmask 1043456
    %v2544 = vsel %vm2543, %v2538, %v2542
    %v2546 = vsel %vm2536, %v2449, %v2507
    %v2548 = vsel %vm2536, %v2196, %v2508
    %v2551 = vsel %vm2539, %v2509, %v2510
    %v2552 = vsel %vm2543, %v2548, %v2551
    %v2554 = vsel %vm2536, %v2452, %v2511
    %v2556 = vsel %vm2536, %v2201, %v2512
    %v2559 = vsel %vm2539, %v2513, %v2514
    %v2560 = vsel %vm2543, %v2556, %v2559
    %v2562 = vsel %vm2536, %v2455, %v2515
    %v2564 = vsel %vm2536, %v2206, %v2516
    %v2567 = vsel %vm2539, %v2517, %v2518
    %v2568 = vsel %vm2543, %v2564, %v2567
    %v2570 = vsel %vm2536, %v2458, %v2519
    %v2572 = vsel %vm2536, %v2210, %v2520
    %v2575 = vsel %vm2539, %v2521, %v2522
    %v2576 = vsel %vm2543, %v2572, %v2575
    %v2578 = vsel %vm2536, %v2461, %v2523
    %v2580 = vsel %vm2536, %v2214, %v2524
    %v2583 = vsel %vm2539, %v2525, %v2526
    %v2584 = vsel %vm2543, %v2580, %v2583
    %v2586 = vsel %vm2536, %v2464, %v2527
    %v2588 = vsel %vm2536, %v2219, %v2528
    %v2591 = vsel %vm2539, %v2529, %v2530
    %v2592 = vsel %vm2543, %v2588, %v2591
    %v2594 = vsel %vm2536, %v2467, %v2531
    %v2596 = vsel %vm2536, %v2224, %v2532
    %v2599 = vsel %vm2539, %v2533, %v2534
    %v2600 = vsel %vm2543, %v2596, %v2599
    %v2602 = vsel %vm2536, %v2470, %v2535
    %v2603 = vld [vmem:[#allocation4] sm:$0xff]
    %v2604 = vld [vmem:[#allocation4 + $0x8] sm:$0xff]
    %v2605 = vld [vmem:[#allocation4 + $0x10] sm:$0xff]
    %v2606 = vld [vmem:[#allocation4 + $0x18] sm:$0xff]
    %v2607 = vld [vmem:[#allocation4 + $0x20] sm:$0xff]
    %v2608 = vld [vmem:[#allocation4 + $0x28] sm:$0xff]
    %v2609 = vld [vmem:[#allocation4 + $0x30] sm:$0xff]
    %v2610 = vld [vmem:[#allocation4 + $0x38] sm:$0xff]
    %v2611 = vld [vmem:[#allocation4 + $0x40] sm:$0xff]
    %v2612 = vld [vmem:[#allocation4 + $0x48] sm:$0xff]
    %v2613 = vld [vmem:[#allocation4 + $0x50] sm:$0xff]
    %v2614 = vld [vmem:[#allocation4 + $0x58] sm:$0xff]
    %v2615 = vld [vmem:[#allocation4 + $0x60] sm:$0xff]
    %v2616 = vld [vmem:[#allocation4 + $0x68] sm:$0xff]
    %v2617 = vld [vmem:[#allocation4 + $0x70] sm:$0xff]
    %v2618 = vld [vmem:[#allocation4 + $0x78] sm:$0xff]
    %v2619 = vld [vmem:[#allocation4 + $0x80] sm:$0xff]
    %v2620 = vld [vmem:[#allocation4 + $0x88] sm:$0xff]
    %v2621 = vld [vmem:[#allocation4 + $0x90] sm:$0xff]
    %v2622 = vld [vmem:[#allocation4 + $0x98] sm:$0xff]
    %v2623 = vld [vmem:[#allocation4 + $0xa0] sm:$0xff]
    %v2624 = vld [vmem:[#allocation4 + $0xa8] sm:$0xff]
    %v2625 = vld [vmem:[#allocation4 + $0xb0] sm:$0xff]
    %v2626 = vld [vmem:[#allocation4 + $0xb8] sm:$0xff]
    %v2627 = vld [vmem:[#allocation4 + $0xc0] sm:$0xff]
    %v2628 = vld [vmem:[#allocation4 + $0xc8] sm:$0xff]
    %v2629 = vld [vmem:[#allocation4 + $0xd0] sm:$0xff]
    %v2630 = vld [vmem:[#allocation4 + $0xd8] sm:$0xff]
    %v2631 = vld [vmem:[#allocation4 + $0xe0] sm:$0xff]
    %v2632 = vld [vmem:[#allocation4 + $0xe8] sm:$0xff]
    %v2633 = vld [vmem:[#allocation4 + $0xf0] sm:$0xff]
    %v2634 = vld [vmem:[#allocation4 + $0xf8] sm:$0xff]
    %v2635 = vld [vmem:[#allocation4 + $0x100] sm:$0xff]
    %v2636 = vld [vmem:[#allocation4 + $0x108] sm:$0xff]
    %v2637 = vld [vmem:[#allocation4 + $0x110] sm:$0xff]
    %v2638 = vld [vmem:[#allocation4 + $0x118] sm:$0xff]
    %v2639 = vld [vmem:[#allocation4 + $0x120] sm:$0xff]
    %v2640 = vld [vmem:[#allocation4 + $0x128] sm:$0xff]
    %v2641 = vld [vmem:[#allocation4 + $0x130] sm:$0xff]
    %v2642 = vld [vmem:[#allocation4 + $0x138] sm:$0xff]
    %v2643 = vld [vmem:[#allocation4 + $0x140] sm:$0xff]
    %v2644 = vld [vmem:[#allocation4 + $0x148] sm:$0xff]
    %v2645 = vld [vmem:[#allocation4 + $0x150] sm:$0xff]
    %v2646 = vld [vmem:[#allocation4 + $0x158] sm:$0xff]
    %v2647 = vld [vmem:[#allocation4 + $0x160] sm:$0xff]
    %v2648 = vld [vmem:[#allocation4 + $0x168] sm:$0xff]
    %v2649 = vld [vmem:[#allocation4 + $0x170] sm:$0xff]
    %v2650 = vld [vmem:[#allocation4 + $0x178] sm:$0xff]
    %v2651 = vld [vmem:[#allocation4 + $0x180] sm:$0xff]
    %v2652 = vld [vmem:[#allocation4 + $0x188] sm:$0xff]
    %v2653 = vld [vmem:[#allocation4 + $0x190] sm:$0xff]
    %v2654 = vld [vmem:[#allocation4 + $0x198] sm:$0xff]
    %v2655 = vld [vmem:[#allocation4 + $0x1a0] sm:$0xff]
    %v2656 = vld [vmem:[#allocation4 + $0x1a8] sm:$0xff]
    %v2657 = vld [vmem:[#allocation4 + $0x1b0] sm:$0xff]
    %v2658 = vld [vmem:[#allocation4 + $0x1b8] sm:$0xff]
    %v2659 = vld [vmem:[#allocation4 + $0x1c0] sm:$0xff]
    %v2660 = vld [vmem:[#allocation4 + $0x1c8] sm:$0xff]
    %v2661 = vld [vmem:[#allocation4 + $0x1d0] sm:$0xff]
    %v2662 = vld [vmem:[#allocation4 + $0x1d8] sm:$0xff]
    %v2663 = vld [vmem:[#allocation4 + $0x1e0] sm:$0xff]
    %v2664 = vld [vmem:[#allocation4 + $0x1e8] sm:$0xff]
    %v2665 = vld [vmem:[#allocation4 + $0x1f0] sm:$0xff]
    %v2666 = vld [vmem:[#allocation4 + $0x1f8] sm:$0xff]
    %v2667 = vld [vmem:[#allocation4 + $0x200] sm:$0xff]
    %v2668 = vld [vmem:[#allocation4 + $0x208] sm:$0xff]
    %v2669 = vld [vmem:[#allocation4 + $0x210] sm:$0xff]
    %v2670 = vld [vmem:[#allocation4 + $0x218] sm:$0xff]
    %v2671 = vld [vmem:[#allocation4 + $0x220] sm:$0xff]
    %v2672 = vld [vmem:[#allocation4 + $0x228] sm:$0xff]
    %v2673 = vld [vmem:[#allocation4 + $0x230] sm:$0xff]
    %v2674 = vld [vmem:[#allocation4 + $0x238] sm:$0xff]
    %v2675 = vld [vmem:[#allocation4 + $0x240] sm:$0xff]
    %v2676 = vld [vmem:[#allocation4 + $0x248] sm:$0xff]
    %v2677 = vld [vmem:[#allocation4 + $0x250] sm:$0xff]
    %v2678 = vld [vmem:[#allocation4 + $0x258] sm:$0xff]
    %v2679 = vld [vmem:[#allocation4 + $0x260] sm:$0xff]
    %v2680 = vld [vmem:[#allocation4 + $0x268] sm:$0xff]
    %v2681 = vld [vmem:[#allocation4 + $0x270] sm:$0xff]
    %v2682 = vld [vmem:[#allocation4 + $0x278] sm:$0xff]
    %v2683 = vld [vmem:[#allocation4 + $0x280] sm:$0xff]
    %v2684 = vld [vmem:[#allocation4 + $0x288] sm:$0xff]
    %v2685 = vld [vmem:[#allocation4 + $0x290] sm:$0xff]
    %v2686 = vld [vmem:[#allocation4 + $0x298] sm:$0xff]
    %v2687 = vld [vmem:[#allocation4 + $0x2a0] sm:$0xff]
    %v2688 = vld [vmem:[#allocation4 + $0x2a8] sm:$0xff]
    %v2689 = vld [vmem:[#allocation4 + $0x2b0] sm:$0xff]
    %v2690 = vld [vmem:[#allocation4 + $0x2b8] sm:$0xff]
    %v2691 = vld [vmem:[#allocation4 + $0x2c0] sm:$0xff]
    %v2692 = vld [vmem:[#allocation4 + $0x2c8] sm:$0xff]
    %v2693 = vld [vmem:[#allocation4 + $0x2d0] sm:$0xff]
    %v2694 = vld [vmem:[#allocation4 + $0x2d8] sm:$0xff]
    %v2695 = vld [vmem:[#allocation4 + $0x2e0] sm:$0xff]
    %v2696 = vld [vmem:[#allocation4 + $0x2e8] sm:$0xff]
    %v2697 = vld [vmem:[#allocation4 + $0x2f0] sm:$0xff]
    %v2698 = vld [vmem:[#allocation4 + $0x2f8] sm:$0xff]
    %v2699 = vld [vmem:[#allocation4 + $0x300] sm:$0xff]
    %v2700 = vld [vmem:[#allocation4 + $0x308] sm:$0xff]
    %v2701 = vld [vmem:[#allocation4 + $0x310] sm:$0xff]
    %v2702 = vld [vmem:[#allocation4 + $0x318] sm:$0xff]
    %v2703 = vld [vmem:[#allocation4 + $0x320] sm:$0xff]
    %v2704 = vld [vmem:[#allocation4 + $0x328] sm:$0xff]
    %v2705 = vld [vmem:[#allocation4 + $0x330] sm:$0xff]
    %v2706 = vld [vmem:[#allocation4 + $0x338] sm:$0xff]
    %v2707 = vld [vmem:[#allocation4 + $0x340] sm:$0xff]
    %v2708 = vld [vmem:[#allocation4 + $0x348] sm:$0xff]
    %v2709 = vld [vmem:[#allocation4 + $0x350] sm:$0xff]
    %v2710 = vld [vmem:[#allocation4 + $0x358] sm:$0xff]
    %v2711 = vld [vmem:[#allocation4 + $0x360] sm:$0xff]
    %v2712 = vld [vmem:[#allocation4 + $0x368] sm:$0xff]
    %v2713 = vld [vmem:[#allocation4 + $0x370] sm:$0xff]
    %v2714 = vld [vmem:[#allocation4 + $0x378] sm:$0xff]
    %v2715 = vld [vmem:[#allocation4 + $0x380] sm:$0xff]
    %v2716 = vld [vmem:[#allocation4 + $0x388] sm:$0xff]
    %v2717 = vld [vmem:[#allocation4 + $0x390] sm:$0xff]
    %v2718 = vld [vmem:[#allocation4 + $0x398] sm:$0xff]
    %v2719 = vld [vmem:[#allocation4 + $0x3a0] sm:$0xff]
    %v2720 = vld [vmem:[#allocation4 + $0x3a8] sm:$0xff]
    %v2721 = vld [vmem:[#allocation4 + $0x3b0] sm:$0xff]
    %v2722 = vld [vmem:[#allocation4 + $0x3b8] sm:$0xff]
    %v2723 = vld [vmem:[#allocation4 + $0x3c0] sm:$0xff]
    %v2724 = vld [vmem:[#allocation4 + $0x3c8] sm:$0xff]
    %v2725 = vld [vmem:[#allocation4 + $0x3d0] sm:$0xff]
    %v2726 = vld [vmem:[#allocation4 + $0x3d8] sm:$0xff]
    %v2727 = vld [vmem:[#allocation4 + $0x3e0] sm:$0xff]
    %v2728 = vld [vmem:[#allocation4 + $0x3e8] sm:$0xff]
    %v2729 = vld [vmem:[#allocation4 + $0x3f0] sm:$0xff]
    %v2730 = vld [vmem:[#allocation4 + $0x3f8] sm:$0xff]
    %v2731 = vld [vmem:[#allocation4 + $0x400] sm:$0xff]
    %v2732 = vld [vmem:[#allocation4 + $0x408] sm:$0xff]
    %v2733 = vld [vmem:[#allocation4 + $0x410] sm:$0xff]
    %v2734 = vld [vmem:[#allocation4 + $0x418] sm:$0xff]
    %v2735 = vld [vmem:[#allocation4 + $0x420] sm:$0xff]
    %v2736 = vld [vmem:[#allocation4 + $0x428] sm:$0xff]
    %v2737 = vld [vmem:[#allocation4 + $0x430] sm:$0xff]
    %v2738 = vld [vmem:[#allocation4 + $0x438] sm:$0xff]
    %v2739 = vld [vmem:[#allocation4 + $0x440] sm:$0xff]
    %v2740 = vld [vmem:[#allocation4 + $0x448] sm:$0xff]
    %v2741 = vld [vmem:[#allocation4 + $0x450] sm:$0xff]
    %v2742 = vld [vmem:[#allocation4 + $0x458] sm:$0xff]
    %v2743 = vld [vmem:[#allocation4 + $0x460] sm:$0xff]
    %v2744 = vld [vmem:[#allocation4 + $0x468] sm:$0xff]
    %v2745 = vld [vmem:[#allocation4 + $0x470] sm:$0xff]
    %v2746 = vld [vmem:[#allocation4 + $0x478] sm:$0xff]
    %v2747 = vld [vmem:[#allocation4 + $0x480] sm:$0xff]
    %v2748 = vld [vmem:[#allocation4 + $0x488] sm:$0xff]
    %v2749 = vld [vmem:[#allocation4 + $0x490] sm:$0xff]
    %v2750 = vld [vmem:[#allocation4 + $0x498] sm:$0xff]
    %v2751 = vld [vmem:[#allocation4 + $0x4a0] sm:$0xff]
    %v2752 = vld [vmem:[#allocation4 + $0x4a8] sm:$0xff]
    %v2753 = vld [vmem:[#allocation4 + $0x4b0] sm:$0xff]
    %v2754 = vld [vmem:[#allocation4 + $0x4b8] sm:$0xff]
    %v2755 = vld [vmem:[#allocation4 + $0x4c0] sm:$0xff]
    %v2756 = vld [vmem:[#allocation4 + $0x4c8] sm:$0xff]
    %v2757 = vld [vmem:[#allocation4 + $0x4d0] sm:$0xff]
    %v2758 = vld [vmem:[#allocation4 + $0x4d8] sm:$0xff]
    %v2759 = vld [vmem:[#allocation4 + $0x4e0] sm:$0xff]
    %v2760 = vld [vmem:[#allocation4 + $0x4e8] sm:$0xff]
    %v2761 = vld [vmem:[#allocation4 + $0x4f0] sm:$0xff]
    %v2762 = vld [vmem:[#allocation4 + $0x4f8] sm:$0xff]
    %v2763 = vld [vmem:[#allocation4 + $0x500] sm:$0xff]
    %v2764 = vld [vmem:[#allocation4 + $0x508] sm:$0xff]
    %v2765 = vld [vmem:[#allocation4 + $0x510] sm:$0xff]
    %v2766 = vld [vmem:[#allocation4 + $0x518] sm:$0xff]
    %v2767 = vld [vmem:[#allocation4 + $0x520] sm:$0xff]
    %v2768 = vld [vmem:[#allocation4 + $0x528] sm:$0xff]
    %v2769 = vld [vmem:[#allocation4 + $0x530] sm:$0xff]
    %v2770 = vld [vmem:[#allocation4 + $0x538] sm:$0xff]
    %v2771 = vld [vmem:[#allocation4 + $0x540] sm:$0xff]
    %v2772 = vld [vmem:[#allocation4 + $0x548] sm:$0xff]
    %v2773 = vld [vmem:[#allocation4 + $0x550] sm:$0xff]
    %v2774 = vld [vmem:[#allocation4 + $0x558] sm:$0xff]
    %v2775 = vld [vmem:[#allocation4 + $0x560] sm:$0xff]
    %v2776 = vld [vmem:[#allocation4 + $0x568] sm:$0xff]
    %v2777 = vld [vmem:[#allocation4 + $0x570] sm:$0xff]
    %v2778 = vld [vmem:[#allocation4 + $0x578] sm:$0xff]
    %v2779 = vld [vmem:[#allocation4 + $0x580] sm:$0xff]
    %v2780 = vld [vmem:[#allocation4 + $0x588] sm:$0xff]
    %v2781 = vld [vmem:[#allocation4 + $0x590] sm:$0xff]
    %v2782 = vld [vmem:[#allocation4 + $0x598] sm:$0xff]
    %v2783 = vld [vmem:[#allocation4 + $0x5a0] sm:$0xff]
    %v2784 = vld [vmem:[#allocation4 + $0x5a8] sm:$0xff]
    %v2785 = vld [vmem:[#allocation4 + $0x5b0] sm:$0xff]
    %v2786 = vld [vmem:[#allocation4 + $0x5b8] sm:$0xff]
    %v2787 = vld [vmem:[#allocation4 + $0x5c0] sm:$0xff]
    %v2788 = vld [vmem:[#allocation4 + $0x5c8] sm:$0xff]
    %v2789 = vld [vmem:[#allocation4 + $0x5d0] sm:$0xff]
    %v2790 = vld [vmem:[#allocation4 + $0x5d8] sm:$0xff]
    %v2791 = vld [vmem:[#allocation4 + $0x5e0] sm:$0xff]
    %v2792 = vld [vmem:[#allocation4 + $0x5e8] sm:$0xff]
    %v2793 = vld [vmem:[#allocation4 + $0x5f0] sm:$0xff]
    %v2794 = vld [vmem:[#allocation4 + $0x5f8] sm:$0xff]
    %2795 = vst [vmem:[#allocation1] ss:$4 sm:$0xff] %v2544
    %s2796 = scalar_lea.vmem [#allocation1], 1
    %2797 = vst [vmem:[%s2796] ss:$4 sm:$0xff] %v2552
    %s2798 = scalar_lea.vmem [#allocation1], 2
    %2799 = vst [vmem:[%s2798] ss:$4 sm:$0xff] %v2560
    %s2800 = scalar_lea.vmem [#allocation1], 3
    %2801 = vst [vmem:[%s2800] ss:$4 sm:$0xff] %v2568
    %s2802 = scalar_lea.vmem [#allocation1], 32
    %2803 = vst [vmem:[%s2802] ss:$4 sm:$0xff] %v2546
    %s2804 = scalar_lea.vmem [#allocation1], 33
    %2805 = vst [vmem:[%s2804] ss:$4 sm:$0xff] %v2554
    %s2806 = scalar_lea.vmem [#allocation1], 34
    %2807 = vst [vmem:[%s2806] ss:$4 sm:$0xff] %v2562
    %s2808 = scalar_lea.vmem [#allocation1], 35
    %2809 = vst [vmem:[%s2808] ss:$4 sm:$0xff] %v2570
    %v2810 = vld.sshfl [vmem:[#allocation1] sm:$0xff pattern:$0x73625140]
    %v2811 = vld.sshfl [vmem:[#allocation1 + $0x8] sm:$0xff pattern:$0x73625140]
    %v2812 = vld.sshfl [vmem:[#allocation1 + $0x10] sm:$0xff pattern:$0x73625140]
    %v2813 = vld.sshfl [vmem:[#allocation1 + $0x18] sm:$0xff pattern:$0x73625140]
    %v2814 = vld.sshfl [vmem:[#allocation1 + $0x20] sm:$0xff pattern:$0x73625140]
    %v2815 = vld.sshfl [vmem:[#allocation1 + $0x28] sm:$0xff pattern:$0x73625140]
    %2816 = vst [vmem:[#allocation1] ss:$4 sm:$0xff] %v2576
    %2817 = vst [vmem:[%s2796] ss:$4 sm:$0xff] %v2584
    %2818 = vst [vmem:[%s2798] ss:$4 sm:$0xff] %v2592
    %2819 = vst [vmem:[%s2800] ss:$4 sm:$0xff] %v2600
    %2820 = vst [vmem:[%s2802] ss:$4 sm:$0xff] %v2578
    %2821 = vst [vmem:[%s2804] ss:$4 sm:$0xff] %v2586
    %2822 = vst [vmem:[%s2806] ss:$4 sm:$0xff] %v2594
    %2823 = vst [vmem:[%s2808] ss:$4 sm:$0xff] %v2602
    %v2824 = vld.sshfl [vmem:[#allocation1] sm:$0xff pattern:$0x73625140]
    %v2825 = vld.sshfl [vmem:[#allocation1 + $0x8] sm:$0xff pattern:$0x73625140]
    %v2826 = vld.sshfl [vmem:[#allocation1 + $0x10] sm:$0xff pattern:$0x73625140]
    %v2827 = vld.sshfl [vmem:[#allocation1 + $0x18] sm:$0xff pattern:$0x73625140]
    %v2828 = vld.sshfl [vmem:[#allocation1 + $0x20] sm:$0xff pattern:$0x73625140]
    %v2829 = vld.sshfl [vmem:[#allocation1 + $0x28] sm:$0xff pattern:$0x73625140]
    %v3034 = vunpack.c.l.b16 %v2603
    %v3035 = vunpack.c.h.b16 %v2603
    %v3036 = vunpack.c.l.b16 %v2604
    %v3037 = vunpack.c.h.b16 %v2604
    %v3038 = vunpack.c.l.b16 %v2605
    %v3039 = vunpack.c.h.b16 %v2605
    %v3040 = vunpack.c.l.b16 %v2606
    %v3041 = vunpack.c.h.b16 %v2606
    %v3042 = vunpack.c.l.b16 %v2607
    %v3043 = vunpack.c.h.b16 %v2607
    %v3044 = vunpack.c.l.b16 %v2608
    %v3045 = vunpack.c.h.b16 %v2608
    %v3046 = vunpack.c.l.b16 %v2609
    %v3047 = vunpack.c.h.b16 %v2609
    %v3048 = vunpack.c.l.b16 %v2610
    %v3049 = vunpack.c.h.b16 %v2610
    %v3050 = vunpack.c.l.b16 %v2611
    %v3051 = vunpack.c.h.b16 %v2611
    %v3052 = vunpack.c.l.b16 %v2612
    %v3053 = vunpack.c.h.b16 %v2612
    %v3054 = vunpack.c.l.b16 %v2613
    %v3055 = vunpack.c.h.b16 %v2613
    %v3056 = vunpack.c.l.b16 %v2614
    %v3057 = vunpack.c.h.b16 %v2614
    %v3058 = vunpack.c.l.b16 %v2615
    %v3059 = vunpack.c.h.b16 %v2615
    %v3060 = vunpack.c.l.b16 %v2616
    %v3061 = vunpack.c.h.b16 %v2616
    %v3062 = vunpack.c.l.b16 %v2617
    %v3063 = vunpack.c.h.b16 %v2617
    %v3064 = vunpack.c.l.b16 %v2618
    %v3065 = vunpack.c.h.b16 %v2618
    %v3066 = vunpack.c.l.b16 %v2619
    %v3067 = vunpack.c.h.b16 %v2619
    %v3068 = vunpack.c.l.b16 %v2620
    %v3069 = vunpack.c.h.b16 %v2620
    %v3070 = vunpack.c.l.b16 %v2621
    %v3071 = vunpack.c.h.b16 %v2621
    %v3072 = vunpack.c.l.b16 %v2622
    %v3073 = vunpack.c.h.b16 %v2622
    %v3074 = vunpack.c.l.b16 %v2623
    %v3075 = vunpack.c.h.b16 %v2623
    %v3076 = vunpack.c.l.b16 %v2624
    %v3077 = vunpack.c.h.b16 %v2624
    %v3078 = vunpack.c.l.b16 %v2625
    %v3079 = vunpack.c.h.b16 %v2625
    %v3080 = vunpack.c.l.b16 %v2626
    %v3081 = vunpack.c.h.b16 %v2626
    %v3082 = vunpack.c.l.b16 %v2627
    %v3083 = vunpack.c.h.b16 %v2627
    %v3084 = vunpack.c.l.b16 %v2628
    %v3085 = vunpack.c.h.b16 %v2628
    %v3086 = vunpack.c.l.b16 %v2629
    %v3087 = vunpack.c.h.b16 %v2629
    %v3088 = vunpack.c.l.b16 %v2630
    %v3089 = vunpack.c.h.b16 %v2630
    %v3090 = vunpack.c.l.b16 %v2631
    %v3091 = vunpack.c.h.b16 %v2631
    %v3092 = vunpack.c.l.b16 %v2632
    %v3093 = vunpack.c.h.b16 %v2632
    %v3094 = vunpack.c.l.b16 %v2633
    %v3095 = vunpack.c.h.b16 %v2633
    %v3096 = vunpack.c.l.b16 %v2634
    %v3097 = vunpack.c.h.b16 %v2634
    %v3098 = vunpack.c.l.b16 %v2635
    %v3099 = vunpack.c.h.b16 %v2635
    %v3100 = vunpack.c.l.b16 %v2636
    %v3101 = vunpack.c.h.b16 %v2636
    %v3102 = vunpack.c.l.b16 %v2637
    %v3103 = vunpack.c.h.b16 %v2637
    %v3104 = vunpack.c.l.b16 %v2638
    %v3105 = vunpack.c.h.b16 %v2638
    %v3106 = vunpack.c.l.b16 %v2639
    %v3107 = vunpack.c.h.b16 %v2639
    %v3108 = vunpack.c.l.b16 %v2640
    %v3109 = vunpack.c.h.b16 %v2640
    %v3110 = vunpack.c.l.b16 %v2641
    %v3111 = vunpack.c.h.b16 %v2641
    %v3112 = vunpack.c.l.b16 %v2642
    %v3113 = vunpack.c.h.b16 %v2642
    %v3114 = vunpack.c.l.b16 %v2643
    %v3115 = vunpack.c.h.b16 %v2643
    %v3116 = vunpack.c.l.b16 %v2644
    %v3117 = vunpack.c.h.b16 %v2644
    %v3118 = vunpack.c.l.b16 %v2645
    %v3119 = vunpack.c.h.b16 %v2645
    %v3120 = vunpack.c.l.b16 %v2646
    %v3121 = vunpack.c.h.b16 %v2646
    %v3122 = vunpack.c.l.b16 %v2647
    %v3123 = vunpack.c.h.b16 %v2647
    %v3124 = vunpack.c.l.b16 %v2648
    %v3125 = vunpack.c.h.b16 %v2648
    %v3126 = vunpack.c.l.b16 %v2649
    %v3127 = vunpack.c.h.b16 %v2649
    %v3128 = vunpack.c.l.b16 %v2650
    %v3129 = vunpack.c.h.b16 %v2650
    %v3130 = vunpack.c.l.b16 %v2651
    %v3131 = vunpack.c.h.b16 %v2651
    %v3132 = vunpack.c.l.b16 %v2652
    %v3133 = vunpack.c.h.b16 %v2652
    %v3134 = vunpack.c.l.b16 %v2653
    %v3135 = vunpack.c.h.b16 %v2653
    %v3136 = vunpack.c.l.b16 %v2654
    %v3137 = vunpack.c.h.b16 %v2654
    %v3138 = vunpack.c.l.b16 %v2655
    %v3139 = vunpack.c.h.b16 %v2655
    %v3140 = vunpack.c.l.b16 %v2656
    %v3141 = vunpack.c.h.b16 %v2656
    %v3142 = vunpack.c.l.b16 %v2657
    %v3143 = vunpack.c.h.b16 %v2657
    %v3144 = vunpack.c.l.b16 %v2658
    %v3145 = vunpack.c.h.b16 %v2658
    %v3146 = vunpack.c.l.b16 %v2659
    %v3147 = vunpack.c.h.b16 %v2659
    %v3148 = vunpack.c.l.b16 %v2660
    %v3149 = vunpack.c.h.b16 %v2660
    %v3150 = vunpack.c.l.b16 %v2661
    %v3151 = vunpack.c.h.b16 %v2661
    %v3152 = vunpack.c.l.b16 %v2662
    %v3153 = vunpack.c.h.b16 %v2662
    %v3154 = vunpack.c.l.b16 %v2663
    %v3155 = vunpack.c.h.b16 %v2663
    %v3156 = vunpack.c.l.b16 %v2664
    %v3157 = vunpack.c.h.b16 %v2664
    %v3158 = vunpack.c.l.b16 %v2665
    %v3159 = vunpack.c.h.b16 %v2665
    %v3160 = vunpack.c.l.b16 %v2666
    %v3161 = vunpack.c.h.b16 %v2666
    %v3162 = vunpack.c.l.b16 %v2667
    %v3163 = vunpack.c.h.b16 %v2667
    %v3164 = vunpack.c.l.b16 %v2668
    %v3165 = vunpack.c.h.b16 %v2668
    %v3166 = vunpack.c.l.b16 %v2669
    %v3167 = vunpack.c.h.b16 %v2669
    %v3168 = vunpack.c.l.b16 %v2670
    %v3169 = vunpack.c.h.b16 %v2670
    %v3170 = vunpack.c.l.b16 %v2671
    %v3171 = vunpack.c.h.b16 %v2671
    %v3172 = vunpack.c.l.b16 %v2672
    %v3173 = vunpack.c.h.b16 %v2672
    %v3174 = vunpack.c.l.b16 %v2673
    %v3175 = vunpack.c.h.b16 %v2673
    %v3176 = vunpack.c.l.b16 %v2674
    %v3177 = vunpack.c.h.b16 %v2674
    %v3178 = vunpack.c.l.b16 %v2675
    %v3179 = vunpack.c.h.b16 %v2675
    %v3180 = vunpack.c.l.b16 %v2676
    %v3181 = vunpack.c.h.b16 %v2676
    %v3182 = vunpack.c.l.b16 %v2677
    %v3183 = vunpack.c.h.b16 %v2677
    %v3184 = vunpack.c.l.b16 %v2678
    %v3185 = vunpack.c.h.b16 %v2678
    %v3186 = vunpack.c.l.b16 %v2679
    %v3187 = vunpack.c.h.b16 %v2679
    %v3188 = vunpack.c.l.b16 %v2680
    %v3189 = vunpack.c.h.b16 %v2680
    %v3190 = vunpack.c.l.b16 %v2681
    %v3191 = vunpack.c.h.b16 %v2681
    %v3192 = vunpack.c.l.b16 %v2682
    %v3193 = vunpack.c.h.b16 %v2682
    %v3194 = vunpack.c.l.b16 %v2683
    %v3195 = vunpack.c.h.b16 %v2683
    %v3196 = vunpack.c.l.b16 %v2684
    %v3197 = vunpack.c.h.b16 %v2684
    %v3198 = vunpack.c.l.b16 %v2685
    %v3199 = vunpack.c.h.b16 %v2685
    %v3200 = vunpack.c.l.b16 %v2686
    %v3201 = vunpack.c.h.b16 %v2686
    %v3202 = vunpack.c.l.b16 %v2687
    %v3203 = vunpack.c.h.b16 %v2687
    %v3204 = vunpack.c.l.b16 %v2688
    %v3205 = vunpack.c.h.b16 %v2688
    %v3206 = vunpack.c.l.b16 %v2689
    %v3207 = vunpack.c.h.b16 %v2689
    %v3208 = vunpack.c.l.b16 %v2690
    %v3209 = vunpack.c.h.b16 %v2690
    %v3210 = vunpack.c.l.b16 %v2691
    %v3211 = vunpack.c.h.b16 %v2691
    %v3212 = vunpack.c.l.b16 %v2692
    %v3213 = vunpack.c.h.b16 %v2692
    %v3214 = vunpack.c.l.b16 %v2693
    %v3215 = vunpack.c.h.b16 %v2693
    %v3216 = vunpack.c.l.b16 %v2694
    %v3217 = vunpack.c.h.b16 %v2694
    %v3218 = vunpack.c.l.b16 %v2695
    %v3219 = vunpack.c.h.b16 %v2695
    %v3220 = vunpack.c.l.b16 %v2696
    %v3221 = vunpack.c.h.b16 %v2696
    %v3222 = vunpack.c.l.b16 %v2697
    %v3223 = vunpack.c.h.b16 %v2697
    %v3224 = vunpack.c.l.b16 %v2698
    %v3225 = vunpack.c.h.b16 %v2698
    %v3226 = vunpack.c.l.b16 %v2699
    %v3227 = vunpack.c.h.b16 %v2699
    %v3228 = vunpack.c.l.b16 %v2700
    %v3229 = vunpack.c.h.b16 %v2700
    %v3230 = vunpack.c.l.b16 %v2701
    %v3231 = vunpack.c.h.b16 %v2701
    %v3232 = vunpack.c.l.b16 %v2702
    %v3233 = vunpack.c.h.b16 %v2702
    %v3234 = vunpack.c.l.b16 %v2703
    %v3235 = vunpack.c.h.b16 %v2703
    %v3236 = vunpack.c.l.b16 %v2704
    %v3237 = vunpack.c.h.b16 %v2704
    %v3238 = vunpack.c.l.b16 %v2705
    %v3239 = vunpack.c.h.b16 %v2705
    %v3240 = vunpack.c.l.b16 %v2706
    %v3241 = vunpack.c.h.b16 %v2706
    %v3242 = vunpack.c.l.b16 %v2707
    %v3243 = vunpack.c.h.b16 %v2707
    %v3244 = vunpack.c.l.b16 %v2708
    %v3245 = vunpack.c.h.b16 %v2708
    %v3246 = vunpack.c.l.b16 %v2709
    %v3247 = vunpack.c.h.b16 %v2709
    %v3248 = vunpack.c.l.b16 %v2710
    %v3249 = vunpack.c.h.b16 %v2710
    %v3250 = vunpack.c.l.b16 %v2711
    %v3251 = vunpack.c.h.b16 %v2711
    %v3252 = vunpack.c.l.b16 %v2712
    %v3253 = vunpack.c.h.b16 %v2712
    %v3254 = vunpack.c.l.b16 %v2713
    %v3255 = vunpack.c.h.b16 %v2713
    %v3256 = vunpack.c.l.b16 %v2714
    %v3257 = vunpack.c.h.b16 %v2714
    %v3258 = vunpack.c.l.b16 %v2715
    %v3259 = vunpack.c.h.b16 %v2715
    %v3260 = vunpack.c.l.b16 %v2716
    %v3261 = vunpack.c.h.b16 %v2716
    %v3262 = vunpack.c.l.b16 %v2717
    %v3263 = vunpack.c.h.b16 %v2717
    %v3264 = vunpack.c.l.b16 %v2718
    %v3265 = vunpack.c.h.b16 %v2718
    %v3266 = vunpack.c.l.b16 %v2719
    %v3267 = vunpack.c.h.b16 %v2719
    %v3268 = vunpack.c.l.b16 %v2720
    %v3269 = vunpack.c.h.b16 %v2720
    %v3270 = vunpack.c.l.b16 %v2721
    %v3271 = vunpack.c.h.b16 %v2721
    %v3272 = vunpack.c.l.b16 %v2722
    %v3273 = vunpack.c.h.b16 %v2722
    %v3274 = vunpack.c.l.b16 %v2723
    %v3275 = vunpack.c.h.b16 %v2723
    %v3276 = vunpack.c.l.b16 %v2724
    %v3277 = vunpack.c.h.b16 %v2724
    %v3278 = vunpack.c.l.b16 %v2725
    %v3279 = vunpack.c.h.b16 %v2725
    %v3280 = vunpack.c.l.b16 %v2726
    %v3281 = vunpack.c.h.b16 %v2726
    %v3282 = vunpack.c.l.b16 %v2727
    %v3283 = vunpack.c.h.b16 %v2727
    %v3284 = vunpack.c.l.b16 %v2728
    %v3285 = vunpack.c.h.b16 %v2728
    %v3286 = vunpack.c.l.b16 %v2729
    %v3287 = vunpack.c.h.b16 %v2729
    %v3288 = vunpack.c.l.b16 %v2730
    %v3289 = vunpack.c.h.b16 %v2730
    %v3290 = vunpack.c.l.b16 %v2731
    %v3291 = vunpack.c.h.b16 %v2731
    %v3292 = vunpack.c.l.b16 %v2732
    %v3293 = vunpack.c.h.b16 %v2732
    %v3294 = vunpack.c.l.b16 %v2733
    %v3295 = vunpack.c.h.b16 %v2733
    %v3296 = vunpack.c.l.b16 %v2734
    %v3297 = vunpack.c.h.b16 %v2734
    %v3298 = vunpack.c.l.b16 %v2735
    %v3299 = vunpack.c.h.b16 %v2735
    %v3300 = vunpack.c.l.b16 %v2736
    %v3301 = vunpack.c.h.b16 %v2736
    %v3302 = vunpack.c.l.b16 %v2737
    %v3303 = vunpack.c.h.b16 %v2737
    %v3304 = vunpack.c.l.b16 %v2738
    %v3305 = vunpack.c.h.b16 %v2738
    %v3306 = vunpack.c.l.b16 %v2739
    %v3307 = vunpack.c.h.b16 %v2739
    %v3308 = vunpack.c.l.b16 %v2740
    %v3309 = vunpack.c.h.b16 %v2740
    %v3310 = vunpack.c.l.b16 %v2741
    %v3311 = vunpack.c.h.b16 %v2741
    %v3312 = vunpack.c.l.b16 %v2742
    %v3313 = vunpack.c.h.b16 %v2742
    %v3314 = vunpack.c.l.b16 %v2743
    %v3315 = vunpack.c.h.b16 %v2743
    %v3316 = vunpack.c.l.b16 %v2744
    %v3317 = vunpack.c.h.b16 %v2744
    %v3318 = vunpack.c.l.b16 %v2745
    %v3319 = vunpack.c.h.b16 %v2745
    %v3320 = vunpack.c.l.b16 %v2746
    %v3321 = vunpack.c.h.b16 %v2746
    %v3322 = vunpack.c.l.b16 %v2747
    %v3323 = vunpack.c.h.b16 %v2747
    %v3324 = vunpack.c.l.b16 %v2748
    %v3325 = vunpack.c.h.b16 %v2748
    %v3326 = vunpack.c.l.b16 %v2749
    %v3327 = vunpack.c.h.b16 %v2749
    %v3328 = vunpack.c.l.b16 %v2750
    %v3329 = vunpack.c.h.b16 %v2750
    %v3330 = vunpack.c.l.b16 %v2751
    %v3331 = vunpack.c.h.b16 %v2751
    %v3332 = vunpack.c.l.b16 %v2752
    %v3333 = vunpack.c.h.b16 %v2752
    %v3334 = vunpack.c.l.b16 %v2753
    %v3335 = vunpack.c.h.b16 %v2753
    %v3336 = vunpack.c.l.b16 %v2754
    %v3337 = vunpack.c.h.b16 %v2754
    %v3338 = vunpack.c.l.b16 %v2755
    %v3339 = vunpack.c.h.b16 %v2755
    %v3340 = vunpack.c.l.b16 %v2756
    %v3341 = vunpack.c.h.b16 %v2756
    %v3342 = vunpack.c.l.b16 %v2757
    %v3343 = vunpack.c.h.b16 %v2757
    %v3344 = vunpack.c.l.b16 %v2758
    %v3345 = vunpack.c.h.b16 %v2758
    %v3346 = vunpack.c.l.b16 %v2759
    %v3347 = vunpack.c.h.b16 %v2759
    %v3348 = vunpack.c.l.b16 %v2760
    %v3349 = vunpack.c.h.b16 %v2760
    %v3350 = vunpack.c.l.b16 %v2761
    %v3351 = vunpack.c.h.b16 %v2761
    %v3352 = vunpack.c.l.b16 %v2762
    %v3353 = vunpack.c.h.b16 %v2762
    %v3354 = vunpack.c.l.b16 %v2763
    %v3355 = vunpack.c.h.b16 %v2763
    %v3356 = vunpack.c.l.b16 %v2764
    %v3357 = vunpack.c.h.b16 %v2764
    %v3358 = vunpack.c.l.b16 %v2765
    %v3359 = vunpack.c.h.b16 %v2765
    %v3360 = vunpack.c.l.b16 %v2766
    %v3361 = vunpack.c.h.b16 %v2766
    %v3362 = vunpack.c.l.b16 %v2767
    %v3363 = vunpack.c.h.b16 %v2767
    %v3364 = vunpack.c.l.b16 %v2768
    %v3365 = vunpack.c.h.b16 %v2768
    %v3366 = vunpack.c.l.b16 %v2769
    %v3367 = vunpack.c.h.b16 %v2769
    %v3368 = vunpack.c.l.b16 %v2770
    %v3369 = vunpack.c.h.b16 %v2770
    %v3370 = vunpack.c.l.b16 %v2771
    %v3371 = vunpack.c.h.b16 %v2771
    %v3372 = vunpack.c.l.b16 %v2772
    %v3373 = vunpack.c.h.b16 %v2772
    %v3374 = vunpack.c.l.b16 %v2773
    %v3375 = vunpack.c.h.b16 %v2773
    %v3376 = vunpack.c.l.b16 %v2774
    %v3377 = vunpack.c.h.b16 %v2774
    %v3378 = vunpack.c.l.b16 %v2775
    %v3379 = vunpack.c.h.b16 %v2775
    %v3380 = vunpack.c.l.b16 %v2776
    %v3381 = vunpack.c.h.b16 %v2776
    %v3382 = vunpack.c.l.b16 %v2777
    %v3383 = vunpack.c.h.b16 %v2777
    %v3384 = vunpack.c.l.b16 %v2778
    %v3385 = vunpack.c.h.b16 %v2778
    %v3386 = vunpack.c.l.b16 %v2779
    %v3387 = vunpack.c.h.b16 %v2779
    %v3388 = vunpack.c.l.b16 %v2780
    %v3389 = vunpack.c.h.b16 %v2780
    %v3390 = vunpack.c.l.b16 %v2781
    %v3391 = vunpack.c.h.b16 %v2781
    %v3392 = vunpack.c.l.b16 %v2782
    %v3393 = vunpack.c.h.b16 %v2782
    %v3394 = vunpack.c.l.b16 %v2783
    %v3395 = vunpack.c.h.b16 %v2783
    %v3396 = vunpack.c.l.b16 %v2784
    %v3397 = vunpack.c.h.b16 %v2784
    %v3398 = vunpack.c.l.b16 %v2785
    %v3399 = vunpack.c.h.b16 %v2785
    %v3400 = vunpack.c.l.b16 %v2786
    %v3401 = vunpack.c.h.b16 %v2786
    %v3402 = vunpack.c.l.b16 %v2787
    %v3403 = vunpack.c.h.b16 %v2787
    %v3404 = vunpack.c.l.b16 %v2788
    %v3405 = vunpack.c.h.b16 %v2788
    %v3406 = vunpack.c.l.b16 %v2789
    %v3407 = vunpack.c.h.b16 %v2789
    %v3408 = vunpack.c.l.b16 %v2790
    %v3409 = vunpack.c.h.b16 %v2790
    %v3410 = vunpack.c.l.b16 %v2791
    %v3411 = vunpack.c.h.b16 %v2791
    %v3412 = vunpack.c.l.b16 %v2792
    %v3413 = vunpack.c.h.b16 %v2792
    %v3414 = vunpack.c.l.b16 %v2793
    %v3415 = vunpack.c.h.b16 %v2793
    %v3416 = vunpack.c.l.b16 %v2794
    %v3417 = vunpack.c.h.b16 %v2794
    %v3418 = vpack.c.b16 %v3038, %v3034
    %v3419 = vpack.c.b16 %v3039, %v3035
    %v3420 = vpack.c.b16 %v3040, %v3036
    %v3421 = vpack.c.b16 %v3041, %v3037
    %v3422 = vpack.c.b16 %v3046, %v3042
    %v3423 = vpack.c.b16 %v3047, %v3043
    %v3424 = vpack.c.b16 %v3048, %v3044
    %v3425 = vpack.c.b16 %v3049, %v3045
    %v3426 = vpack.c.b16 %v3054, %v3050
    %v3427 = vpack.c.b16 %v3055, %v3051
    %v3428 = vpack.c.b16 %v3056, %v3052
    %v3429 = vpack.c.b16 %v3057, %v3053
    %v3430 = vpack.c.b16 %v3062, %v3058
    %v3431 = vpack.c.b16 %v3063, %v3059
    %v3432 = vpack.c.b16 %v3064, %v3060
    %v3433 = vpack.c.b16 %v3065, %v3061
    %v3434 = vpack.c.b16 %v3070, %v3066
    %v3435 = vpack.c.b16 %v3071, %v3067
    %v3436 = vpack.c.b16 %v3072, %v3068
    %v3437 = vpack.c.b16 %v3073, %v3069
    %v3438 = vpack.c.b16 %v3078, %v3074
    %v3439 = vpack.c.b16 %v3079, %v3075
    %v3440 = vpack.c.b16 %v3080, %v3076
    %v3441 = vpack.c.b16 %v3081, %v3077
    %v3442 = vpack.c.b16 %v3086, %v3082
    %v3443 = vpack.c.b16 %v3087, %v3083
    %v3444 = vpack.c.b16 %v3088, %v3084
    %v3445 = vpack.c.b16 %v3089, %v3085
    %v3446 = vpack.c.b16 %v3094, %v3090
    %v3447 = vpack.c.b16 %v3095, %v3091
    %v3448 = vpack.c.b16 %v3096, %v3092
    %v3449 = vpack.c.b16 %v3097, %v3093
    %v3450 = vpack.c.b16 %v3102, %v3098
    %v3451 = vpack.c.b16 %v3103, %v3099
    %v3452 = vpack.c.b16 %v3104, %v3100
    %v3453 = vpack.c.b16 %v3105, %v3101
    %v3454 = vpack.c.b16 %v3110, %v3106
    %v3455 = vpack.c.b16 %v3111, %v3107
    %v3456 = vpack.c.b16 %v3112, %v3108
    %v3457 = vpack.c.b16 %v3113, %v3109
    %v3458 = vpack.c.b16 %v3118, %v3114
    %v3459 = vpack.c.b16 %v3119, %v3115
    %v3460 = vpack.c.b16 %v3120, %v3116
    %v3461 = vpack.c.b16 %v3121, %v3117
    %v3462 = vpack.c.b16 %v3126, %v3122
    %v3463 = vpack.c.b16 %v3127, %v3123
    %v3464 = vpack.c.b16 %v3128, %v3124
    %v3465 = vpack.c.b16 %v3129, %v3125
    %v3466 = vpack.c.b16 %v3134, %v3130
    %v3467 = vpack.c.b16 %v3135, %v3131
    %v3468 = vpack.c.b16 %v3136, %v3132
    %v3469 = vpack.c.b16 %v3137, %v3133
    %v3470 = vpack.c.b16 %v3142, %v3138
    %v3471 = vpack.c.b16 %v3143, %v3139
    %v3472 = vpack.c.b16 %v3144, %v3140
    %v3473 = vpack.c.b16 %v3145, %v3141
    %v3474 = vpack.c.b16 %v3150, %v3146
    %v3475 = vpack.c.b16 %v3151, %v3147
    %v3476 = vpack.c.b16 %v3152, %v3148
    %v3477 = vpack.c.b16 %v3153, %v3149
    %v3478 = vpack.c.b16 %v3158, %v3154
    %v3479 = vpack.c.b16 %v3159, %v3155
    %v3480 = vpack.c.b16 %v3160, %v3156
    %v3481 = vpack.c.b16 %v3161, %v3157
    %v3482 = vpack.c.b16 %v3166, %v3162
    %v3483 = vpack.c.b16 %v3167, %v3163
    %v3484 = vpack.c.b16 %v3168, %v3164
    %v3485 = vpack.c.b16 %v3169, %v3165
    %v3486 = vpack.c.b16 %v3174, %v3170
    %v3487 = vpack.c.b16 %v3175, %v3171
    %v3488 = vpack.c.b16 %v3176, %v3172
    %v3489 = vpack.c.b16 %v3177, %v3173
    %v3490 = vpack.c.b16 %v3182, %v3178
    %v3491 = vpack.c.b16 %v3183, %v3179
    %v3492 = vpack.c.b16 %v3184, %v3180
    %v3493 = vpack.c.b16 %v3185, %v3181
    %v3494 = vpack.c.b16 %v3190, %v3186
    %v3495 = vpack.c.b16 %v3191, %v3187
    %v3496 = vpack.c.b16 %v3192, %v3188
    %v3497 = vpack.c.b16 %v3193, %v3189
    %v3498 = vpack.c.b16 %v3198, %v3194
    %v3499 = vpack.c.b16 %v3199, %v3195
    %v3500 = vpack.c.b16 %v3200, %v3196
    %v3501 = vpack.c.b16 %v3201, %v3197
    %v3502 = vpack.c.b16 %v3206, %v3202
    %v3503 = vpack.c.b16 %v3207, %v3203
    %v3504 = vpack.c.b16 %v3208, %v3204
    %v3505 = vpack.c.b16 %v3209, %v3205
    %v3506 = vpack.c.b16 %v3214, %v3210
    %v3507 = vpack.c.b16 %v3215, %v3211
    %v3508 = vpack.c.b16 %v3216, %v3212
    %v3509 = vpack.c.b16 %v3217, %v3213
    %v3510 = vpack.c.b16 %v3222, %v3218
    %v3511 = vpack.c.b16 %v3223, %v3219
    %v3512 = vpack.c.b16 %v3224, %v3220
    %v3513 = vpack.c.b16 %v3225, %v3221
    %v3514 = vpack.c.b16 %v3230, %v3226
    %v3515 = vpack.c.b16 %v3231, %v3227
    %v3516 = vpack.c.b16 %v3232, %v3228
    %v3517 = vpack.c.b16 %v3233, %v3229
    %v3518 = vpack.c.b16 %v3238, %v3234
    %v3519 = vpack.c.b16 %v3239, %v3235
    %v3520 = vpack.c.b16 %v3240, %v3236
    %v3521 = vpack.c.b16 %v3241, %v3237
    %v3522 = vpack.c.b16 %v3246, %v3242
    %v3523 = vpack.c.b16 %v3247, %v3243
    %v3524 = vpack.c.b16 %v3248, %v3244
    %v3525 = vpack.c.b16 %v3249, %v3245
    %v3526 = vpack.c.b16 %v3254, %v3250
    %v3527 = vpack.c.b16 %v3255, %v3251
    %v3528 = vpack.c.b16 %v3256, %v3252
    %v3529 = vpack.c.b16 %v3257, %v3253
    %v3530 = vpack.c.b16 %v3262, %v3258
    %v3531 = vpack.c.b16 %v3263, %v3259
    %v3532 = vpack.c.b16 %v3264, %v3260
    %v3533 = vpack.c.b16 %v3265, %v3261
    %v3534 = vpack.c.b16 %v3270, %v3266
    %v3535 = vpack.c.b16 %v3271, %v3267
    %v3536 = vpack.c.b16 %v3272, %v3268
    %v3537 = vpack.c.b16 %v3273, %v3269
    %v3538 = vpack.c.b16 %v3278, %v3274
    %v3539 = vpack.c.b16 %v3279, %v3275
    %v3540 = vpack.c.b16 %v3280, %v3276
    %v3541 = vpack.c.b16 %v3281, %v3277
    %v3542 = vpack.c.b16 %v3286, %v3282
    %v3543 = vpack.c.b16 %v3287, %v3283
    %v3544 = vpack.c.b16 %v3288, %v3284
    %v3545 = vpack.c.b16 %v3289, %v3285
    %v3546 = vpack.c.b16 %v3294, %v3290
    %v3547 = vpack.c.b16 %v3295, %v3291
    %v3548 = vpack.c.b16 %v3296, %v3292
    %v3549 = vpack.c.b16 %v3297, %v3293
    %v3550 = vpack.c.b16 %v3302, %v3298
    %v3551 = vpack.c.b16 %v3303, %v3299
    %v3552 = vpack.c.b16 %v3304, %v3300
    %v3553 = vpack.c.b16 %v3305, %v3301
    %v3554 = vpack.c.b16 %v3310, %v3306
    %v3555 = vpack.c.b16 %v3311, %v3307
    %v3556 = vpack.c.b16 %v3312, %v3308
    %v3557 = vpack.c.b16 %v3313, %v3309
    %v3558 = vpack.c.b16 %v3318, %v3314
    %v3559 = vpack.c.b16 %v3319, %v3315
    %v3560 = vpack.c.b16 %v3320, %v3316
    %v3561 = vpack.c.b16 %v3321, %v3317
    %v3562 = vpack.c.b16 %v3326, %v3322
    %v3563 = vpack.c.b16 %v3327, %v3323
    %v3564 = vpack.c.b16 %v3328, %v3324
    %v3565 = vpack.c.b16 %v3329, %v3325
    %v3566 = vpack.c.b16 %v3334, %v3330
    %v3567 = vpack.c.b16 %v3335, %v3331
    %v3568 = vpack.c.b16 %v3336, %v3332
    %v3569 = vpack.c.b16 %v3337, %v3333
    %v3570 = vpack.c.b16 %v3342, %v3338
    %v3571 = vpack.c.b16 %v3343, %v3339
    %v3572 = vpack.c.b16 %v3344, %v3340
    %v3573 = vpack.c.b16 %v3345, %v3341
    %v3574 = vpack.c.b16 %v3350, %v3346
    %v3575 = vpack.c.b16 %v3351, %v3347
    %v3576 = vpack.c.b16 %v3352, %v3348
    %v3577 = vpack.c.b16 %v3353, %v3349
    %v3578 = vpack.c.b16 %v3358, %v3354
    %v3579 = vpack.c.b16 %v3359, %v3355
    %v3580 = vpack.c.b16 %v3360, %v3356
    %v3581 = vpack.c.b16 %v3361, %v3357
    %v3582 = vpack.c.b16 %v3366, %v3362
    %v3583 = vpack.c.b16 %v3367, %v3363
    %v3584 = vpack.c.b16 %v3368, %v3364
    %v3585 = vpack.c.b16 %v3369, %v3365
    %v3586 = vpack.c.b16 %v3374, %v3370
    %v3587 = vpack.c.b16 %v3375, %v3371
    %v3588 = vpack.c.b16 %v3376, %v3372
    %v3589 = vpack.c.b16 %v3377, %v3373
    %v3590 = vpack.c.b16 %v3382, %v3378
    %v3591 = vpack.c.b16 %v3383, %v3379
    %v3592 = vpack.c.b16 %v3384, %v3380
    %v3593 = vpack.c.b16 %v3385, %v3381
    %v3594 = vpack.c.b16 %v3390, %v3386
    %v3595 = vpack.c.b16 %v3391, %v3387
    %v3596 = vpack.c.b16 %v3392, %v3388
    %v3597 = vpack.c.b16 %v3393, %v3389
    %v3598 = vpack.c.b16 %v3398, %v3394
    %v3599 = vpack.c.b16 %v3399, %v3395
    %v3600 = vpack.c.b16 %v3400, %v3396
    %v3601 = vpack.c.b16 %v3401, %v3397
    %v3602 = vpack.c.b16 %v3406, %v3402
    %v3603 = vpack.c.b16 %v3407, %v3403
    %v3604 = vpack.c.b16 %v3408, %v3404
    %v3605 = vpack.c.b16 %v3409, %v3405
    %v3606 = vpack.c.b16 %v3414, %v3410
    %v3607 = vpack.c.b16 %v3415, %v3411
    %v3608 = vpack.c.b16 %v3416, %v3412
    %v3609 = vpack.c.b16 %v3417, %v3413
    %3802 = vmatpush.bf16.msra.mxu0 %v3446
    %3803 = vmatpush.bf16.msra.mxu0 %v3442
    %3804 = vmatpush.bf16.msra.mxu0 %v3438
    %3805 = vmatpush.bf16.msra.mxu0 %v3434
    %3806 = vmatpush.bf16.msra.mxu0 %v3430
    %3807 = vmatpush.bf16.msra.mxu0 %v3426
    %3808 = vmatpush.bf16.msra.mxu0 %v3422
    %3809 = vmatpush.bf16.msra.mxu0 %v3418
    %3810 = vmatmul.bf16.gmra.mxu0 %v2810
    %v3811 = vpop.f32.mrf.mxu0
    %v3812 = vadd.f32 0.0, %v3811
    %v3813 = vpop.f32.mrf.mxu0
    %v3814 = vadd.f32 0.0, %v3813
    %3815 = vmatmul.bf16.gmra.mxu0 %v2824
    %v3816 = vpop.f32.mrf.mxu0
    %v3817 = vadd.f32 0.0, %v3816
    %v3818 = vpop.f32.mrf.mxu0
    %v3819 = vadd.f32 0.0, %v3818
    %3820 = vdwg.mxu0
    %3821 = vmatpush.bf16.msra.mxu0 %v3478
    %3822 = vmatpush.bf16.msra.mxu0 %v3474
    %3823 = vmatpush.bf16.msra.mxu0 %v3470
    %3824 = vmatpush.bf16.msra.mxu0 %v3466
    %3825 = vmatpush.bf16.msra.mxu0 %v3462
    %3826 = vmatpush.bf16.msra.mxu0 %v3458
    %3827 = vmatpush.bf16.msra.mxu0 %v3454
    %3828 = vmatpush.bf16.msra.mxu0 %v3450
    %3829 = vmatmul.bf16.gmra.mxu0 %v2811
    %v3830 = vpop.f32.mrf.mxu0
    %v3831 = vadd.f32 %v3812, %v3830
    %v3832 = vpop.f32.mrf.mxu0
    %v3833 = vadd.f32 %v3814, %v3832
    %3834 = vmatmul.bf16.gmra.mxu0 %v2825
    %v3835 = vpop.f32.mrf.mxu0
    %v3836 = vadd.f32 %v3817, %v3835
    %v3837 = vpop.f32.mrf.mxu0
    %v3838 = vadd.f32 %v3819, %v3837
    %3839 = vdwg.mxu0
    %3840 = vmatpush.bf16.msra.mxu0 %v3510
    %3841 = vmatpush.bf16.msra.mxu0 %v3506
    %3842 = vmatpush.bf16.msra.mxu0 %v3502
    %3843 = vmatpush.bf16.msra.mxu0 %v3498
    %3844 = vmatpush.bf16.msra.mxu0 %v3494
    %3845 = vmatpush.bf16.msra.mxu0 %v3490
    %3846 = vmatpush.bf16.msra.mxu0 %v3486
    %3847 = vmatpush.bf16.msra.mxu0 %v3482
    %3848 = vmatmul.bf16.gmra.mxu0 %v2812
    %v3849 = vpop.f32.mrf.mxu0
    %v3850 = vadd.f32 %v3831, %v3849
    %v3851 = vpop.f32.mrf.mxu0
    %v3852 = vadd.f32 %v3833, %v3851
    %3853 = vmatmul.bf16.gmra.mxu0 %v2826
    %v3854 = vpop.f32.mrf.mxu0
    %v3855 = vadd.f32 %v3836, %v3854
    %v3856 = vpop.f32.mrf.mxu0
    %v3857 = vadd.f32 %v3838, %v3856
    %3858 = vdwg.mxu0
    %3859 = vmatpush.bf16.msra.mxu0 %v3542
    %3860 = vmatpush.bf16.msra.mxu0 %v3538
    %3861 = vmatpush.bf16.msra.mxu0 %v3534
    %3862 = vmatpush.bf16.msra.mxu0 %v3530
    %3863 = vmatpush.bf16.msra.mxu0 %v3526
    %3864 = vmatpush.bf16.msra.mxu0 %v3522
    %3865 = vmatpush.bf16.msra.mxu0 %v3518
    %3866 = vmatpush.bf16.msra.mxu0 %v3514
    %3867 = vmatmul.bf16.gmra.mxu0 %v2813
    %v3868 = vpop.f32.mrf.mxu0
    %v3869 = vadd.f32 %v3850, %v3868
    %v3870 = vpop.f32.mrf.mxu0
    %v3871 = vadd.f32 %v3852, %v3870
    %3872 = vmatmul.bf16.gmra.mxu0 %v2827
    %v3873 = vpop.f32.mrf.mxu0
    %v3874 = vadd.f32 %v3855, %v3873
    %v3875 = vpop.f32.mrf.mxu0
    %v3876 = vadd.f32 %v3857, %v3875
    %3877 = vdwg.mxu0
    %3878 = vmatpush.bf16.msra.mxu0 %v3574
    %3879 = vmatpush.bf16.msra.mxu0 %v3570
    %3880 = vmatpush.bf16.msra.mxu0 %v3566
    %3881 = vmatpush.bf16.msra.mxu0 %v3562
    %3882 = vmatpush.bf16.msra.mxu0 %v3558
    %3883 = vmatpush.bf16.msra.mxu0 %v3554
    %3884 = vmatpush.bf16.msra.mxu0 %v3550
    %3885 = vmatpush.bf16.msra.mxu0 %v3546
    %3886 = vmatmul.bf16.gmra.mxu0 %v2814
    %v3887 = vpop.f32.mrf.mxu0
    %v3888 = vadd.f32 %v3869, %v3887
    %v3889 = vpop.f32.mrf.mxu0
    %v3890 = vadd.f32 %v3871, %v3889
    %3891 = vmatmul.bf16.gmra.mxu0 %v2828
    %v3892 = vpop.f32.mrf.mxu0
    %v3893 = vadd.f32 %v3874, %v3892
    %v3894 = vpop.f32.mrf.mxu0
    %v3895 = vadd.f32 %v3876, %v3894
    %3896 = vdwg.mxu0
    %3897 = vmatpush.bf16.msra.mxu0 %v3606
    %3898 = vmatpush.bf16.msra.mxu0 %v3602
    %3899 = vmatpush.bf16.msra.mxu0 %v3598
    %3900 = vmatpush.bf16.msra.mxu0 %v3594
    %3901 = vmatpush.bf16.msra.mxu0 %v3590
    %3902 = vmatpush.bf16.msra.mxu0 %v3586
    %3903 = vmatpush.bf16.msra.mxu0 %v3582
    %3904 = vmatpush.bf16.msra.mxu0 %v3578
    %3905 = vmatmul.bf16.gmra.mxu0 %v2815
    %v3906 = vpop.f32.mrf.mxu0
    %v3907 = vadd.f32 %v3888, %v3906
    %v3908 = vpop.f32.mrf.mxu0
    %v3909 = vadd.f32 %v3890, %v3908
    %3910 = vmatmul.bf16.gmra.mxu0 %v2829
    %v3911 = vpop.f32.mrf.mxu0
    %v3912 = vadd.f32 %v3893, %v3911
    %v3913 = vpop.f32.mrf.mxu0
    %v3914 = vadd.f32 %v3895, %v3913
    %3915 = vdwg.mxu0
    %3916 = vmatpush.bf16.msra.mxu0 %v3447
    %3917 = vmatpush.bf16.msra.mxu0 %v3443
    %3918 = vmatpush.bf16.msra.mxu0 %v3439
    %3919 = vmatpush.bf16.msra.mxu0 %v3435
    %3920 = vmatpush.bf16.msra.mxu0 %v3431
    %3921 = vmatpush.bf16.msra.mxu0 %v3427
    %3922 = vmatpush.bf16.msra.mxu0 %v3423
    %3923 = vmatpush.bf16.msra.mxu0 %v3419
    %3924 = vmatmul.bf16.gmra.mxu0 %v2810
    %v3925 = vpop.f32.mrf.mxu0
    %v3926 = vadd.f32 0.0, %v3925
    %v3927 = vpop.f32.mrf.mxu0
    %v3928 = vadd.f32 0.0, %v3927
    %3929 = vmatmul.bf16.gmra.mxu0 %v2824
    %v3930 = vpop.f32.mrf.mxu0
    %v3931 = vadd.f32 0.0, %v3930
    %v3932 = vpop.f32.mrf.mxu0
    %v3933 = vadd.f32 0.0, %v3932
    %3934 = vdwg.mxu0
    %3935 = vmatpush.bf16.msra.mxu0 %v3479
    %3936 = vmatpush.bf16.msra.mxu0 %v3475
    %3937 = vmatpush.bf16.msra.mxu0 %v3471
    %3938 = vmatpush.bf16.msra.mxu0 %v3467
    %3939 = vmatpush.bf16.msra.mxu0 %v3463
    %3940 = vmatpush.bf16.msra.mxu0 %v3459
    %3941 = vmatpush.bf16.msra.mxu0 %v3455
    %3942 = vmatpush.bf16.msra.mxu0 %v3451
    %3943 = vmatmul.bf16.gmra.mxu0 %v2811
    %v3944 = vpop.f32.mrf.mxu0
    %v3945 = vadd.f32 %v3926, %v3944
    %v3946 = vpop.f32.mrf.mxu0
    %v3947 = vadd.f32 %v3928, %v3946
    %3948 = vmatmul.bf16.gmra.mxu0 %v2825
    %v3949 = vpop.f32.mrf.mxu0
    %v3950 = vadd.f32 %v3931, %v3949
    %v3951 = vpop.f32.mrf.mxu0
    %v3952 = vadd.f32 %v3933, %v3951
    %3953 = vdwg.mxu0
    %3954 = vmatpush.bf16.msra.mxu0 %v3511
    %3955 = vmatpush.bf16.msra.mxu0 %v3507
    %3956 = vmatpush.bf16.msra.mxu0 %v3503
    %3957 = vmatpush.bf16.msra.mxu0 %v3499
    %3958 = vmatpush.bf16.msra.mxu0 %v3495
    %3959 = vmatpush.bf16.msra.mxu0 %v3491
    %3960 = vmatpush.bf16.msra.mxu0 %v3487
    %3961 = vmatpush.bf16.msra.mxu0 %v3483
    %3962 = vmatmul.bf16.gmra.mxu0 %v2812
    %v3963 = vpop.f32.mrf.mxu0
    %v3964 = vadd.f32 %v3945, %v3963
    %v3965 = vpop.f32.mrf.mxu0
    %v3966 = vadd.f32 %v3947, %v3965
    %3967 = vmatmul.bf16.gmra.mxu0 %v2826
    %v3968 = vpop.f32.mrf.mxu0
    %v3969 = vadd.f32 %v3950, %v3968
    %v3970 = vpop.f32.mrf.mxu0
    %v3971 = vadd.f32 %v3952, %v3970
    %3972 = vdwg.mxu0
    %3973 = vmatpush.bf16.msra.mxu0 %v3543
    %3974 = vmatpush.bf16.msra.mxu0 %v3539
    %3975 = vmatpush.bf16.msra.mxu0 %v3535
    %3976 = vmatpush.bf16.msra.mxu0 %v3531
    %3977 = vmatpush.bf16.msra.mxu0 %v3527
    %3978 = vmatpush.bf16.msra.mxu0 %v3523
    %3979 = vmatpush.bf16.msra.mxu0 %v3519
    %3980 = vmatpush.bf16.msra.mxu0 %v3515
    %3981 = vmatmul.bf16.gmra.mxu0 %v2813
    %v3982 = vpop.f32.mrf.mxu0
    %v3983 = vadd.f32 %v3964, %v3982
    %v3984 = vpop.f32.mrf.mxu0
    %v3985 = vadd.f32 %v3966, %v3984
    %3986 = vmatmul.bf16.gmra.mxu0 %v2827
    %v3987 = vpop.f32.mrf.mxu0
    %v3988 = vadd.f32 %v3969, %v3987
    %v3989 = vpop.f32.mrf.mxu0
    %v3990 = vadd.f32 %v3971, %v3989
    %3991 = vdwg.mxu0
    %3992 = vmatpush.bf16.msra.mxu0 %v3575
    %3993 = vmatpush.bf16.msra.mxu0 %v3571
    %3994 = vmatpush.bf16.msra.mxu0 %v3567
    %3995 = vmatpush.bf16.msra.mxu0 %v3563
    %3996 = vmatpush.bf16.msra.mxu0 %v3559
    %3997 = vmatpush.bf16.msra.mxu0 %v3555
    %3998 = vmatpush.bf16.msra.mxu0 %v3551
    %3999 = vmatpush.bf16.msra.mxu0 %v3547
    %4000 = vmatmul.bf16.gmra.mxu0 %v2814
    %v4001 = vpop.f32.mrf.mxu0
    %v4002 = vadd.f32 %v3983, %v4001
    %v4003 = vpop.f32.mrf.mxu0
    %v4004 = vadd.f32 %v3985, %v4003
    %4005 = vmatmul.bf16.gmra.mxu0 %v2828
    %v4006 = vpop.f32.mrf.mxu0
    %v4007 = vadd.f32 %v3988, %v4006
    %v4008 = vpop.f32.mrf.mxu0
    %v4009 = vadd.f32 %v3990, %v4008
    %4010 = vdwg.mxu0
    %4011 = vmatpush.bf16.msra.mxu0 %v3607
    %4012 = vmatpush.bf16.msra.mxu0 %v3603
    %4013 = vmatpush.bf16.msra.mxu0 %v3599
    %4014 = vmatpush.bf16.msra.mxu0 %v3595
    %4015 = vmatpush.bf16.msra.mxu0 %v3591
    %4016 = vmatpush.bf16.msra.mxu0 %v3587
    %4017 = vmatpush.bf16.msra.mxu0 %v3583
    %4018 = vmatpush.bf16.msra.mxu0 %v3579
    %4019 = vmatmul.bf16.gmra.mxu0 %v2815
    %v4020 = vpop.f32.mrf.mxu0
    %v4021 = vadd.f32 %v4002, %v4020
    %v4022 = vpop.f32.mrf.mxu0
    %v4023 = vadd.f32 %v4004, %v4022
    %4024 = vmatmul.bf16.gmra.mxu0 %v2829
    %v4025 = vpop.f32.mrf.mxu0
    %v4026 = vadd.f32 %v4007, %v4025
    %v4027 = vpop.f32.mrf.mxu0
    %v4028 = vadd.f32 %v4009, %v4027
    %4029 = vdwg.mxu0
    %4030 = vmatpush.bf16.msra.mxu0 %v3448
    %4031 = vmatpush.bf16.msra.mxu0 %v3444
    %4032 = vmatpush.bf16.msra.mxu0 %v3440
    %4033 = vmatpush.bf16.msra.mxu0 %v3436
    %4034 = vmatpush.bf16.msra.mxu0 %v3432
    %4035 = vmatpush.bf16.msra.mxu0 %v3428
    %4036 = vmatpush.bf16.msra.mxu0 %v3424
    %4037 = vmatpush.bf16.msra.mxu0 %v3420
    %4038 = vmatmul.bf16.gmra.mxu0 %v2810
    %v4039 = vpop.f32.mrf.mxu0
    %v4040 = vadd.f32 0.0, %v4039
    %v4041 = vpop.f32.mrf.mxu0
    %v4042 = vadd.f32 0.0, %v4041
    %4043 = vmatmul.bf16.gmra.mxu0 %v2824
    %v4044 = vpop.f32.mrf.mxu0
    %v4045 = vadd.f32 0.0, %v4044
    %v4046 = vpop.f32.mrf.mxu0
    %v4047 = vadd.f32 0.0, %v4046
    %4048 = vdwg.mxu0
    %4049 = vmatpush.bf16.msra.mxu0 %v3480
    %4050 = vmatpush.bf16.msra.mxu0 %v3476
    %4051 = vmatpush.bf16.msra.mxu0 %v3472
    %4052 = vmatpush.bf16.msra.mxu0 %v3468
    %4053 = vmatpush.bf16.msra.mxu0 %v3464
    %4054 = vmatpush.bf16.msra.mxu0 %v3460
    %4055 = vmatpush.bf16.msra.mxu0 %v3456
    %4056 = vmatpush.bf16.msra.mxu0 %v3452
    %4057 = vmatmul.bf16.gmra.mxu0 %v2811
    %v4058 = vpop.f32.mrf.mxu0
    %v4059 = vadd.f32 %v4040, %v4058
    %v4060 = vpop.f32.mrf.mxu0
    %v4061 = vadd.f32 %v4042, %v4060
    %4062 = vmatmul.bf16.gmra.mxu0 %v2825
    %v4063 = vpop.f32.mrf.mxu0
    %v4064 = vadd.f32 %v4045, %v4063
    %v4065 = vpop.f32.mrf.mxu0
    %v4066 = vadd.f32 %v4047, %v4065
    %4067 = vdwg.mxu0
    %4068 = vmatpush.bf16.msra.mxu0 %v3512
    %4069 = vmatpush.bf16.msra.mxu0 %v3508
    %4070 = vmatpush.bf16.msra.mxu0 %v3504
    %4071 = vmatpush.bf16.msra.mxu0 %v3500
    %4072 = vmatpush.bf16.msra.mxu0 %v3496
    %4073 = vmatpush.bf16.msra.mxu0 %v3492
    %4074 = vmatpush.bf16.msra.mxu0 %v3488
    %4075 = vmatpush.bf16.msra.mxu0 %v3484
    %4076 = vmatmul.bf16.gmra.mxu0 %v2812
    %v4077 = vpop.f32.mrf.mxu0
    %v4078 = vadd.f32 %v4059, %v4077
    %v4079 = vpop.f32.mrf.mxu0
    %v4080 = vadd.f32 %v4061, %v4079
    %4081 = vmatmul.bf16.gmra.mxu0 %v2826
    %v4082 = vpop.f32.mrf.mxu0
    %v4083 = vadd.f32 %v4064, %v4082
    %v4084 = vpop.f32.mrf.mxu0
    %v4085 = vadd.f32 %v4066, %v4084
    %4086 = vdwg.mxu0
    %4087 = vmatpush.bf16.msra.mxu0 %v3544
    %4088 = vmatpush.bf16.msra.mxu0 %v3540
    %4089 = vmatpush.bf16.msra.mxu0 %v3536
    %4090 = vmatpush.bf16.msra.mxu0 %v3532
    %4091 = vmatpush.bf16.msra.mxu0 %v3528
    %4092 = vmatpush.bf16.msra.mxu0 %v3524
    %4093 = vmatpush.bf16.msra.mxu0 %v3520
    %4094 = vmatpush.bf16.msra.mxu0 %v3516
    %4095 = vmatmul.bf16.gmra.mxu0 %v2813
    %v4096 = vpop.f32.mrf.mxu0
    %v4097 = vadd.f32 %v4078, %v4096
    %v4098 = vpop.f32.mrf.mxu0
    %v4099 = vadd.f32 %v4080, %v4098
    %4100 = vmatmul.bf16.gmra.mxu0 %v2827
    %v4101 = vpop.f32.mrf.mxu0
    %v4102 = vadd.f32 %v4083, %v4101
    %v4103 = vpop.f32.mrf.mxu0
    %v4104 = vadd.f32 %v4085, %v4103
    %4105 = vdwg.mxu0
    %4106 = vmatpush.bf16.msra.mxu0 %v3576
    %4107 = vmatpush.bf16.msra.mxu0 %v3572
    %4108 = vmatpush.bf16.msra.mxu0 %v3568
    %4109 = vmatpush.bf16.msra.mxu0 %v3564
    %4110 = vmatpush.bf16.msra.mxu0 %v3560
    %4111 = vmatpush.bf16.msra.mxu0 %v3556
    %4112 = vmatpush.bf16.msra.mxu0 %v3552
    %4113 = vmatpush.bf16.msra.mxu0 %v3548
    %4114 = vmatmul.bf16.gmra.mxu0 %v2814
    %v4115 = vpop.f32.mrf.mxu0
    %v4116 = vadd.f32 %v4097, %v4115
    %v4117 = vpop.f32.mrf.mxu0
    %v4118 = vadd.f32 %v4099, %v4117
    %4119 = vmatmul.bf16.gmra.mxu0 %v2828
    %v4120 = vpop.f32.mrf.mxu0
    %v4121 = vadd.f32 %v4102, %v4120
    %v4122 = vpop.f32.mrf.mxu0
    %v4123 = vadd.f32 %v4104, %v4122
    %4124 = vdwg.mxu0
    %4125 = vmatpush.bf16.msra.mxu0 %v3608
    %4126 = vmatpush.bf16.msra.mxu0 %v3604
    %4127 = vmatpush.bf16.msra.mxu0 %v3600
    %4128 = vmatpush.bf16.msra.mxu0 %v3596
    %4129 = vmatpush.bf16.msra.mxu0 %v3592
    %4130 = vmatpush.bf16.msra.mxu0 %v3588
    %4131 = vmatpush.bf16.msra.mxu0 %v3584
    %4132 = vmatpush.bf16.msra.mxu0 %v3580
    %4133 = vmatmul.bf16.gmra.mxu0 %v2815
    %v4134 = vpop.f32.mrf.mxu0
    %v4135 = vadd.f32 %v4116, %v4134
    %v4136 = vpop.f32.mrf.mxu0
    %v4137 = vadd.f32 %v4118, %v4136
    %4138 = vmatmul.bf16.gmra.mxu0 %v2829
    %v4139 = vpop.f32.mrf.mxu0
    %v4140 = vadd.f32 %v4121, %v4139
    %v4141 = vpop.f32.mrf.mxu0
    %v4142 = vadd.f32 %v4123, %v4141
    %4143 = vdwg.mxu0
    %4144 = vmatpush.bf16.msra.mxu0 %v3449
    %4145 = vmatpush.bf16.msra.mxu0 %v3445
    %4146 = vmatpush.bf16.msra.mxu0 %v3441
    %4147 = vmatpush.bf16.msra.mxu0 %v3437
    %4148 = vmatpush.bf16.msra.mxu0 %v3433
    %4149 = vmatpush.bf16.msra.mxu0 %v3429
    %4150 = vmatpush.bf16.msra.mxu0 %v3425
    %4151 = vmatpush.bf16.msra.mxu0 %v3421
    %4152 = vmatmul.bf16.gmra.mxu0 %v2810
    %v4153 = vpop.f32.mrf.mxu0
    %v4154 = vadd.f32 0.0, %v4153
    %v4155 = vpop.f32.mrf.mxu0
    %v4156 = vadd.f32 0.0, %v4155
    %4157 = vmatmul.bf16.gmra.mxu0 %v2824
    %v4158 = vpop.f32.mrf.mxu0
    %v4159 = vadd.f32 0.0, %v4158
    %v4160 = vpop.f32.mrf.mxu0
    %v4161 = vadd.f32 0.0, %v4160
    %4162 = vdwg.mxu0
    %4163 = vmatpush.bf16.msra.mxu0 %v3481
    %4164 = vmatpush.bf16.msra.mxu0 %v3477
    %4165 = vmatpush.bf16.msra.mxu0 %v3473
    %4166 = vmatpush.bf16.msra.mxu0 %v3469
    %4167 = vmatpush.bf16.msra.mxu0 %v3465
    %4168 = vmatpush.bf16.msra.mxu0 %v3461
    %4169 = vmatpush.bf16.msra.mxu0 %v3457
    %4170 = vmatpush.bf16.msra.mxu0 %v3453
    %4171 = vmatmul.bf16.gmra.mxu0 %v2811
    %v4172 = vpop.f32.mrf.mxu0
    %v4173 = vadd.f32 %v4154, %v4172
    %v4174 = vpop.f32.mrf.mxu0
    %v4175 = vadd.f32 %v4156, %v4174
    %4176 = vmatmul.bf16.gmra.mxu0 %v2825
    %v4177 = vpop.f32.mrf.mxu0
    %v4178 = vadd.f32 %v4159, %v4177
    %v4179 = vpop.f32.mrf.mxu0
    %v4180 = vadd.f32 %v4161, %v4179
    %4181 = vdwg.mxu0
    %4182 = vmatpush.bf16.msra.mxu0 %v3513
    %4183 = vmatpush.bf16.msra.mxu0 %v3509
    %4184 = vmatpush.bf16.msra.mxu0 %v3505
    %4185 = vmatpush.bf16.msra.mxu0 %v3501
    %4186 = vmatpush.bf16.msra.mxu0 %v3497
    %4187 = vmatpush.bf16.msra.mxu0 %v3493
    %4188 = vmatpush.bf16.msra.mxu0 %v3489
    %4189 = vmatpush.bf16.msra.mxu0 %v3485
    %4190 = vmatmul.bf16.gmra.mxu0 %v2812
    %v4191 = vpop.f32.mrf.mxu0
    %v4192 = vadd.f32 %v4173, %v4191
    %v4193 = vpop.f32.mrf.mxu0
    %v4194 = vadd.f32 %v4175, %v4193
    %4195 = vmatmul.bf16.gmra.mxu0 %v2826
    %v4196 = vpop.f32.mrf.mxu0
    %v4197 = vadd.f32 %v4178, %v4196
    %v4198 = vpop.f32.mrf.mxu0
    %v4199 = vadd.f32 %v4180, %v4198
    %4200 = vdwg.mxu0
    %4201 = vmatpush.bf16.msra.mxu0 %v3545
    %4202 = vmatpush.bf16.msra.mxu0 %v3541
    %4203 = vmatpush.bf16.msra.mxu0 %v3537
    %4204 = vmatpush.bf16.msra.mxu0 %v3533
    %4205 = vmatpush.bf16.msra.mxu0 %v3529
    %4206 = vmatpush.bf16.msra.mxu0 %v3525
    %4207 = vmatpush.bf16.msra.mxu0 %v3521
    %4208 = vmatpush.bf16.msra.mxu0 %v3517
    %4209 = vmatmul.bf16.gmra.mxu0 %v2813
    %v4210 = vpop.f32.mrf.mxu0
    %v4211 = vadd.f32 %v4192, %v4210
    %v4212 = vpop.f32.mrf.mxu0
    %v4213 = vadd.f32 %v4194, %v4212
    %4214 = vmatmul.bf16.gmra.mxu0 %v2827
    %v4215 = vpop.f32.mrf.mxu0
    %v4216 = vadd.f32 %v4197, %v4215
    %v4217 = vpop.f32.mrf.mxu0
    %v4218 = vadd.f32 %v4199, %v4217
    %4219 = vdwg.mxu0
    %4220 = vmatpush.bf16.msra.mxu0 %v3577
    %4221 = vmatpush.bf16.msra.mxu0 %v3573
    %4222 = vmatpush.bf16.msra.mxu0 %v3569
    %4223 = vmatpush.bf16.msra.mxu0 %v3565
    %4224 = vmatpush.bf16.msra.mxu0 %v3561
    %4225 = vmatpush.bf16.msra.mxu0 %v3557
    %4226 = vmatpush.bf16.msra.mxu0 %v3553
    %4227 = vmatpush.bf16.msra.mxu0 %v3549
    %4228 = vmatmul.bf16.gmra.mxu0 %v2814
    %v4229 = vpop.f32.mrf.mxu0
    %v4230 = vadd.f32 %v4211, %v4229
    %v4231 = vpop.f32.mrf.mxu0
    %v4232 = vadd.f32 %v4213, %v4231
    %4233 = vmatmul.bf16.gmra.mxu0 %v2828
    %v4234 = vpop.f32.mrf.mxu0
    %v4235 = vadd.f32 %v4216, %v4234
    %v4236 = vpop.f32.mrf.mxu0
    %v4237 = vadd.f32 %v4218, %v4236
    %4238 = vdwg.mxu0
    %4239 = vmatpush.bf16.msra.mxu0 %v3609
    %4240 = vmatpush.bf16.msra.mxu0 %v3605
    %4241 = vmatpush.bf16.msra.mxu0 %v3601
    %4242 = vmatpush.bf16.msra.mxu0 %v3597
    %4243 = vmatpush.bf16.msra.mxu0 %v3593
    %4244 = vmatpush.bf16.msra.mxu0 %v3589
    %4245 = vmatpush.bf16.msra.mxu0 %v3585
    %4246 = vmatpush.bf16.msra.mxu0 %v3581
    %4247 = vmatmul.bf16.gmra.mxu0 %v2815
    %v4248 = vpop.f32.mrf.mxu0
    %v4249 = vadd.f32 %v4230, %v4248
    %v4250 = vpop.f32.mrf.mxu0
    %v4251 = vadd.f32 %v4232, %v4250
    %4252 = vmatmul.bf16.gmra.mxu0 %v2829
    %v4253 = vpop.f32.mrf.mxu0
    %v4254 = vadd.f32 %v4235, %v4253
    %v4255 = vpop.f32.mrf.mxu0
    %v4256 = vadd.f32 %v4237, %v4255
    %4257 = vdwg.mxu0
    %v4258 = vmax.f32 %v3907, %v4135
    %v4259 = vmax.f32 %v4021, %v4249
    %v4260 = vmax.f32 %v3909, %v4137
    %v4261 = vmax.f32 %v4023, %v4251
    %v4262 = vmax.f32 %v3912, %v4140
    %v4263 = vmax.f32 %v4026, %v4254
    %v4264 = vmax.f32 %v3914, %v4142
    %v4265 = vmax.f32 %v4028, %v4256
    %v4266 = vmax.f32 %v4258, %v4259
    %v4267 = vmax.f32 %v4260, %v4261
    %v4268 = vmax.f32 %v4262, %v4263
    %v4269 = vmax.f32 %v4264, %v4265
    %v4270 = vld [vmem:[%s4] sm:$0x1]
    %v4272 = vperm.slane %v4270, 0
    %v4274 = vadd.f32 %v4266, %v4272
    %v4275 = vadd.f32 %v4267, %v4272
    %v4276 = vadd.f32 %v4268, %v4272
    %v4277 = vadd.f32 %v4269, %v4272
    %v4278 = vmax.f32 %v4274, 0.0
    %v4279 = vmax.f32 %v4275, 0.0
    %v4280 = vmax.f32 %v4276, 0.0
    %v4281 = vmax.f32 %v4277, 0.0
    %v4282 = vpack.c.bf16 %v4278, %v4278
    %v4283 = vpack.c.bf16 %v4279, %v4279
    %v4284 = vpack.c.bf16 %v4280, %v4280
    %v4285 = vpack.c.bf16 %v4281, %v4281
    %v4290 = vrot.slane %v4282, 2
    %v4291 = vrot.slane %v4283, 2
    %v4292 = vrot.slane %v4284, 2
    %v4293 = vrot.slane %v4285, 2
    %v4296 = vsel %vm2536, %v4282, %v4290
    %vm4297 = vcmask 1043458
    %v4298 = vsel %vm4297, %v4282, %v4290
    %v4300 = vrot.slane %v4298, 2
    %v4303 = vsel %vm2536, %v4283, %v4291
    %v4304 = vsel %vm4297, %v4283, %v4291
    %v4306 = vrot.slane %v4304, 2
    %v4309 = vsel %vm2536, %v4284, %v4292
    %v4310 = vsel %vm4297, %v4284, %v4292
    %v4312 = vrot.slane %v4310, 2
    %v4315 = vsel %vm2536, %v4285, %v4293
    %v4316 = vsel %vm4297, %v4285, %v4293
    %v4318 = vrot.slane %v4316, 2
    %4319 = vst [vmem:[#allocation1] ss:$4 sm:$0xff] %v4296
    %v4320 = vld.sshfl [vmem:[#allocation1] sm:$0xff pattern:$0x73625140]
    %s4323 = scalar_lea.vmem [#allocation1], 32
    %4324 = vst [vmem:[%s4323] ss:$4 sm:$0xff] %v4300
    %v4325 = vld.sshfl [vmem:[#allocation1 + $0x20] sm:$0xff pattern:$0x73625140]
    %4327 = vst [vmem:[#allocation1] ss:$4 sm:$0xff] %v4303
    %v4328 = vld.sshfl [vmem:[#allocation1] sm:$0xff pattern:$0x73625140]
    %4331 = vst [vmem:[%s4323] ss:$4 sm:$0xff] %v4306
    %v4332 = vld.sshfl [vmem:[#allocation1 + $0x20] sm:$0xff pattern:$0x73625140]
    %4334 = vst [vmem:[#allocation1] ss:$4 sm:$0xff] %v4309
    %v4335 = vld.sshfl [vmem:[#allocation1] sm:$0xff pattern:$0x73625140]
    %4338 = vst [vmem:[%s4323] ss:$4 sm:$0xff] %v4312
    %v4339 = vld.sshfl [vmem:[#allocation1 + $0x20] sm:$0xff pattern:$0x73625140]
    %4341 = vst [vmem:[#allocation1] ss:$4 sm:$0xff] %v4315
    %v4342 = vld.sshfl [vmem:[#allocation1] sm:$0xff pattern:$0x73625140]
    %4345 = vst [vmem:[%s4323] ss:$4 sm:$0xff] %v4318
    %v4346 = vld.sshfl [vmem:[#allocation1 + $0x20] sm:$0xff pattern:$0x73625140]
    %v4348 = vunpack.c.l.b16 %v4320
    %v4349 = vunpack.c.l.b16 %v4325
    %v4350 = vunpack.c.l.b16 %v4328
    %v4351 = vunpack.c.l.b16 %v4332
    %v4352 = vunpack.c.l.b16 %v4335
    %v4353 = vunpack.c.l.b16 %v4339
    %v4354 = vunpack.c.l.b16 %v4342
    %v4355 = vunpack.c.l.b16 %v4346
    %v4356 = vrot.slane %v4349, 7
    %v4357 = vsel %vm760, %v4356, %v4348
    %v4358 = vrot.slane %v4350, 6
    %v4359 = vsel %vm764, %v4358, %v4357
    %v4360 = vrot.slane %v4351, 5
    %v4361 = vsel %vm2004, %v4360, %v4359
    %v4362 = vrot.slane %v4352, 4
    %vm4363 = vcmask 1044484
    %v4364 = vsel %vm4363, %v4362, %v4361
    %v4365 = vrot.slane %v4353, 3
    %vm4366 = vcmask 1045509
    %v4367 = vsel %vm4366, %v4365, %v4364
    %v4368 = vrot.slane %v4354, 2
    %vm4369 = vcmask 1046534
    %v4370 = vsel %vm4369, %v4368, %v4367
    %v4371 = vrot.slane %v4355, 1
    %vm4372 = vcmask 1047559
    %v4373 = vsel %vm4372, %v4371, %v4370
    %v4374 = vpack.c.b16 %v4373, %v4373
    %4376 = vst [vmem:[#allocation1] ss:$4 sm:$0xff] %v4296
    %v4377 = vld.sshfl [vmem:[#allocation1] sm:$0xff pattern:$0x73625140]
    %s4379 = scalar_lea.vmem [#allocation1], 32
    %4380 = vst [vmem:[%s4379] ss:$4 sm:$0xff] %v4300
    %v4381 = vld.sshfl [vmem:[#allocation1 + $0x20] sm:$0xff pattern:$0x73625140]
    %4383 = vst [vmem:[#allocation1] ss:$4 sm:$0xff] %v4303
    %v4384 = vld.sshfl [vmem:[#allocation1] sm:$0xff pattern:$0x73625140]
    %4386 = vst [vmem:[%s4379] ss:$4 sm:$0xff] %v4306
    %v4387 = vld.sshfl [vmem:[#allocation1 + $0x20] sm:$0xff pattern:$0x73625140]
    %4389 = vst [vmem:[#allocation1] ss:$4 sm:$0xff] %v4309
    %v4390 = vld.sshfl [vmem:[#allocation1] sm:$0xff pattern:$0x73625140]
    %4392 = vst [vmem:[%s4379] ss:$4 sm:$0xff] %v4312
    %v4393 = vld.sshfl [vmem:[#allocation1 + $0x20] sm:$0xff pattern:$0x73625140]
    %4395 = vst [vmem:[#allocation1] ss:$4 sm:$0xff] %v4315
    %v4396 = vld.sshfl [vmem:[#allocation1] sm:$0xff pattern:$0x73625140]
    %4398 = vst [vmem:[%s4379] ss:$4 sm:$0xff] %v4318
    %v4399 = vld.sshfl [vmem:[#allocation1 + $0x20] sm:$0xff pattern:$0x73625140]
    %v4401 = vunpack.c.l.b16 %v4377
    %v4402 = vunpack.c.l.b16 %v4381
    %v4403 = vunpack.c.l.b16 %v4384
    %v4404 = vunpack.c.l.b16 %v4387
    %v4405 = vunpack.c.l.b16 %v4390
    %v4406 = vunpack.c.l.b16 %v4393
    %v4407 = vunpack.c.l.b16 %v4396
    %v4408 = vunpack.c.l.b16 %v4399
    %v4409 = vrot.slane %v4401, 1
    %v4410 = vsel %vm760, %v4402, %v4409
    %v4411 = vrot.slane %v4403, 7
    %v4412 = vsel %vm764, %v4411, %v4410
    %v4413 = vrot.slane %v4404, 6
    %v4414 = vsel %vm2004, %v4413, %v4412
    %v4415 = vrot.slane %v4405, 5
    %v4416 = vsel %vm4363, %v4415, %v4414
    %v4417 = vrot.slane %v4406, 4
    %v4418 = vsel %vm4366, %v4417, %v4416
    %v4419 = vrot.slane %v4407, 3
    %v4420 = vsel %vm4369, %v4419, %v4418
    %v4421 = vrot.slane %v4408, 2
    %v4422 = vsel %vm4372, %v4421, %v4420
    %v4423 = vpack.c.b16 %v4422, %v4422
    %4425 = vst [vmem:[#allocation1] ss:$4 sm:$0xff] %v4296
    %v4426 = vld.sshfl [vmem:[#allocation1] sm:$0xff pattern:$0x73625140]
    %s4428 = scalar_lea.vmem [#allocation1], 32
    %4429 = vst [vmem:[%s4428] ss:$4 sm:$0xff] %v4300
    %v4430 = vld.sshfl [vmem:[#allocation1 + $0x20] sm:$0xff pattern:$0x73625140]
    %4432 = vst [vmem:[#allocation1] ss:$4 sm:$0xff] %v4303
    %v4433 = vld.sshfl [vmem:[#allocation1] sm:$0xff pattern:$0x73625140]
    %4435 = vst [vmem:[%s4428] ss:$4 sm:$0xff] %v4306
    %v4436 = vld.sshfl [vmem:[#allocation1 + $0x20] sm:$0xff pattern:$0x73625140]
    %4438 = vst [vmem:[#allocation1] ss:$4 sm:$0xff] %v4309
    %v4439 = vld.sshfl [vmem:[#allocation1] sm:$0xff pattern:$0x73625140]
    %4441 = vst [vmem:[%s4428] ss:$4 sm:$0xff] %v4312
    %v4442 = vld.sshfl [vmem:[#allocation1 + $0x20] sm:$0xff pattern:$0x73625140]
    %4444 = vst [vmem:[#allocation1] ss:$4 sm:$0xff] %v4315
    %v4445 = vld.sshfl [vmem:[#allocation1] sm:$0xff pattern:$0x73625140]
    %4447 = vst [vmem:[%s4428] ss:$4 sm:$0xff] %v4318
    %v4448 = vld.sshfl [vmem:[#allocation1 + $0x20] sm:$0xff pattern:$0x73625140]
    %v4450 = vunpack.c.l.b16 %v4426
    %v4451 = vunpack.c.l.b16 %v4430
    %v4452 = vunpack.c.l.b16 %v4433
    %v4453 = vunpack.c.l.b16 %v4436
    %v4454 = vunpack.c.l.b16 %v4439
    %v4455 = vunpack.c.l.b16 %v4442
    %v4456 = vunpack.c.l.b16 %v4445
    %v4457 = vunpack.c.l.b16 %v4448
    %v4458 = vrot.slane %v4450, 2
    %v4459 = vrot.slane %v4451, 1
    %v4460 = vsel %vm760, %v4459, %v4458
    %v4461 = vsel %vm764, %v4452, %v4460
    %v4462 = vrot.slane %v4453, 7
    %v4463 = vsel %vm2004, %v4462, %v4461
    %v4464 = vrot.slane %v4454, 6
    %v4465 = vsel %vm4363, %v4464, %v4463
    %v4466 = vrot.slane %v4455, 5
    %v4467 = vsel %vm4366, %v4466, %v4465
    %v4468 = vrot.slane %v4456, 4
    %v4469 = vsel %vm4369, %v4468, %v4467
    %v4470 = vrot.slane %v4457, 3
    %v4471 = vsel %vm4372, %v4470, %v4469
    %v4472 = vpack.c.b16 %v4471, %v4471
    %4474 = vst [vmem:[#allocation1] ss:$4 sm:$0xff] %v4296
    %v4475 = vld.sshfl [vmem:[#allocation1] sm:$0xff pattern:$0x73625140]
    %s4477 = scalar_lea.vmem [#allocation1], 32
    %4478 = vst [vmem:[%s4477] ss:$4 sm:$0xff] %v4300
    %v4479 = vld.sshfl [vmem:[#allocation1 + $0x20] sm:$0xff pattern:$0x73625140]
    %4481 = vst [vmem:[#allocation1] ss:$4 sm:$0xff] %v4303
    %v4482 = vld.sshfl [vmem:[#allocation1] sm:$0xff pattern:$0x73625140]
    %4484 = vst [vmem:[%s4477] ss:$4 sm:$0xff] %v4306
    %v4485 = vld.sshfl [vmem:[#allocation1 + $0x20] sm:$0xff pattern:$0x73625140]
    %4487 = vst [vmem:[#allocation1] ss:$4 sm:$0xff] %v4309
    %v4488 = vld.sshfl [vmem:[#allocation1] sm:$0xff pattern:$0x73625140]
    %4490 = vst [vmem:[%s4477] ss:$4 sm:$0xff] %v4312
    %v4491 = vld.sshfl [vmem:[#allocation1 + $0x20] sm:$0xff pattern:$0x73625140]
    %4493 = vst [vmem:[#allocation1] ss:$4 sm:$0xff] %v4315
    %v4494 = vld.sshfl [vmem:[#allocation1] sm:$0xff pattern:$0x73625140]
    %4496 = vst [vmem:[%s4477] ss:$4 sm:$0xff] %v4318
    %v4497 = vld.sshfl [vmem:[#allocation1 + $0x20] sm:$0xff pattern:$0x73625140]
    %v4499 = vunpack.c.l.b16 %v4475
    %v4500 = vunpack.c.l.b16 %v4479
    %v4501 = vunpack.c.l.b16 %v4482
    %v4502 = vunpack.c.l.b16 %v4485
    %v4503 = vunpack.c.l.b16 %v4488
    %v4504 = vunpack.c.l.b16 %v4491
    %v4505 = vunpack.c.l.b16 %v4494
    %v4506 = vunpack.c.l.b16 %v4497
    %v4507 = vrot.slane %v4499, 3
    %v4508 = vrot.slane %v4500, 2
    %v4509 = vsel %vm760, %v4508, %v4507
    %v4510 = vrot.slane %v4501, 1
    %v4511 = vsel %vm764, %v4510, %v4509
    %v4512 = vsel %vm2004, %v4502, %v4511
    %v4513 = vrot.slane %v4503, 7
    %v4514 = vsel %vm4363, %v4513, %v4512
    %v4515 = vrot.slane %v4504, 6
    %v4516 = vsel %vm4366, %v4515, %v4514
    %v4517 = vrot.slane %v4505, 5
    %v4518 = vsel %vm4369, %v4517, %v4516
    %v4519 = vrot.slane %v4506, 4
    %v4520 = vsel %vm4372, %v4519, %v4518
    %v4521 = vpack.c.b16 %v4520, %v4520
    %v4523 = vld [vmem:[%s5] sm:$0xf]
    %v4524 = vld [vmem:[%s5 + $0x4] sm:$0xf]
    %v4525 = vld [vmem:[%s5 + $0x8] sm:$0xf]
    %v4526 = vld [vmem:[%s5 + $0xc] sm:$0xf]
    %v4527 = vld [vmem:[%s5 + $0x10] sm:$0xf]
    %v4528 = vld [vmem:[%s5 + $0x14] sm:$0xf]
    %v4529 = vld [vmem:[%s5 + $0x18] sm:$0xf]
    %v4530 = vld [vmem:[%s5 + $0x1c] sm:$0xf]
    %v4531 = vld [vmem:[%s5 + $0x20] sm:$0xf]
    %v4532 = vld [vmem:[%s5 + $0x24] sm:$0xf]
    %v4533 = vld [vmem:[%s5 + $0x28] sm:$0xf]
    %v4534 = vld [vmem:[%s5 + $0x2c] sm:$0xf]
    %v4535 = vld [vmem:[%s5 + $0x30] sm:$0xf]
    %v4536 = vld [vmem:[%s5 + $0x34] sm:$0xf]
    %v4537 = vld [vmem:[%s5 + $0x38] sm:$0xf]
    %v4538 = vld [vmem:[%s5 + $0x3c] sm:$0xf]
    %v4539 = vld [vmem:[%s5 + $0x40] sm:$0xf]
    %v4540 = vld [vmem:[%s5 + $0x44] sm:$0xf]
    %v4541 = vld [vmem:[%s5 + $0x48] sm:$0xf]
    %v4542 = vld [vmem:[%s5 + $0x4c] sm:$0xf]
    %v4543 = vld [vmem:[%s5 + $0x50] sm:$0xf]
    %v4544 = vld [vmem:[%s5 + $0x54] sm:$0xf]
    %v4545 = vld [vmem:[%s5 + $0x58] sm:$0xf]
    %v4546 = vld [vmem:[%s5 + $0x5c] sm:$0xf]
    %v4547 = vld [vmem:[%s5 + $0x60] sm:$0xf]
    %v4548 = vld [vmem:[%s5 + $0x64] sm:$0xf]
    %v4549 = vld [vmem:[%s5 + $0x68] sm:$0xf]
    %v4550 = vld [vmem:[%s5 + $0x6c] sm:$0xf]
    %v4551 = vld [vmem:[%s5 + $0x70] sm:$0xf]
    %v4552 = vld [vmem:[%s5 + $0x74] sm:$0xf]
    %v4553 = vld [vmem:[%s5 + $0x78] sm:$0xf]
    %v4554 = vld [vmem:[%s5 + $0x7c] sm:$0xf]
    %v4555 = vld [vmem:[%s5 + $0x80] sm:$0xf]
    %v4556 = vld [vmem:[%s5 + $0x84] sm:$0xf]
    %v4557 = vld [vmem:[%s5 + $0x88] sm:$0xf]
    %v4558 = vld [vmem:[%s5 + $0x8c] sm:$0xf]
    %v4559 = vld [vmem:[%s5 + $0x90] sm:$0xf]
    %v4560 = vld [vmem:[%s5 + $0x94] sm:$0xf]
    %v4561 = vld [vmem:[%s5 + $0x98] sm:$0xf]
    %v4562 = vld [vmem:[%s5 + $0x9c] sm:$0xf]
    %v4563 = vld [vmem:[%s5 + $0xa0] sm:$0xf]
    %v4564 = vld [vmem:[%s5 + $0xa4] sm:$0xf]
    %v4565 = vld [vmem:[%s5 + $0xa8] sm:$0xf]
    %v4566 = vld [vmem:[%s5 + $0xac] sm:$0xf]
    %v4567 = vld [vmem:[%s5 + $0xb0] sm:$0xf]
    %v4568 = vld [vmem:[%s5 + $0xb4] sm:$0xf]
    %v4569 = vld [vmem:[%s5 + $0xb8] sm:$0xf]
    %v4570 = vld [vmem:[%s5 + $0xbc] sm:$0xf]
    %v4571 = vld [vmem:[%s5 + $0xc0] sm:$0xf]
    %v4572 = vld [vmem:[%s5 + $0xc4] sm:$0xf]
    %v4573 = vld [vmem:[%s5 + $0xc8] sm:$0xf]
    %v4574 = vld [vmem:[%s5 + $0xcc] sm:$0xf]
    %v4575 = vld [vmem:[%s5 + $0xd0] sm:$0xf]
    %v4576 = vld [vmem:[%s5 + $0xd4] sm:$0xf]
    %v4577 = vld [vmem:[%s5 + $0xd8] sm:$0xf]
    %v4578 = vld [vmem:[%s5 + $0xdc] sm:$0xf]
    %v4579 = vld [vmem:[%s5 + $0xe0] sm:$0xf]
    %v4580 = vld [vmem:[%s5 + $0xe4] sm:$0xf]
    %v4581 = vld [vmem:[%s5 + $0xe8] sm:$0xf]
    %v4582 = vld [vmem:[%s5 + $0xec] sm:$0xf]
    %v4583 = vld [vmem:[%s5 + $0xf0] sm:$0xf]
    %v4584 = vld [vmem:[%s5 + $0xf4] sm:$0xf]
    %v4585 = vld [vmem:[%s5 + $0xf8] sm:$0xf]
    %v4586 = vld [vmem:[%s5 + $0xfc] sm:$0xf]
    %v4587 = vld [vmem:[%s6] sm:$0x1]
    %v4589 = vperm.slane %v4587, 0
    %v4655 = vunpack.c.l.b16 %v4523
    %v4656 = vunpack.c.l.b16 %v4524
    %v4657 = vunpack.c.l.b16 %v4525
    %v4658 = vunpack.c.l.b16 %v4526
    %v4659 = vunpack.c.l.b16 %v4527
    %v4660 = vunpack.c.l.b16 %v4528
    %v4661 = vunpack.c.l.b16 %v4529
    %v4662 = vunpack.c.l.b16 %v4530
    %v4663 = vunpack.c.l.b16 %v4531
    %v4664 = vunpack.c.l.b16 %v4532
    %v4665 = vunpack.c.l.b16 %v4533
    %v4666 = vunpack.c.l.b16 %v4534
    %v4667 = vunpack.c.l.b16 %v4535
    %v4668 = vunpack.c.l.b16 %v4536
    %v4669 = vunpack.c.l.b16 %v4537
    %v4670 = vunpack.c.l.b16 %v4538
    %v4671 = vunpack.c.l.b16 %v4539
    %v4672 = vunpack.c.l.b16 %v4540
    %v4673 = vunpack.c.l.b16 %v4541
    %v4674 = vunpack.c.l.b16 %v4542
    %v4675 = vunpack.c.l.b16 %v4543
    %v4676 = vunpack.c.l.b16 %v4544
    %v4677 = vunpack.c.l.b16 %v4545
    %v4678 = vunpack.c.l.b16 %v4546
    %v4679 = vunpack.c.l.b16 %v4547
    %v4680 = vunpack.c.l.b16 %v4548
    %v4681 = vunpack.c.l.b16 %v4549
    %v4682 = vunpack.c.l.b16 %v4550
    %v4683 = vunpack.c.l.b16 %v4551
    %v4684 = vunpack.c.l.b16 %v4552
    %v4685 = vunpack.c.l.b16 %v4553
    %v4686 = vunpack.c.l.b16 %v4554
    %v4687 = vunpack.c.l.b16 %v4555
    %v4688 = vunpack.c.l.b16 %v4556
    %v4689 = vunpack.c.l.b16 %v4557
    %v4690 = vunpack.c.l.b16 %v4558
    %v4691 = vunpack.c.l.b16 %v4559
    %v4692 = vunpack.c.l.b16 %v4560
    %v4693 = vunpack.c.l.b16 %v4561
    %v4694 = vunpack.c.l.b16 %v4562
    %v4695 = vunpack.c.l.b16 %v4563
    %v4696 = vunpack.c.l.b16 %v4564
    %v4697 = vunpack.c.l.b16 %v4565
    %v4698 = vunpack.c.l.b16 %v4566
    %v4699 = vunpack.c.l.b16 %v4567
    %v4700 = vunpack.c.l.b16 %v4568
    %v4701 = vunpack.c.l.b16 %v4569
    %v4702 = vunpack.c.l.b16 %v4570
    %v4703 = vunpack.c.l.b16 %v4571
    %v4704 = vunpack.c.l.b16 %v4572
    %v4705 = vunpack.c.l.b16 %v4573
    %v4706 = vunpack.c.l.b16 %v4574
    %v4707 = vunpack.c.l.b16 %v4575
    %v4708 = vunpack.c.l.b16 %v4576
    %v4709 = vunpack.c.l.b16 %v4577
    %v4710 = vunpack.c.l.b16 %v4578
    %v4711 = vunpack.c.l.b16 %v4579
    %v4712 = vunpack.c.l.b16 %v4580
    %v4713 = vunpack.c.l.b16 %v4581
    %v4714 = vunpack.c.l.b16 %v4582
    %v4715 = vunpack.c.l.b16 %v4583
    %v4716 = vunpack.c.l.b16 %v4584
    %v4717 = vunpack.c.l.b16 %v4585
    %v4718 = vunpack.c.l.b16 %v4586
    %v4719 = vpack.c.b16 %v4656, %v4655
    %v4720 = vpack.c.b16 %v4658, %v4657
    %v4721 = vpack.c.b16 %v4660, %v4659
    %v4722 = vpack.c.b16 %v4662, %v4661
    %v4723 = vpack.c.b16 %v4664, %v4663
    %v4724 = vpack.c.b16 %v4666, %v4665
    %v4725 = vpack.c.b16 %v4668, %v4667
    %v4726 = vpack.c.b16 %v4670, %v4669
    %v4727 = vpack.c.b16 %v4672, %v4671
    %v4728 = vpack.c.b16 %v4674, %v4673
    %v4729 = vpack.c.b16 %v4676, %v4675
    %v4730 = vpack.c.b16 %v4678, %v4677
    %v4731 = vpack.c.b16 %v4680, %v4679
    %v4732 = vpack.c.b16 %v4682, %v4681
    %v4733 = vpack.c.b16 %v4684, %v4683
    %v4734 = vpack.c.b16 %v4686, %v4685
    %v4735 = vpack.c.b16 %v4688, %v4687
    %v4736 = vpack.c.b16 %v4690, %v4689
    %v4737 = vpack.c.b16 %v4692, %v4691
    %v4738 = vpack.c.b16 %v4694, %v4693
    %v4739 = vpack.c.b16 %v4696, %v4695
    %v4740 = vpack.c.b16 %v4698, %v4697
    %v4741 = vpack.c.b16 %v4700, %v4699
    %v4742 = vpack.c.b16 %v4702, %v4701
    %v4743 = vpack.c.b16 %v4704, %v4703
    %v4744 = vpack.c.b16 %v4706, %v4705
    %v4745 = vpack.c.b16 %v4708, %v4707
    %v4746 = vpack.c.b16 %v4710, %v4709
    %v4747 = vpack.c.b16 %v4712, %v4711
    %v4748 = vpack.c.b16 %v4714, %v4713
    %v4749 = vpack.c.b16 %v4716, %v4715
    %v4750 = vpack.c.b16 %v4718, %v4717
    %4783 = vmatpush.bf16.msra.mxu0 %v4726
    %4784 = vmatpush.bf16.msra.mxu0 %v4725
    %4785 = vmatpush.bf16.msra.mxu0 %v4724
    %4786 = vmatpush.bf16.msra.mxu0 %v4723
    %4787 = vmatpush.bf16.msra.mxu0 %v4722
    %4788 = vmatpush.bf16.msra.mxu0 %v4721
    %4789 = vmatpush.bf16.msra.mxu0 %v4720
    %4790 = vmatpush.bf16.msra.mxu0 %v4719
    %4791 = vmatmul.bf16.gmra.mxu0 %v4374
    %v4792 = vpop.f32.mrf.mxu0
    %v4793 = vadd.f32 %v4589, %v4792
    %v4794 = vpop.f32.mrf.mxu0
    %4795 = vdwg.mxu0
    %4796 = vmatpush.bf16.msra.mxu0 %v4734
    %4797 = vmatpush.bf16.msra.mxu0 %v4733
    %4798 = vmatpush.bf16.msra.mxu0 %v4732
    %4799 = vmatpush.bf16.msra.mxu0 %v4731
    %4800 = vmatpush.bf16.msra.mxu0 %v4730
    %4801 = vmatpush.bf16.msra.mxu0 %v4729
    %4802 = vmatpush.bf16.msra.mxu0 %v4728
    %4803 = vmatpush.bf16.msra.mxu0 %v4727
    %4804 = vmatmul.bf16.gmra.mxu0 %v4423
    %v4805 = vpop.f32.mrf.mxu0
    %v4806 = vadd.f32 %v4793, %v4805
    %v4807 = vpop.f32.mrf.mxu0
    %4808 = vdwg.mxu0
    %4809 = vmatpush.bf16.msra.mxu0 %v4742
    %4810 = vmatpush.bf16.msra.mxu0 %v4741
    %4811 = vmatpush.bf16.msra.mxu0 %v4740
    %4812 = vmatpush.bf16.msra.mxu0 %v4739
    %4813 = vmatpush.bf16.msra.mxu0 %v4738
    %4814 = vmatpush.bf16.msra.mxu0 %v4737
    %4815 = vmatpush.bf16.msra.mxu0 %v4736
    %4816 = vmatpush.bf16.msra.mxu0 %v4735
    %4817 = vmatmul.bf16.gmra.mxu0 %v4472
    %v4818 = vpop.f32.mrf.mxu0
    %v4819 = vadd.f32 %v4806, %v4818
    %v4820 = vpop.f32.mrf.mxu0
    %4821 = vdwg.mxu0
    %4822 = vmatpush.bf16.msra.mxu0 %v4750
    %4823 = vmatpush.bf16.msra.mxu0 %v4749
    %4824 = vmatpush.bf16.msra.mxu0 %v4748
    %4825 = vmatpush.bf16.msra.mxu0 %v4747
    %4826 = vmatpush.bf16.msra.mxu0 %v4746
    %4827 = vmatpush.bf16.msra.mxu0 %v4745
    %4828 = vmatpush.bf16.msra.mxu0 %v4744
    %4829 = vmatpush.bf16.msra.mxu0 %v4743
    %4830 = vmatmul.bf16.gmra.mxu0 %v4521
    %v4831 = vpop.f32.mrf.mxu0
    %v4832 = vadd.f32 %v4819, %v4831
    %v4833 = vpop.f32.mrf.mxu0
    %4834 = vdwg.mxu0
    %v4835 = vmax.f32 %v4832, 0.0
    %v4836 = vpack.c.bf16 %v4835, %v4835
    %v4837 = vld [vmem:[#allocation6] sm:$0xf]
    %v4838 = vld [vmem:[#allocation6 + $0x4] sm:$0xf]
    %v4839 = vld [vmem:[#allocation6 + $0x8] sm:$0xf]
    %v4840 = vld [vmem:[#allocation6 + $0xc] sm:$0xf]
    %v4841 = vld [vmem:[#allocation6 + $0x10] sm:$0xf]
    %v4842 = vld [vmem:[#allocation6 + $0x14] sm:$0xf]
    %v4843 = vld [vmem:[#allocation6 + $0x18] sm:$0xf]
    %v4844 = vld [vmem:[#allocation6 + $0x1c] sm:$0xf]
    %v4845 = vld [vmem:[#allocation6 + $0x20] sm:$0xf]
    %v4846 = vld [vmem:[#allocation6 + $0x24] sm:$0xf]
    %v4847 = vld [vmem:[#allocation6 + $0x28] sm:$0xf]
    %v4848 = vld [vmem:[#allocation6 + $0x2c] sm:$0xf]
    %v4849 = vld [vmem:[#allocation6 + $0x30] sm:$0xf]
    %v4850 = vld [vmem:[#allocation6 + $0x34] sm:$0xf]
    %v4851 = vld [vmem:[#allocation6 + $0x38] sm:$0xf]
    %v4852 = vld [vmem:[#allocation6 + $0x3c] sm:$0xf]
    %v4853 = vld [vmem:[%s8] sm:$0x1]
    %v4855 = vperm.slane %v4853, 0
    %v4873 = vunpack.c.l.b16 %v4837
    %v4874 = vunpack.c.l.b16 %v4838
    %v4875 = vunpack.c.l.b16 %v4839
    %v4876 = vunpack.c.l.b16 %v4840
    %v4877 = vunpack.c.l.b16 %v4841
    %v4878 = vunpack.c.l.b16 %v4842
    %v4879 = vunpack.c.l.b16 %v4843
    %v4880 = vunpack.c.l.b16 %v4844
    %v4881 = vunpack.c.l.b16 %v4845
    %v4882 = vunpack.c.l.b16 %v4846
    %v4883 = vunpack.c.l.b16 %v4847
    %v4884 = vunpack.c.l.b16 %v4848
    %v4885 = vunpack.c.l.b16 %v4849
    %v4886 = vunpack.c.l.b16 %v4850
    %v4887 = vunpack.c.l.b16 %v4851
    %v4888 = vunpack.c.l.b16 %v4852
    %v4889 = vpack.c.b16 %v4874, %v4873
    %v4890 = vpack.c.b16 %v4876, %v4875
    %v4891 = vpack.c.b16 %v4878, %v4877
    %v4892 = vpack.c.b16 %v4880, %v4879
    %v4893 = vpack.c.b16 %v4882, %v4881
    %v4894 = vpack.c.b16 %v4884, %v4883
    %v4895 = vpack.c.b16 %v4886, %v4885
    %v4896 = vpack.c.b16 %v4888, %v4887
    %4905 = vmatpush.bf16.msra.mxu0 %v4896
    %4906 = vmatpush.bf16.msra.mxu0 %v4895
    %4907 = vmatpush.bf16.msra.mxu0 %v4894
    %4908 = vmatpush.bf16.msra.mxu0 %v4893
    %4909 = vmatpush.bf16.msra.mxu0 %v4892
    %4910 = vmatpush.bf16.msra.mxu0 %v4891
    %4911 = vmatpush.bf16.msra.mxu0 %v4890
    %4912 = vmatpush.bf16.msra.mxu0 %v4889
    %4913 = vmatmul.bf16.gmra.mxu0 %v4836
    %v4914 = vpop.f32.mrf.mxu0
    %v4915 = vadd.f32 %v4855, %v4914
    %v4916 = vpop.f32.mrf.mxu0
    %4917 = vdwg.mxu0
    %v4918 = vmax.f32 %v4915, 0.0
    %v4919 = vpack.c.bf16 %v4918, %v4918
    %v4920 = vld [vmem:[#allocation7] sm:$0xf]
    %v4921 = vld [vmem:[#allocation7 + $0x4] sm:$0xf]
    %v4922 = vld [vmem:[#allocation7 + $0x8] sm:$0xf]
    %v4923 = vld [vmem:[#allocation7 + $0xc] sm:$0xf]
    %v4924 = vld [vmem:[#allocation7 + $0x10] sm:$0xf]
    %v4925 = vld [vmem:[#allocation7 + $0x14] sm:$0xf]
    %v4926 = vld [vmem:[#allocation7 + $0x18] sm:$0xf]
    %v4927 = vld [vmem:[#allocation7 + $0x1c] sm:$0xf]
    %v4928 = vld [vmem:[#allocation7 + $0x20] sm:$0xf]
    %v4929 = vld [vmem:[#allocation7 + $0x24] sm:$0xf]
    %v4930 = vld [vmem:[#allocation7 + $0x28] sm:$0xf]
    %v4931 = vld [vmem:[#allocation7 + $0x2c] sm:$0xf]
    %v4932 = vld [vmem:[#allocation7 + $0x30] sm:$0xf]
    %v4933 = vld [vmem:[#allocation7 + $0x34] sm:$0xf]
    %v4934 = vld [vmem:[#allocation7 + $0x38] sm:$0xf]
    %v4935 = vld [vmem:[#allocation7 + $0x3c] sm:$0xf]
    %v4936 = vld [vmem:[%s10] sm:$0x1]
    %v4938 = vperm.slane %v4936, 0
    %v4956 = vunpack.c.l.b16 %v4920
    %v4957 = vunpack.c.l.b16 %v4921
    %v4958 = vunpack.c.l.b16 %v4922
    %v4959 = vunpack.c.l.b16 %v4923
    %v4960 = vunpack.c.l.b16 %v4924
    %v4961 = vunpack.c.l.b16 %v4925
    %v4962 = vunpack.c.l.b16 %v4926
    %v4963 = vunpack.c.l.b16 %v4927
    %v4964 = vunpack.c.l.b16 %v4928
    %v4965 = vunpack.c.l.b16 %v4929
    %v4966 = vunpack.c.l.b16 %v4930
    %v4967 = vunpack.c.l.b16 %v4931
    %v4968 = vunpack.c.l.b16 %v4932
    %v4969 = vunpack.c.l.b16 %v4933
    %v4970 = vunpack.c.l.b16 %v4934
    %v4971 = vunpack.c.l.b16 %v4935
    %v4972 = vpack.c.b16 %v4957, %v4956
    %v4973 = vpack.c.b16 %v4959, %v4958
    %v4974 = vpack.c.b16 %v4961, %v4960
    %v4975 = vpack.c.b16 %v4963, %v4962
    %v4976 = vpack.c.b16 %v4965, %v4964
    %v4977 = vpack.c.b16 %v4967, %v4966
    %v4978 = vpack.c.b16 %v4969, %v4968
    %v4979 = vpack.c.b16 %v4971, %v4970
    %4988 = vmatpush.bf16.msra.mxu0 %v4979
    %4989 = vmatpush.bf16.msra.mxu0 %v4978
    %4990 = vmatpush.bf16.msra.mxu0 %v4977
    %4991 = vmatpush.bf16.msra.mxu0 %v4976
    %4992 = vmatpush.bf16.msra.mxu0 %v4975
    %4993 = vmatpush.bf16.msra.mxu0 %v4974
    %4994 = vmatpush.bf16.msra.mxu0 %v4973
    %4995 = vmatpush.bf16.msra.mxu0 %v4972
    %4996 = vmatmul.bf16.gmra.mxu0 %v4919
    %v4997 = vpop.f32.mrf.mxu0
    %v4998 = vadd.f32 %v4938, %v4997
    %v4999 = vpop.f32.mrf.mxu0
    %5000 = vdwg.mxu0
    %5001 = vmax.xlane.f32.xlu0 %v4998
    %v5002 = vpop.xlane.xlu0 %5001
    %v5003 = vsub.f32 %v4998, %v5002
    %v5004 = vmul.f32 %v5003, 1.442695
    %v5005 = vpow.pop %v5004
    %5006 = vadd.xlane.f32.xlu0 %v5005
    %v5007 = vpop.xlane.xlu0 %5006
    %v5008 = vlog2.pop %v5007
    %v5009 = vmul.f32 %v5008, 0.6931472
    %v5010 = vsub.f32 %v5003, %v5009
    %5011 = vst [vmem:[%s11] sm:$0xff] %v5010
    // Predicated region
    $region62: #{mnistnet_forward.1} parent=1 // pred_check
      _
    $region63: #{mnistnet_forward.1} parent=1 // pred_check_branch
      %5013 = sbr.rel (0) target = $region65
    $region64: #{mnistnet_forward.1} parent=1 // pred_region
      _
    $region65: #{mnistnet_forward.1} parent=1 // pred_fallthru
      _
    // Predicated region
    $region66: #{mnistnet_forward.1} parent=1 // pred_check
      _
    $region67: #{mnistnet_forward.1} parent=1 // pred_check_branch
      %5015 = sbr.rel (0) target = $region69
    $region68: #{mnistnet_forward.1} parent=1 // pred_region
      _
    $region69: #{mnistnet_forward.1} parent=1 // pred_fallthru
      _
    %5016 = vsyncpa [#allocation3], 1
    %5017 = vsyncpa [#allocation5], 1
    %5018 = vsyncpa [#allocation8], 1

</llo_original>
